<compile_context>
chip_gen: v7x
topology: tpu7x:2x2x1
jax: 0.10.0
libtpu: 0.0.40
codegen_flags: <defaults>
</compile_context>

<pallas_src>
import jax
import jax.numpy as jnp
from jax.experimental import pallas as pl
from jax.experimental.pallas import tpu as pltpu


# ----------------------------- Pallas kernels ------------------------------ #

def _conv_body(x_ref, w_ref, b_ref, o_ref, r_ref):
    """3x3 / stride-1 conv (+ folded BN bias) + SiLU (+ optional residual add).

    x_ref: (1, H+2, W+2, Cin)  bf16, spatially padded, full image for this batch elem
    w_ref: (9, Cin, Cout)      bf16, tap-major folded weights
    b_ref: (1, Cout)           f32 folded BN bias
    r_ref: (1, TH, W, Cout)    f32 residual tile (or None)
    o_ref: (1, TH, W, Cout)    output row tile
    """
    th = o_ref.shape[1]
    wo = o_ref.shape[2]
    cout = o_ref.shape[3]
    cin = x_ref.shape[3]

    # Row offset of this tile inside the (resident) padded image block.
    h0 = pl.multiple_of(pl.program_id(1) * th, th)
    xwin = x_ref[0, pl.ds(h0, th + 2), :, :]              # (TH+2, W+2, Cin) bf16

    acc = jnp.zeros((th * wo, cout), jnp.float32)
    for dy in range(3):                                    # 9 taps, K=Cin per MXU push
        for dx in range(3):
            patch = xwin[dy:dy + th, dx:dx + wo, :].reshape(th * wo, cin)
            acc = acc + jnp.dot(patch, w_ref[dy * 3 + dx],
                                preferred_element_type=jnp.float32)

    acc = acc + b_ref[...]                                 # folded BN bias (f32)
    act = acc * jax.nn.sigmoid(acc)                        # SiLU in f32 (EUP exp)
    act = act.reshape(1, th, wo, cout)
    if r_ref is not None:
        act = act + r_ref[...].astype(jnp.float32)         # fused shortcut add
    o_ref[...] = act.astype(o_ref.dtype)


def _make_conv_kernel(with_residual):
    if with_residual:
        def kernel(x_ref, w_ref, b_ref, r_ref, o_ref):
            _conv_body(x_ref, w_ref, b_ref, o_ref, r_ref)
    else:
        def kernel(x_ref, w_ref, b_ref, o_ref):
            _conv_body(x_ref, w_ref, b_ref, o_ref, None)
    return kernel


# ------------------------------ pallas_call wrapper ------------------------- #

def conv3x3_bn_silu(x_pad_nhwc, w, b, *, th, out_dtype, residual=None):
    """x_pad_nhwc: (N, H+2, W+2, Cin) bf16 (spatial halo + lane-padded channels).
    w: (3, 3, Cin, Cout) bf16 (BN folded, lane-padded); b: (Cout,) f32.
    residual: optional (N, H, W, Cout) f32 tensor added after the activation.
    Returns (N, H, W, Cout) in out_dtype.
    """
    N, hp2, wp2, cin = x_pad_nhwc.shape
    H, W = hp2 - 2, wp2 - 2
    cout = w.shape[-1]
    assert H % th == 0, (H, th)
    n_h = H // th

    w9 = w.reshape(9, cin, cout)
    b2d = b.reshape(1, cout).astype(jnp.float32)

    in_specs = [
        # Full padded image per batch element; constant across the row-tile axis so
        # it stays VMEM-resident.  At real resolutions shrink via a halo'd row tile.
        pl.BlockSpec((1, hp2, wp2, cin), lambda n, h: (n, 0, 0, 0)),
        pl.BlockSpec((9, cin, cout), lambda n, h: (0, 0, 0)),
        pl.BlockSpec((1, cout), lambda n, h: (0, 0)),
    ]
    args = [x_pad_nhwc, w9, b2d]
    if residual is not None:
        in_specs.append(pl.BlockSpec((1, th, W, cout), lambda n, h: (n, h, 0, 0)))
        args.append(residual)

    out_bytes = N * H * W * cout * jnp.dtype(out_dtype).itemsize
    bytes_accessed = (x_pad_nhwc.size * x_pad_nhwc.dtype.itemsize
                      + w9.size * w9.dtype.itemsize + b2d.size * 4 + out_bytes)
    if residual is not None:
        bytes_accessed += residual.size * residual.dtype.itemsize

    return pl.pallas_call(
        _make_conv_kernel(residual is not None),
        out_shape=jax.ShapeDtypeStruct((N, H, W, cout), out_dtype),
        grid=(N, n_h),
        in_specs=in_specs,
        out_specs=pl.BlockSpec((1, th, W, cout), lambda n, h: (n, h, 0, 0)),
        compiler_params=pltpu.CompilerParams(
            dimension_semantics=("parallel", "parallel")),
        cost_estimate=pl.CostEstimate(
            flops=2 * N * H * W * 9 * cin * cout,
            transcendentals=N * H * W * cout,
            bytes_accessed=bytes_accessed),
    )(*args)


# --------------------------- parameters / BN folding ------------------------ #

def _fold_bn(w, gamma, beta, mean, var, eps=1e-3):
    """Fold inference BatchNorm2d (Ultralytics Conv: eps=1e-3) into weight/bias."""
    scale = gamma / jnp.sqrt(var + eps)
    return w * scale[None, None, None, :], beta - mean * scale


def init_sbottleneck_params(key, c1, c2, e=0.5):
    c_ = int(c2 * e)
    cfgs = {"cv1": (c1, c_), "cv2": (c_, c2)}
    params = {}
    for name, (cin, cout) in cfgs.items():
        key, kw, kg, kb, km, kv = jax.random.split(key, 6)
        w = 0.1 * jax.random.normal(kw, (3, 3, cin, cout), jnp.float32)
        gamma = 1.0 + 0.1 * jax.random.normal(kg, (cout,), jnp.float32)
        beta = 0.1 * jax.random.normal(kb, (cout,), jnp.float32)
        mean = 0.1 * jax.random.normal(km, (cout,), jnp.float32)
        var = 1.0 + 0.1 * jnp.abs(jax.random.normal(kv, (cout,), jnp.float32))
        params[name] = _fold_bn(w, gamma, beta, mean, var)
    return params


# ------------------------------- forward pass ------------------------------- #

def _round_up(x, m):
    return ((x + m - 1) // m) * m


def sbottleneck_forward(x_nchw, params, *, shortcut=True, th=8):
    """SBottleneck.forward: x + cv2(cv1(x)) if (shortcut and c1==c2) else cv2(cv1(x))."""
    N, c1, H, W = x_nchw.shape
    w1, b1 = params["cv1"]
    w2, b2 = params["cv2"]
    c_, c2 = w1.shape[-1], w2.shape[-1]
    add = shortcut and (c1 == c2)

    c1p = _round_up(c1, 128)
    chp = _round_up(c_, 128)
    c2p = _round_up(c2, 128)

    x = jnp.transpose(x_nchw, (0, 2, 3, 1))                        # NCHW -> NHWC
    # bf16 activations, conv halo pad (p=1) + lane pad to 128 channels.
    xb = jnp.pad(x.astype(jnp.bfloat16),
                 ((0, 0), (1, 1), (1, 1), (0, c1p - c1)))
    w1p = jnp.pad(w1, ((0, 0), (0, 0), (0, c1p - c1), (0, chp - c_))).astype(jnp.bfloat16)
    b1p = jnp.pad(b1, (0, chp - c_))
    w2p = jnp.pad(w2, ((0, 0), (0, 0), (0, chp - c_), (0, c2p - c2))).astype(jnp.bfloat16)
    b2p = jnp.pad(b2, (0, c2p - c2))

    th_eff = th if H % th == 0 else H

    # cv1: Conv(c1, c_, 3, 1) + BN + SiLU  (bf16 hidden, lane-padded channels)
    h1 = conv3x3_bn_silu(xb, w1p, b1p, th=th_eff, out_dtype=jnp.bfloat16)
    h1p = jnp.pad(h1, ((0, 0), (1, 1), (1, 1), (0, 0)))
    # TODO(synk): fuse this spatial re-pad into the cv2 kernel via a masked halo load
    # so the hidden activation makes a single HBM round trip.

    residual = None
    if add:
        residual = jnp.pad(x, ((0, 0), (0, 0), (0, 0), (0, c2p - c1)))  # f32, lane-padded

    # cv2: Conv(c_, c2, 3, 1) + BN + SiLU, residual add fused in-kernel.
    y = conv3x3_bn_silu(h1p, w2p, b2p, th=th_eff, out_dtype=jnp.float32,
                        residual=residual)
    y = y[..., :c2]                                                # drop lane padding
    return jnp.transpose(y, (0, 3, 1, 2))                          # NHWC -> NCHW


# ------------------------------- reference ---------------------------------- #

def _reference_forward(x_nchw, params, add):
    """Pure-JAX reference mirroring the kernel numerics (bf16 inputs, f32 accum)."""
    x = jnp.transpose(x_nchw, (0, 2, 3, 1))
    w1, b1 = params["cv1"]
    w2, b2 = params["cv2"]

    def conv_bn_silu_ref(h, w, b):
        hq = h.astype(jnp.bfloat16).astype(jnp.float32)
        wq = w.astype(jnp.bfloat16).astype(jnp.float32)
        y = jax.lax.conv_general_dilated(
            hq, wq, (1, 1), ((1, 1), (1, 1)),
            dimension_numbers=("NHWC", "HWIO", "NHWC"),
            precision=jax.lax.Precision.HIGHEST)
        y = y + b
        return y * jax.nn.sigmoid(y)

    h = conv_bn_silu_ref(x, w1, b1).astype(jnp.bfloat16)
    y = conv_bn_silu_ref(h, w2, b2)
    if add:
        y = y + x
    return jnp.transpose(y, (0, 3, 1, 2))


# --------------------------------- demo -------------------------------------- #

if __name__ == "__main__":
    key = jax.random.PRNGKey(0)
    kx, kp = jax.random.split(key)

    # SBottleneck(c1=4, c2=4, spk_conv_li=[], shortcut=True, g=1, k=(3,3), e=0.5)
    c1 = c2 = 4
    x = jax.random.normal(kx, (2, c1, 16, 16), jnp.float32)        # NCHW input
    params = init_sbottleneck_params(kp, c1, c2)

    out = jax.jit(sbottleneck_forward)(x, params)
    jax.block_until_ready(out)

    assert out.shape == (2, c2, 16, 16), out.shape
    assert out.dtype == jnp.float32

    ref = _reference_forward(x, params, add=True)
    err = float(jnp.max(jnp.abs(out - ref)))
    assert err < 5e-2, f"max abs err vs reference: {err}"

    print("KERNEL_OK")
</pallas_src>

<mosaic_0001>
module attributes {stable_mosaic.version = 11 : i64} {
  func.func @kernel(%arg0: i32, %arg1: i32, %arg2: memref<1x18x18x128xbf16, #tpu.memory_space<vmem>>, %arg3: memref<9x128x128xbf16, #tpu.memory_space<vmem>>, %arg4: memref<1x128xf32, #tpu.memory_space<vmem>>, %arg5: memref<1x8x16x128xbf16, #tpu.memory_space<vmem>>) attributes {dimension_semantics = [#tpu.dimension_semantics<parallel>, #tpu.dimension_semantics<parallel>], iteration_bounds = array<i64: 2, 2>, scalar_prefetch = 0 : i64, scratch_operands = 0 : i64, tpu.core_type = #tpu.core_type<tc>, window_params = [{transform_indices = @transform_0, window_bounds = array<i64: 1, 18, 18, 128>}, {pipeline_mode = #tpu.pipeline_mode<synchronous>, transform_indices = @transform_1, window_bounds = array<i64: 9, 128, 128>}, {pipeline_mode = #tpu.pipeline_mode<synchronous>, transform_indices = @transform_2, window_bounds = array<i64: 1, 128>}, {transform_indices = @transform_3, window_bounds = array<i64: 1, 8, 16, 128>}]} {
    %c8_i32 = arith.constant 8 : i32
    %0 = arith.muli %arg1, %c8_i32 : i32
    %1 = tpu.assume_multiple %0, 8 : i32
    %c0 = arith.constant 0 : index
    %2 = arith.index_cast %1 : i32 to index
    %c0_0 = arith.constant 0 : index
    %c0_1 = arith.constant 0 : index
    %3 = vector.load %arg2[%c0, %2, %c0_0, %c0_1] : memref<1x18x18x128xbf16, #tpu.memory_space<vmem>>, vector<1x10x18x128xbf16>
    %4 = vector.shape_cast %3 : vector<1x10x18x128xbf16> to vector<10x18x128xbf16>
    %cst = arith.constant 0.000000e+00 : f32
    %5 = vector.broadcast %cst : f32 to vector<128x128xf32>
    %6 = vector.extract_strided_slice %4 {offsets = [0, 0, 0], sizes = [8, 16, 128], strides = [1, 1, 1]} : vector<10x18x128xbf16> to vector<8x16x128xbf16>
    %7 = vector.shape_cast %6 : vector<8x16x128xbf16> to vector<128x128xbf16>
    %c0_2 = arith.constant 0 : index
    %c0_3 = arith.constant 0 : index
    %c0_4 = arith.constant 0 : index
    %8 = vector.load %arg3[%c0_2, %c0_3, %c0_4] : memref<9x128x128xbf16, #tpu.memory_space<vmem>>, vector<1x128x128xbf16>
    %9 = vector.shape_cast %8 : vector<1x128x128xbf16> to vector<128x128xbf16>
    %cst_5 = arith.constant dense<0.000000e+00> : vector<128x128xf32>
    %10 = tpu.matmul %7, %9, %cst_5 {dimension_numbers = #tpu.dot_dimension_numbers<[1], [0], [0], [1], [0, 0, 1, 1], [], []>} : vector<128x128xbf16>, vector<128x128xbf16>, vector<128x128xf32> -> vector<128x128xf32>
    %11 = arith.addf %5, %10 : vector<128x128xf32>
    %12 = vector.extract_strided_slice %4 {offsets = [0, 1, 0], sizes = [8, 16, 128], strides = [1, 1, 1]} : vector<10x18x128xbf16> to vector<8x16x128xbf16>
    %13 = vector.shape_cast %12 : vector<8x16x128xbf16> to vector<128x128xbf16>
    %c1 = arith.constant 1 : index
    %c0_6 = arith.constant 0 : index
    %c0_7 = arith.constant 0 : index
    %14 = vector.load %arg3[%c1, %c0_6, %c0_7] : memref<9x128x128xbf16, #tpu.memory_space<vmem>>, vector<1x128x128xbf16>
    %15 = vector.shape_cast %14 : vector<1x128x128xbf16> to vector<128x128xbf16>
    %cst_8 = arith.constant dense<0.000000e+00> : vector<128x128xf32>
    %16 = tpu.matmul %13, %15, %cst_8 {dimension_numbers = #tpu.dot_dimension_numbers<[1], [0], [0], [1], [0, 0, 1, 1], [], []>} : vector<128x128xbf16>, vector<128x128xbf16>, vector<128x128xf32> -> vector<128x128xf32>
    %17 = arith.addf %11, %16 : vector<128x128xf32>
    %18 = vector.extract_strided_slice %4 {offsets = [0, 2, 0], sizes = [8, 16, 128], strides = [1, 1, 1]} : vector<10x18x128xbf16> to vector<8x16x128xbf16>
    %19 = vector.shape_cast %18 : vector<8x16x128xbf16> to vector<128x128xbf16>
    %c2 = arith.constant 2 : index
    %c0_9 = arith.constant 0 : index
    %c0_10 = arith.constant 0 : index
    %20 = vector.load %arg3[%c2, %c0_9, %c0_10] : memref<9x128x128xbf16, #tpu.memory_space<vmem>>, vector<1x128x128xbf16>
    %21 = vector.shape_cast %20 : vector<1x128x128xbf16> to vector<128x128xbf16>
    %cst_11 = arith.constant dense<0.000000e+00> : vector<128x128xf32>
    %22 = tpu.matmul %19, %21, %cst_11 {dimension_numbers = #tpu.dot_dimension_numbers<[1], [0], [0], [1], [0, 0, 1, 1], [], []>} : vector<128x128xbf16>, vector<128x128xbf16>, vector<128x128xf32> -> vector<128x128xf32>
    %23 = arith.addf %17, %22 : vector<128x128xf32>
    %24 = vector.extract_strided_slice %4 {offsets = [1, 0, 0], sizes = [8, 16, 128], strides = [1, 1, 1]} : vector<10x18x128xbf16> to vector<8x16x128xbf16>
    %25 = vector.shape_cast %24 : vector<8x16x128xbf16> to vector<128x128xbf16>
    %c3 = arith.constant 3 : index
    %c0_12 = arith.constant 0 : index
    %c0_13 = arith.constant 0 : index
    %26 = vector.load %arg3[%c3, %c0_12, %c0_13] : memref<9x128x128xbf16, #tpu.memory_space<vmem>>, vector<1x128x128xbf16>
    %27 = vector.shape_cast %26 : vector<1x128x128xbf16> to vector<128x128xbf16>
    %cst_14 = arith.constant dense<0.000000e+00> : vector<128x128xf32>
    %28 = tpu.matmul %25, %27, %cst_14 {dimension_numbers = #tpu.dot_dimension_numbers<[1], [0], [0], [1], [0, 0, 1, 1], [], []>} : vector<128x128xbf16>, vector<128x128xbf16>, vector<128x128xf32> -> vector<128x128xf32>
    %29 = arith.addf %23, %28 : vector<128x128xf32>
    %30 = vector.extract_strided_slice %4 {offsets = [1, 1, 0], sizes = [8, 16, 128], strides = [1, 1, 1]} : vector<10x18x128xbf16> to vector<8x16x128xbf16>
    %31 = vector.shape_cast %30 : vector<8x16x128xbf16> to vector<128x128xbf16>
    %c4 = arith.constant 4 : index
    %c0_15 = arith.constant 0 : index
    %c0_16 = arith.constant 0 : index
    %32 = vector.load %arg3[%c4, %c0_15, %c0_16] : memref<9x128x128xbf16, #tpu.memory_space<vmem>>, vector<1x128x128xbf16>
    %33 = vector.shape_cast %32 : vector<1x128x128xbf16> to vector<128x128xbf16>
    %cst_17 = arith.constant dense<0.000000e+00> : vector<128x128xf32>
    %34 = tpu.matmul %31, %33, %cst_17 {dimension_numbers = #tpu.dot_dimension_numbers<[1], [0], [0], [1], [0, 0, 1, 1], [], []>} : vector<128x128xbf16>, vector<128x128xbf16>, vector<128x128xf32> -> vector<128x128xf32>
    %35 = arith.addf %29, %34 : vector<128x128xf32>
    %36 = vector.extract_strided_slice %4 {offsets = [1, 2, 0], sizes = [8, 16, 128], strides = [1, 1, 1]} : vector<10x18x128xbf16> to vector<8x16x128xbf16>
    %37 = vector.shape_cast %36 : vector<8x16x128xbf16> to vector<128x128xbf16>
    %c5 = arith.constant 5 : index
    %c0_18 = arith.constant 0 : index
    %c0_19 = arith.constant 0 : index
    %38 = vector.load %arg3[%c5, %c0_18, %c0_19] : memref<9x128x128xbf16, #tpu.memory_space<vmem>>, vector<1x128x128xbf16>
    %39 = vector.shape_cast %38 : vector<1x128x128xbf16> to vector<128x128xbf16>
    %cst_20 = arith.constant dense<0.000000e+00> : vector<128x128xf32>
    %40 = tpu.matmul %37, %39, %cst_20 {dimension_numbers = #tpu.dot_dimension_numbers<[1], [0], [0], [1], [0, 0, 1, 1], [], []>} : vector<128x128xbf16>, vector<128x128xbf16>, vector<128x128xf32> -> vector<128x128xf32>
    %41 = arith.addf %35, %40 : vector<128x128xf32>
    %42 = vector.extract_strided_slice %4 {offsets = [2, 0, 0], sizes = [8, 16, 128], strides = [1, 1, 1]} : vector<10x18x128xbf16> to vector<8x16x128xbf16>
    %43 = vector.shape_cast %42 : vector<8x16x128xbf16> to vector<128x128xbf16>
    %c6 = arith.constant 6 : index
    %c0_21 = arith.constant 0 : index
    %c0_22 = arith.constant 0 : index
    %44 = vector.load %arg3[%c6, %c0_21, %c0_22] : memref<9x128x128xbf16, #tpu.memory_space<vmem>>, vector<1x128x128xbf16>
    %45 = vector.shape_cast %44 : vector<1x128x128xbf16> to vector<128x128xbf16>
    %cst_23 = arith.constant dense<0.000000e+00> : vector<128x128xf32>
    %46 = tpu.matmul %43, %45, %cst_23 {dimension_numbers = #tpu.dot_dimension_numbers<[1], [0], [0], [1], [0, 0, 1, 1], [], []>} : vector<128x128xbf16>, vector<128x128xbf16>, vector<128x128xf32> -> vector<128x128xf32>
    %47 = arith.addf %41, %46 : vector<128x128xf32>
    %48 = vector.extract_strided_slice %4 {offsets = [2, 1, 0], sizes = [8, 16, 128], strides = [1, 1, 1]} : vector<10x18x128xbf16> to vector<8x16x128xbf16>
    %49 = vector.shape_cast %48 : vector<8x16x128xbf16> to vector<128x128xbf16>
    %c7 = arith.constant 7 : index
    %c0_24 = arith.constant 0 : index
    %c0_25 = arith.constant 0 : index
    %50 = vector.load %arg3[%c7, %c0_24, %c0_25] : memref<9x128x128xbf16, #tpu.memory_space<vmem>>, vector<1x128x128xbf16>
    %51 = vector.shape_cast %50 : vector<1x128x128xbf16> to vector<128x128xbf16>
    %cst_26 = arith.constant dense<0.000000e+00> : vector<128x128xf32>
    %52 = tpu.matmul %49, %51, %cst_26 {dimension_numbers = #tpu.dot_dimension_numbers<[1], [0], [0], [1], [0, 0, 1, 1], [], []>} : vector<128x128xbf16>, vector<128x128xbf16>, vector<128x128xf32> -> vector<128x128xf32>
    %53 = arith.addf %47, %52 : vector<128x128xf32>
    %54 = vector.extract_strided_slice %4 {offsets = [2, 2, 0], sizes = [8, 16, 128], strides = [1, 1, 1]} : vector<10x18x128xbf16> to vector<8x16x128xbf16>
    %55 = vector.shape_cast %54 : vector<8x16x128xbf16> to vector<128x128xbf16>
    %c8 = arith.constant 8 : index
    %c0_27 = arith.constant 0 : index
    %c0_28 = arith.constant 0 : index
    %56 = vector.load %arg3[%c8, %c0_27, %c0_28] : memref<9x128x128xbf16, #tpu.memory_space<vmem>>, vector<1x128x128xbf16>
    %57 = vector.shape_cast %56 : vector<1x128x128xbf16> to vector<128x128xbf16>
    %cst_29 = arith.constant dense<0.000000e+00> : vector<128x128xf32>
    %58 = tpu.matmul %55, %57, %cst_29 {dimension_numbers = #tpu.dot_dimension_numbers<[1], [0], [0], [1], [0, 0, 1, 1], [], []>} : vector<128x128xbf16>, vector<128x128xbf16>, vector<128x128xf32> -> vector<128x128xf32>
    %59 = arith.addf %53, %58 : vector<128x128xf32>
    %c0_30 = arith.constant 0 : index
    %c0_31 = arith.constant 0 : index
    %60 = vector.load %arg4[%c0_30, %c0_31] : memref<1x128xf32, #tpu.memory_space<vmem>>, vector<1x128xf32>
    %61 = vector.broadcast %60 : vector<1x128xf32> to vector<128x128xf32>
    %62 = arith.addf %59, %61 : vector<128x128xf32>
    %63 = arith.negf %62 : vector<128x128xf32>
    %64 = math.exp %63 : vector<128x128xf32>
    %cst_32 = arith.constant 1.000000e+00 : f32
    %65 = vector.broadcast %cst_32 : f32 to vector<128x128xf32>
    %66 = arith.addf %65, %64 : vector<128x128xf32>
    %67 = arith.divf %65, %66 : vector<128x128xf32>
    %68 = arith.mulf %62, %67 : vector<128x128xf32>
    %69 = vector.shape_cast %68 : vector<128x128xf32> to vector<1x8x16x128xf32>
    %70 = arith.truncf %69 : vector<1x8x16x128xf32> to vector<1x8x16x128xbf16>
    %c0_33 = arith.constant 0 : index
    %c0_34 = arith.constant 0 : index
    %c0_35 = arith.constant 0 : index
    %c0_36 = arith.constant 0 : index
    %71 = vector.load %arg5[%c0_33, %c0_34, %c0_35, %c0_36] : memref<1x8x16x128xbf16, #tpu.memory_space<vmem>>, vector<1x8x16x128xbf16>
    tpu.vector_store %arg5[%c0_33, %c0_34, %c0_35, %c0_36], %70 {strides = array<i32>} : memref<1x8x16x128xbf16, #tpu.memory_space<vmem>>, vector<1x8x16x128xbf16>,
    return
  }
  func.func @transform_0(%arg0: i32, %arg1: i32) -> (i32, i32, i32, i32) {
    %c0_i32 = arith.constant 0 : i32
    %c0_i32_0 = arith.constant 0 : i32
    %c0_i32_1 = arith.constant 0 : i32
    %c0_i32_2 = arith.constant 0 : i32
    return %arg0, %c0_i32, %c0_i32_0, %c0_i32_1 : i32, i32, i32, i32
  }
  func.func @transform_1(%arg0: i32, %arg1: i32) -> (i32, i32, i32) {
    %c0_i32 = arith.constant 0 : i32
    %c0_i32_0 = arith.constant 0 : i32
    %c0_i32_1 = arith.constant 0 : i32
    %c0_i32_2 = arith.constant 0 : i32
    return %c0_i32, %c0_i32_0, %c0_i32_1 : i32, i32, i32
  }
  func.func @transform_2(%arg0: i32, %arg1: i32) -> (i32, i32) {
    %c0_i32 = arith.constant 0 : i32
    %c0_i32_0 = arith.constant 0 : i32
    %c0_i32_1 = arith.constant 0 : i32
    return %c0_i32, %c0_i32_0 : i32, i32
  }
  func.func @transform_3(%arg0: i32, %arg1: i32) -> (i32, i32, i32, i32) {
    %c0_i32 = arith.constant 0 : i32
    %c0_i32_0 = arith.constant 0 : i32
    %c0_i32_1 = arith.constant 0 : i32
    return %arg0, %arg1, %c0_i32, %c0_i32_0 : i32, i32, i32, i32
  }
}

module attributes {stable_mosaic.version = 11 : i64} {
  func.func @kernel(%arg0: i32, %arg1: i32, %arg2: memref<1x18x18x128xbf16, #tpu.memory_space<vmem>>, %arg3: memref<9x128x128xbf16, #tpu.memory_space<vmem>>, %arg4: memref<1x128xf32, #tpu.memory_space<vmem>>, %arg5: memref<1x8x16x128xf32, #tpu.memory_space<vmem>>, %arg6: memref<1x8x16x128xf32, #tpu.memory_space<vmem>>) attributes {dimension_semantics = [#tpu.dimension_semantics<parallel>, #tpu.dimension_semantics<parallel>], iteration_bounds = array<i64: 2, 2>, scalar_prefetch = 0 : i64, scratch_operands = 0 : i64, tpu.core_type = #tpu.core_type<tc>, window_params = [{transform_indices = @transform_0, window_bounds = array<i64: 1, 18, 18, 128>}, {pipeline_mode = #tpu.pipeline_mode<synchronous>, transform_indices = @transform_1, window_bounds = array<i64: 9, 128, 128>}, {pipeline_mode = #tpu.pipeline_mode<synchronous>, transform_indices = @transform_2, window_bounds = array<i64: 1, 128>}, {transform_indices = @transform_3, window_bounds = array<i64: 1, 8, 16, 128>}, {transform_indices = @transform_4, window_bounds = array<i64: 1, 8, 16, 128>}]} {
    %c8_i32 = arith.constant 8 : i32
    %0 = arith.muli %arg1, %c8_i32 : i32
    %1 = tpu.assume_multiple %0, 8 : i32
    %c0 = arith.constant 0 : index
    %2 = arith.index_cast %1 : i32 to index
    %c0_0 = arith.constant 0 : index
    %c0_1 = arith.constant 0 : index
    %3 = vector.load %arg2[%c0, %2, %c0_0, %c0_1] : memref<1x18x18x128xbf16, #tpu.memory_space<vmem>>, vector<1x10x18x128xbf16>
    %4 = vector.shape_cast %3 : vector<1x10x18x128xbf16> to vector<10x18x128xbf16>
    %cst = arith.constant 0.000000e+00 : f32
    %5 = vector.broadcast %cst : f32 to vector<128x128xf32>
    %6 = vector.extract_strided_slice %4 {offsets = [0, 0, 0], sizes = [8, 16, 128], strides = [1, 1, 1]} : vector<10x18x128xbf16> to vector<8x16x128xbf16>
    %7 = vector.shape_cast %6 : vector<8x16x128xbf16> to vector<128x128xbf16>
    %c0_2 = arith.constant 0 : index
    %c0_3 = arith.constant 0 : index
    %c0_4 = arith.constant 0 : index
    %8 = vector.load %arg3[%c0_2, %c0_3, %c0_4] : memref<9x128x128xbf16, #tpu.memory_space<vmem>>, vector<1x128x128xbf16>
    %9 = vector.shape_cast %8 : vector<1x128x128xbf16> to vector<128x128xbf16>
    %cst_5 = arith.constant dense<0.000000e+00> : vector<128x128xf32>
    %10 = tpu.matmul %7, %9, %cst_5 {dimension_numbers = #tpu.dot_dimension_numbers<[1], [0], [0], [1], [0, 0, 1, 1], [], []>} : vector<128x128xbf16>, vector<128x128xbf16>, vector<128x128xf32> -> vector<128x128xf32>
    %11 = arith.addf %5, %10 : vector<128x128xf32>
    %12 = vector.extract_strided_slice %4 {offsets = [0, 1, 0], sizes = [8, 16, 128], strides = [1, 1, 1]} : vector<10x18x128xbf16> to vector<8x16x128xbf16>
    %13 = vector.shape_cast %12 : vector<8x16x128xbf16> to vector<128x128xbf16>
    %c1 = arith.constant 1 : index
    %c0_6 = arith.constant 0 : index
    %c0_7 = arith.constant 0 : index
    %14 = vector.load %arg3[%c1, %c0_6, %c0_7] : memref<9x128x128xbf16, #tpu.memory_space<vmem>>, vector<1x128x128xbf16>
    %15 = vector.shape_cast %14 : vector<1x128x128xbf16> to vector<128x128xbf16>
    %cst_8 = arith.constant dense<0.000000e+00> : vector<128x128xf32>
    %16 = tpu.matmul %13, %15, %cst_8 {dimension_numbers = #tpu.dot_dimension_numbers<[1], [0], [0], [1], [0, 0, 1, 1], [], []>} : vector<128x128xbf16>, vector<128x128xbf16>, vector<128x128xf32> -> vector<128x128xf32>
    %17 = arith.addf %11, %16 : vector<128x128xf32>
    %18 = vector.extract_strided_slice %4 {offsets = [0, 2, 0], sizes = [8, 16, 128], strides = [1, 1, 1]} : vector<10x18x128xbf16> to vector<8x16x128xbf16>
    %19 = vector.shape_cast %18 : vector<8x16x128xbf16> to vector<128x128xbf16>
    %c2 = arith.constant 2 : index
    %c0_9 = arith.constant 0 : index
    %c0_10 = arith.constant 0 : index
    %20 = vector.load %arg3[%c2, %c0_9, %c0_10] : memref<9x128x128xbf16, #tpu.memory_space<vmem>>, vector<1x128x128xbf16>
    %21 = vector.shape_cast %20 : vector<1x128x128xbf16> to vector<128x128xbf16>
    %cst_11 = arith.constant dense<0.000000e+00> : vector<128x128xf32>
    %22 = tpu.matmul %19, %21, %cst_11 {dimension_numbers = #tpu.dot_dimension_numbers<[1], [0], [0], [1], [0, 0, 1, 1], [], []>} : vector<128x128xbf16>, vector<128x128xbf16>, vector<128x128xf32> -> vector<128x128xf32>
    %23 = arith.addf %17, %22 : vector<128x128xf32>
    %24 = vector.extract_strided_slice %4 {offsets = [1, 0, 0], sizes = [8, 16, 128], strides = [1, 1, 1]} : vector<10x18x128xbf16> to vector<8x16x128xbf16>
    %25 = vector.shape_cast %24 : vector<8x16x128xbf16> to vector<128x128xbf16>
    %c3 = arith.constant 3 : index
    %c0_12 = arith.constant 0 : index
    %c0_13 = arith.constant 0 : index
    %26 = vector.load %arg3[%c3, %c0_12, %c0_13] : memref<9x128x128xbf16, #tpu.memory_space<vmem>>, vector<1x128x128xbf16>
    %27 = vector.shape_cast %26 : vector<1x128x128xbf16> to vector<128x128xbf16>
    %cst_14 = arith.constant dense<0.000000e+00> : vector<128x128xf32>
    %28 = tpu.matmul %25, %27, %cst_14 {dimension_numbers = #tpu.dot_dimension_numbers<[1], [0], [0], [1], [0, 0, 1, 1], [], []>} : vector<128x128xbf16>, vector<128x128xbf16>, vector<128x128xf32> -> vector<128x128xf32>
    %29 = arith.addf %23, %28 : vector<128x128xf32>
    %30 = vector.extract_strided_slice %4 {offsets = [1, 1, 0], sizes = [8, 16, 128], strides = [1, 1, 1]} : vector<10x18x128xbf16> to vector<8x16x128xbf16>
    %31 = vector.shape_cast %30 : vector<8x16x128xbf16> to vector<128x128xbf16>
    %c4 = arith.constant 4 : index
    %c0_15 = arith.constant 0 : index
    %c0_16 = arith.constant 0 : index
    %32 = vector.load %arg3[%c4, %c0_15, %c0_16] : memref<9x128x128xbf16, #tpu.memory_space<vmem>>, vector<1x128x128xbf16>
    %33 = vector.shape_cast %32 : vector<1x128x128xbf16> to vector<128x128xbf16>
    %cst_17 = arith.constant dense<0.000000e+00> : vector<128x128xf32>
    %34 = tpu.matmul %31, %33, %cst_17 {dimension_numbers = #tpu.dot_dimension_numbers<[1], [0], [0], [1], [0, 0, 1, 1], [], []>} : vector<128x128xbf16>, vector<128x128xbf16>, vector<128x128xf32> -> vector<128x128xf32>
    %35 = arith.addf %29, %34 : vector<128x128xf32>
    %36 = vector.extract_strided_slice %4 {offsets = [1, 2, 0], sizes = [8, 16, 128], strides = [1, 1, 1]} : vector<10x18x128xbf16> to vector<8x16x128xbf16>
    %37 = vector.shape_cast %36 : vector<8x16x128xbf16> to vector<128x128xbf16>
    %c5 = arith.constant 5 : index
    %c0_18 = arith.constant 0 : index
    %c0_19 = arith.constant 0 : index
    %38 = vector.load %arg3[%c5, %c0_18, %c0_19] : memref<9x128x128xbf16, #tpu.memory_space<vmem>>, vector<1x128x128xbf16>
    %39 = vector.shape_cast %38 : vector<1x128x128xbf16> to vector<128x128xbf16>
    %cst_20 = arith.constant dense<0.000000e+00> : vector<128x128xf32>
    %40 = tpu.matmul %37, %39, %cst_20 {dimension_numbers = #tpu.dot_dimension_numbers<[1], [0], [0], [1], [0, 0, 1, 1], [], []>} : vector<128x128xbf16>, vector<128x128xbf16>, vector<128x128xf32> -> vector<128x128xf32>
    %41 = arith.addf %35, %40 : vector<128x128xf32>
    %42 = vector.extract_strided_slice %4 {offsets = [2, 0, 0], sizes = [8, 16, 128], strides = [1, 1, 1]} : vector<10x18x128xbf16> to vector<8x16x128xbf16>
    %43 = vector.shape_cast %42 : vector<8x16x128xbf16> to vector<128x128xbf16>
    %c6 = arith.constant 6 : index
    %c0_21 = arith.constant 0 : index
    %c0_22 = arith.constant 0 : index
    %44 = vector.load %arg3[%c6, %c0_21, %c0_22] : memref<9x128x128xbf16, #tpu.memory_space<vmem>>, vector<1x128x128xbf16>
    %45 = vector.shape_cast %44 : vector<1x128x128xbf16> to vector<128x128xbf16>
    %cst_23 = arith.constant dense<0.000000e+00> : vector<128x128xf32>
    %46 = tpu.matmul %43, %45, %cst_23 {dimension_numbers = #tpu.dot_dimension_numbers<[1], [0], [0], [1], [0, 0, 1, 1], [], []>} : vector<128x128xbf16>, vector<128x128xbf16>, vector<128x128xf32> -> vector<128x128xf32>
    %47 = arith.addf %41, %46 : vector<128x128xf32>
    %48 = vector.extract_strided_slice %4 {offsets = [2, 1, 0], sizes = [8, 16, 128], strides = [1, 1, 1]} : vector<10x18x128xbf16> to vector<8x16x128xbf16>
    %49 = vector.shape_cast %48 : vector<8x16x128xbf16> to vector<128x128xbf16>
    %c7 = arith.constant 7 : index
    %c0_24 = arith.constant 0 : index
    %c0_25 = arith.constant 0 : index
    %50 = vector.load %arg3[%c7, %c0_24, %c0_25] : memref<9x128x128xbf16, #tpu.memory_space<vmem>>, vector<1x128x128xbf16>
    %51 = vector.shape_cast %50 : vector<1x128x128xbf16> to vector<128x128xbf16>
    %cst_26 = arith.constant dense<0.000000e+00> : vector<128x128xf32>
    %52 = tpu.matmul %49, %51, %cst_26 {dimension_numbers = #tpu.dot_dimension_numbers<[1], [0], [0], [1], [0, 0, 1, 1], [], []>} : vector<128x128xbf16>, vector<128x128xbf16>, vector<128x128xf32> -> vector<128x128xf32>
    %53 = arith.addf %47, %52 : vector<128x128xf32>
    %54 = vector.extract_strided_slice %4 {offsets = [2, 2, 0], sizes = [8, 16, 128], strides = [1, 1, 1]} : vector<10x18x128xbf16> to vector<8x16x128xbf16>
    %55 = vector.shape_cast %54 : vector<8x16x128xbf16> to vector<128x128xbf16>
    %c8 = arith.constant 8 : index
    %c0_27 = arith.constant 0 : index
    %c0_28 = arith.constant 0 : index
    %56 = vector.load %arg3[%c8, %c0_27, %c0_28] : memref<9x128x128xbf16, #tpu.memory_space<vmem>>, vector<1x128x128xbf16>
    %57 = vector.shape_cast %56 : vector<1x128x128xbf16> to vector<128x128xbf16>
    %cst_29 = arith.constant dense<0.000000e+00> : vector<128x128xf32>
    %58 = tpu.matmul %55, %57, %cst_29 {dimension_numbers = #tpu.dot_dimension_numbers<[1], [0], [0], [1], [0, 0, 1, 1], [], []>} : vector<128x128xbf16>, vector<128x128xbf16>, vector<128x128xf32> -> vector<128x128xf32>
    %59 = arith.addf %53, %58 : vector<128x128xf32>
    %c0_30 = arith.constant 0 : index
    %c0_31 = arith.constant 0 : index
    %60 = vector.load %arg4[%c0_30, %c0_31] : memref<1x128xf32, #tpu.memory_space<vmem>>, vector<1x128xf32>
    %61 = vector.broadcast %60 : vector<1x128xf32> to vector<128x128xf32>
    %62 = arith.addf %59, %61 : vector<128x128xf32>
    %63 = arith.negf %62 : vector<128x128xf32>
    %64 = math.exp %63 : vector<128x128xf32>
    %cst_32 = arith.constant 1.000000e+00 : f32
    %65 = vector.broadcast %cst_32 : f32 to vector<128x128xf32>
    %66 = arith.addf %65, %64 : vector<128x128xf32>
    %67 = arith.divf %65, %66 : vector<128x128xf32>
    %68 = arith.mulf %62, %67 : vector<128x128xf32>
    %69 = vector.shape_cast %68 : vector<128x128xf32> to vector<1x8x16x128xf32>
    %c0_33 = arith.constant 0 : index
    %c0_34 = arith.constant 0 : index
    %c0_35 = arith.constant 0 : index
    %c0_36 = arith.constant 0 : index
    %70 = vector.load %arg5[%c0_33, %c0_34, %c0_35, %c0_36] : memref<1x8x16x128xf32, #tpu.memory_space<vmem>>, vector<1x8x16x128xf32>
    %71 = arith.addf %69, %70 : vector<1x8x16x128xf32>
    %c0_37 = arith.constant 0 : index
    %c0_38 = arith.constant 0 : index
    %c0_39 = arith.constant 0 : index
    %c0_40 = arith.constant 0 : index
    %72 = vector.load %arg6[%c0_37, %c0_38, %c0_39, %c0_40] : memref<1x8x16x128xf32, #tpu.memory_space<vmem>>, vector<1x8x16x128xf32>
    tpu.vector_store %arg6[%c0_37, %c0_38, %c0_39, %c0_40], %71 {strides = array<i32>} : memref<1x8x16x128xf32, #tpu.memory_space<vmem>>, vector<1x8x16x128xf32>,
    return
  }
  func.func @transform_0(%arg0: i32, %arg1: i32) -> (i32, i32, i32, i32) {
    %c0_i32 = arith.constant 0 : i32
    %c0_i32_0 = arith.constant 0 : i32
    %c0_i32_1 = arith.constant 0 : i32
    %c0_i32_2 = arith.constant 0 : i32
    return %arg0, %c0_i32, %c0_i32_0, %c0_i32_1 : i32, i32, i32, i32
  }
  func.func @transform_1(%arg0: i32, %arg1: i32) -> (i32, i32, i32) {
    %c0_i32 = arith.constant 0 : i32
    %c0_i32_0 = arith.constant 0 : i32
    %c0_i32_1 = arith.constant 0 : i32
    %c0_i32_2 = arith.constant 0 : i32
    return %c0_i32, %c0_i32_0, %c0_i32_1 : i32, i32, i32
  }
  func.func @transform_2(%arg0: i32, %arg1: i32) -> (i32, i32) {
    %c0_i32 = arith.constant 0 : i32
    %c0_i32_0 = arith.constant 0 : i32
    %c0_i32_1 = arith.constant 0 : i32
    return %c0_i32, %c0_i32_0 : i32, i32
  }
  func.func @transform_3(%arg0: i32, %arg1: i32) -> (i32, i32, i32, i32) {
    %c0_i32 = arith.constant 0 : i32
    %c0_i32_0 = arith.constant 0 : i32
    %c0_i32_1 = arith.constant 0 : i32
    return %arg0, %arg1, %c0_i32, %c0_i32_0 : i32, i32, i32, i32
  }
  func.func @transform_4(%arg0: i32, %arg1: i32) -> (i32, i32, i32, i32) {
    %c0_i32 = arith.constant 0 : i32
    %c0_i32_0 = arith.constant 0 : i32
    %c0_i32_1 = arith.constant 0 : i32
    return %arg0, %arg1, %c0_i32, %c0_i32_0 : i32, i32, i32, i32
  }
}

</mosaic_0001>

<llo_original>
// kernel: sbottleneck_forward.3
$region0: #{sbottleneck_forward.3}
  #allocation0 [shape = 'u32[]', space=smem, size = 0x4, offset = 0x4, fixed_abs, tag = 'smem constant byte address 0x4 - core index']
  #allocation1 [shape = 'u32[144,128]{1,0:T(1,128)}', space=vmem, size = 0x12000, scoped, tag = 'internal scratch']
  %s0 = inlined_call_operand.vmem [shape: bf16[2,18,18,128], index: 0, kind: input, shape index: {}]
  %s1 = inlined_call_operand.vmem [shape: bf16[9,128,128], index: 1, kind: input, shape index: {}]
  %s2 = inlined_call_operand.vmem [shape: f32[1,128], index: 2, kind: input, shape index: {}]
  %s3 = inlined_call_operand.vmem [shape: f32[2,16,16,128], index: 3, kind: input, shape index: {}]
  %s4 = inlined_call_operand.vmem [shape: f32[2,16,16,128], index: 4, kind: output, shape index: {}]
  %s5 = sld [smem:[#allocation0]]
  $region49: #{sbottleneck_forward.3} parent=0
    _
  %s7 = ssub.s32 1, %s5
  %s8 = scalar_select 0, %s7, %s5
  loop: start=0, step=1, limit=6
  $region2: #{sbottleneck_forward.3} parent=0 // loop_pre_header
    _
  $region3: #{sbottleneck_forward.3} parent=0 // loop_header
    %s10 = sphi 0, %s14
    %p11 = scmp.ge.s32.totalorder %s10, 6
    %s17 = sphi 0, %s29
    %s18 = sphi 0, %s25
    %s19 = sphi 0, %s17
    %s20 = sphi 0, %s18
    %s21 = sphi 0, %s19
    %s22 = sphi 0, %s20
    %s32 = sphi 0, %s34
    %s35 = sphi 0, %s32
    %s36 = sphi 0, %s35
    %s52 = sphi 0, %s36
    %s56 = sphi 0, %s56
    %s58 = sphi 0, %s56
    %s59 = sphi 0, %s58
    %s73 = sphi 0, %s59
    %s77 = sphi 0, %s77
    %s79 = sphi 0, %s77
    %s80 = sphi 0, %s79
    %s94 = sphi 0, %s80
    %s102 = sphi 0, %s104
    %s105 = sphi 0, %s102
    %s106 = sphi 0, %s105
    %s122 = sphi 0, %s106
    %s130 = sphi 0, %s132
    %s133 = sphi 0, %s130
    %s134 = sphi 0, %s133
    %s150 = sphi 0, %s134
  $region4: #{sbottleneck_forward.3} parent=0 // loop_header_branch
    %13 = sbr.rel (%p11) target = $region8
  $region5: #{sbottleneck_forward.3} parent=0 // loop_body
    %s15 = ssub.s32 %s10, 1
    %s16 = ssub.s32 %s10, 2
    %s23 = sadd.s32 1, %s18
    %p24 = scmp.ge.s32.totalorder %s23, 2
    %s25 = scalar_select %p24, 0, %s23
    %s26 = sadd.s32 1, %s17
    %s27 = scalar_select %p24, %s26, %s17
    %p28 = scmp.ge.s32.totalorder %s27, 2
    %s29 = scalar_select %p28, 0, %s27
    %s30 = ssub.s32 %s17, %s29
    %p31 = scmp.eq.s32.totalorder %s30, 0
    %s33 = sadd.s32 %s32, 1
    %s34 = scalar_select %p31, %s32, %s33
    %p37 = pneg %p31
    %p38 = scmp.eq.s32.totalorder %s10, 3
    %p39 = por %p37, %p38
    %p40 = scmp.ne.s32.totalorder %s32, %s35
    %p41 = scmp.eq.s32.totalorder %s10, 0
    %p42 = por %p40, %p41
    %p43 = scmp.ne.s32.totalorder %s32, %s35
    %p44 = scmp.eq.s32.totalorder %s15, 3
    %p45 = por %p43, %p44
    %p46 = scmp.ne.s32.totalorder %s35, %s36
    %p47 = scmp.eq.s32.totalorder %s15, 0
    %p48 = por %p46, %p47
    %p49 = scmp.ne.s32.totalorder %s35, %s36
    %p50 = scmp.eq.s32.totalorder %s16, 3
    %p51 = por %p49, %p50
    %p53 = scmp.ne.s32.totalorder %s36, %s52
    %p54 = scmp.eq.s32.totalorder %s16, 0
    %p55 = por %p53, %p54
    %s57 = sadd.s32 %s56, 1
    %p60 = scmp.eq.s32.totalorder %s10, 3
    %p61 = scmp.ne.s32.totalorder %s56, %s58
    %p62 = scmp.eq.s32.totalorder %s10, 0
    %p63 = por %p61, %p62
    %p64 = scmp.ne.s32.totalorder %s56, %s58
    %p65 = scmp.eq.s32.totalorder %s15, 3
    %p66 = por %p64, %p65
    %p67 = scmp.ne.s32.totalorder %s58, %s59
    %p68 = scmp.eq.s32.totalorder %s15, 0
    %p69 = por %p67, %p68
    %p70 = scmp.ne.s32.totalorder %s58, %s59
    %p71 = scmp.eq.s32.totalorder %s16, 3
    %p72 = por %p70, %p71
    %p74 = scmp.ne.s32.totalorder %s59, %s73
    %p75 = scmp.eq.s32.totalorder %s16, 0
    %p76 = por %p74, %p75
    %s78 = sadd.s32 %s77, 1
    %p81 = scmp.eq.s32.totalorder %s10, 3
    %p82 = scmp.ne.s32.totalorder %s77, %s79
    %p83 = scmp.eq.s32.totalorder %s10, 0
    %p84 = por %p82, %p83
    %p85 = scmp.ne.s32.totalorder %s77, %s79
    %p86 = scmp.eq.s32.totalorder %s15, 3
    %p87 = por %p85, %p86
    %p88 = scmp.ne.s32.totalorder %s79, %s80
    %p89 = scmp.eq.s32.totalorder %s15, 0
    %p90 = por %p88, %p89
    %p91 = scmp.ne.s32.totalorder %s79, %s80
    %p92 = scmp.eq.s32.totalorder %s16, 3
    %p93 = por %p91, %p92
    %p95 = scmp.ne.s32.totalorder %s80, %s94
    %p96 = scmp.eq.s32.totalorder %s16, 0
    %p97 = por %p95, %p96
    %s98 = ssub.s32 %s17, %s29
    %s99 = ssub.s32 %s18, %s25
    %s100 = sor.u32 %s98, %s99
    %p101 = scmp.eq.s32.totalorder %s100, 0
    %s103 = sadd.s32 %s102, 1
    %s104 = scalar_select %p101, %s102, %s103
    %p107 = pneg %p101
    %p108 = scmp.eq.s32.totalorder %s10, 3
    %p109 = por %p107, %p108
    %p110 = scmp.ne.s32.totalorder %s102, %s105
    %p111 = scmp.eq.s32.totalorder %s10, 0
    %p112 = por %p110, %p111
    %p113 = scmp.ne.s32.totalorder %s102, %s105
    %p114 = scmp.eq.s32.totalorder %s15, 3
    %p115 = por %p113, %p114
    %p116 = scmp.ne.s32.totalorder %s105, %s106
    %p117 = scmp.eq.s32.totalorder %s15, 0
    %p118 = por %p116, %p117
    %p119 = scmp.ne.s32.totalorder %s105, %s106
    %p120 = scmp.eq.s32.totalorder %s16, 3
    %p121 = por %p119, %p120
    %p123 = scmp.ne.s32.totalorder %s106, %s122
    %p124 = scmp.eq.s32.totalorder %s16, 0
    %p125 = por %p123, %p124
    %s126 = ssub.s32 %s17, %s29
    %s127 = ssub.s32 %s18, %s25
    %s128 = sor.u32 %s126, %s127
    %p129 = scmp.eq.s32.totalorder %s128, 0
    %s131 = sadd.s32 %s130, 1
    %s132 = scalar_select %p129, %s130, %s131
    %p135 = pneg %p129
    %p136 = scmp.eq.s32.totalorder %s10, 3
    %p137 = por %p135, %p136
    %p138 = scmp.ne.s32.totalorder %s130, %s133
    %p139 = scmp.eq.s32.totalorder %s10, 0
    %p140 = por %p138, %p139
    %p141 = scmp.ne.s32.totalorder %s130, %s133
    %p142 = scmp.eq.s32.totalorder %s15, 3
    %p143 = por %p141, %p142
    %p144 = scmp.ne.s32.totalorder %s133, %s134
    %p145 = scmp.eq.s32.totalorder %s15, 0
    %p146 = por %p144, %p145
    %p147 = scmp.ne.s32.totalorder %s133, %s134
    %p148 = scmp.eq.s32.totalorder %s16, 3
    %p149 = por %p147, %p148
    %p151 = scmp.ne.s32.totalorder %s134, %s150
    %p152 = scmp.eq.s32.totalorder %s16, 0
    %p153 = por %p151, %p152
    %p154 = scmp.le.s32.totalorder 1, %s10
    %p155 = scmp.lt.s32.totalorder %s10, 5
    %p156 = pnand %p154, %p155
    %p157 = pneg %p156
    // Predicated region
    $region9: #{sbottleneck_forward.3} parent=5 // pred_check
      _
    $region10: #{sbottleneck_forward.3} parent=5 // pred_check_branch
      %159 = sbr.rel (%p156) target = $region12
    $region11: #{sbottleneck_forward.3} parent=5 // pred_region
      %s160 = ssub.s32 %s10, 1
      // Predicated region
      $region13: #{sbottleneck_forward.3} parent=11 // pred_check
        %p161 = pneg %p69
      $region14: #{sbottleneck_forward.3} parent=11 // pred_check_branch
        %163 = sbr.rel (%p161) target = $region16
      $region15: #{sbottleneck_forward.3} parent=11 // pred_region
        _
      $region16: #{sbottleneck_forward.3} parent=11 // pred_fallthru
        _
      // Predicated region
      $region17: #{sbottleneck_forward.3} parent=11 // pred_check
        %p164 = pneg %p90
      $region18: #{sbottleneck_forward.3} parent=11 // pred_check_branch
        %166 = sbr.rel (%p164) target = $region20
      $region19: #{sbottleneck_forward.3} parent=11 // pred_region
        _
      $region20: #{sbottleneck_forward.3} parent=11 // pred_fallthru
        _
    $region12: #{sbottleneck_forward.3} parent=5 // pred_fallthru
      _
    %p167 = scmp.lt.s32.totalorder %s10, 4
    // Predicated region
    $region21: #{sbottleneck_forward.3} parent=5 // pred_check
      %p168 = pneg %p167
    $region22: #{sbottleneck_forward.3} parent=5 // pred_check_branch
      %170 = sbr.rel (%p168) target = $region24
    $region23: #{sbottleneck_forward.3} parent=5 // pred_region
      // Predicated region
      $region25: #{sbottleneck_forward.3} parent=23 // pred_check
        %p171 = pneg %p42
      $region26: #{sbottleneck_forward.3} parent=23 // pred_check_branch
        %173 = sbr.rel (%p171) target = $region28
      $region27: #{sbottleneck_forward.3} parent=23 // pred_region
        %p174 = scmp.lt.s32.totalorder %s17, 1
        %s175 = scalar_select %p174, %s17, 1
        %s176 = smul.addr %s175, 54
        %s177 = smul.addr %s176, 4
        %s178 = scalar_lea.vmem %s0, %s177
      $region28: #{sbottleneck_forward.3} parent=23 // pred_fallthru
        _
      // Predicated region
      $region29: #{sbottleneck_forward.3} parent=23 // pred_check
        %p179 = pneg %p112
      $region30: #{sbottleneck_forward.3} parent=23 // pred_check_branch
        %181 = sbr.rel (%p179) target = $region32
      $region31: #{sbottleneck_forward.3} parent=23 // pred_region
        %s182 = smul.u32 8, %s18
        %p183 = scmp.lt.s32.totalorder %s17, 1
        %s184 = scalar_select %p183, %s17, 1
        %p185 = scmp.lt.s32.totalorder %s182, 15
        %s186 = scalar_select %p185, %s182, 15
        %s187 = smul.addr %s186, 2
        %s188 = smul.addr %s184, 32
        %s189 = sadd.s32 %s187, %s188
        %s190 = smul.addr %s189, 8
        %s191 = scalar_lea.vmem %s3, %s190
        %s192 = smul.u32 8, %s18
      $region32: #{sbottleneck_forward.3} parent=23 // pred_fallthru
        _
    $region24: #{sbottleneck_forward.3} parent=5 // pred_fallthru
      _
    %p193 = scmp.le.s32.totalorder 1, %s10
    %p194 = scmp.lt.s32.totalorder %s10, 5
    %p195 = pnand %p193, %p194
    %p196 = pneg %p195
    // Predicated region
    $region33: #{sbottleneck_forward.3} parent=5 // pred_check
      _
    $region34: #{sbottleneck_forward.3} parent=5 // pred_check_branch
      %198 = sbr.rel (%p195) target = $region36
    $region35: #{sbottleneck_forward.3} parent=5 // pred_region
      %s199 = ssub.s32 %s10, 1
      %p200 = scmp.lt.s32.totalorder %s19, 1
      %s201 = scalar_select %p200, %s19, 1
      %s202 = smul.addr %s201, 54
      %s203 = smul.addr %s202, 4
      %s204 = scalar_lea.vmem %s0, %s203
      %p205 = pneg %p48
      %p206 = pneg %p45
      %p207 = pneg %p69
      %p208 = pneg %p66
      %p209 = pneg %p90
      %p210 = pneg %p87
      %s211 = smul.u32 8, %s20
      %p212 = scmp.lt.s32.totalorder %s19, 1
      %s213 = scalar_select %p212, %s19, 1
      %p214 = scmp.lt.s32.totalorder %s211, 15
      %s215 = scalar_select %p214, %s211, 15
      %s216 = smul.addr %s215, 2
      %s217 = smul.addr %s213, 32
      %s218 = sadd.s32 %s216, %s217
      %s219 = smul.addr %s218, 8
      %s220 = scalar_lea.vmem %s3, %s219
      %p221 = pneg %p118
      %p222 = pneg %p115
      %p223 = pneg %p146
      %p224 = pneg %p143
      %s225 = smul.u32 8, %s20
      %p226 = scmp.lt.s32.totalorder %s19, 1
      %s227 = scalar_select %p226, %s19, 1
      %p228 = scmp.lt.s32.totalorder %s225, 15
      %s229 = scalar_select %p228, %s225, 15
      %s230 = smul.addr %s229, 2
      %s231 = smul.addr %s227, 32
      %s232 = sadd.s32 %s230, %s231
      %s233 = smul.addr %s232, 8
      %s234 = scalar_lea.vmem %s4, %s233
      %p235 = scmp.lt.s32.totalorder %s19, 1
      %s236 = scalar_select %p235, %s19, 1
      %s237 = smul.addr %s236, 54
      %s238 = smul.addr %s237, 4
      %s239 = scalar_lea.vmem %s0, %s238
      %s240 = smul.u32 8, %s20
      %p241 = scmp.lt.s32.totalorder %s19, 1
      %s242 = scalar_select %p241, %s19, 1
      %p243 = scmp.lt.s32.totalorder %s240, 15
      %s244 = scalar_select %p243, %s240, 15
      %s245 = smul.addr %s244, 2
      %s246 = smul.addr %s242, 32
      %s247 = sadd.s32 %s245, %s246
      %s248 = smul.addr %s247, 8
      %s249 = scalar_lea.vmem %s3, %s248
      %s250 = smul.u32 8, %s20
      %s251 = smul.u32 8, %s20
      %p252 = scmp.lt.s32.totalorder %s19, 1
      %s253 = scalar_select %p252, %s19, 1
      %p254 = scmp.lt.s32.totalorder %s251, 15
      %s255 = scalar_select %p254, %s251, 15
      %s256 = smul.addr %s255, 2
      %s257 = smul.addr %s253, 32
      %s258 = sadd.s32 %s256, %s257
      %s259 = smul.addr %s258, 8
      %s260 = scalar_lea.vmem %s4, %s259
      %s261 = smul.u32 8, %s20
      %s263 = smul.u32 %s20, 8
      %s264 = smul.u32 %s263, 3
      %s265 = smul.addr %s264, 4
      %s266 = scalar_lea.vmem %s239, %s265
      %v267 = vld [vmem:[%s266] sm:$0xf]
      %v268 = vld [vmem:[%s266 + $0x4] sm:$0xf]
      %v269 = vld [vmem:[%s266 + $0x8] sm:$0x1]
      %v270 = vld [vmem:[%s266 + $0xc] sm:$0xf]
      %v271 = vld [vmem:[%s266 + $0x10] sm:$0xf]
      %v272 = vld [vmem:[%s266 + $0x14] sm:$0x1]
      %v273 = vld [vmem:[%s266 + $0x18] sm:$0xf]
      %v274 = vld [vmem:[%s266 + $0x1c] sm:$0xf]
      %v275 = vld [vmem:[%s266 + $0x20] sm:$0x1]
      %v276 = vld [vmem:[%s266 + $0x24] sm:$0xf]
      %v277 = vld [vmem:[%s266 + $0x28] sm:$0xf]
      %v278 = vld [vmem:[%s266 + $0x2c] sm:$0x1]
      %v279 = vld [vmem:[%s266 + $0x30] sm:$0xf]
      %v280 = vld [vmem:[%s266 + $0x34] sm:$0xf]
      %v281 = vld [vmem:[%s266 + $0x38] sm:$0x1]
      %v282 = vld [vmem:[%s266 + $0x3c] sm:$0xf]
      %v283 = vld [vmem:[%s266 + $0x40] sm:$0xf]
      %v284 = vld [vmem:[%s266 + $0x44] sm:$0x1]
      %v285 = vld [vmem:[%s266 + $0x48] sm:$0xf]
      %v286 = vld [vmem:[%s266 + $0x4c] sm:$0xf]
      %v287 = vld [vmem:[%s266 + $0x50] sm:$0x1]
      %v288 = vld [vmem:[%s266 + $0x54] sm:$0xf]
      %v289 = vld [vmem:[%s266 + $0x58] sm:$0xf]
      %v290 = vld [vmem:[%s266 + $0x5c] sm:$0x1]
      %v291 = vld [vmem:[%s266 + $0x60] sm:$0xf]
      %v292 = vld [vmem:[%s266 + $0x64] sm:$0xf]
      %v293 = vld [vmem:[%s266 + $0x68] sm:$0x1]
      %v294 = vld [vmem:[%s266 + $0x6c] sm:$0xf]
      %v295 = vld [vmem:[%s266 + $0x70] sm:$0xf]
      %v296 = vld [vmem:[%s266 + $0x74] sm:$0x1]
      %v297 = vld [vmem:[%s1] sm:$0xf]
      %v298 = vld [vmem:[%s1 + $0x4] sm:$0xf]
      %v299 = vld [vmem:[%s1 + $0x8] sm:$0xf]
      %v300 = vld [vmem:[%s1 + $0xc] sm:$0xf]
      %v301 = vld [vmem:[%s1 + $0x10] sm:$0xf]
      %v302 = vld [vmem:[%s1 + $0x14] sm:$0xf]
      %v303 = vld [vmem:[%s1 + $0x18] sm:$0xf]
      %v304 = vld [vmem:[%s1 + $0x1c] sm:$0xf]
      %v305 = vld [vmem:[%s1 + $0x20] sm:$0xf]
      %v306 = vld [vmem:[%s1 + $0x24] sm:$0xf]
      %v307 = vld [vmem:[%s1 + $0x28] sm:$0xf]
      %v308 = vld [vmem:[%s1 + $0x2c] sm:$0xf]
      %v309 = vld [vmem:[%s1 + $0x30] sm:$0xf]
      %v310 = vld [vmem:[%s1 + $0x34] sm:$0xf]
      %v311 = vld [vmem:[%s1 + $0x38] sm:$0xf]
      %v312 = vld [vmem:[%s1 + $0x3c] sm:$0xf]
      %vm313 = vsmask.f32 3328
      %vm314 = vsmask.f32 7440
      %vm315 = vmor %vm313, %vm314
      %v317 = vshrl.u32 %v267, 16
      %v319 = vrot.slane %v317, 4
      %v320 = vshll.u32 %v267, 16
      %v322 = vrot.slane %v320, 5
      %v323 = vor.u32 %v319, %v322
      %v324 = vrot.slane %v323, 4
      %v326 = vshll.u32 %v268, 16
      %v328 = vrot.slane %v326, 5
      %v329 = vsel %vm315, %v324, %v328
      %v330 = vshrl.u32 %v268, 16
      %v332 = vrot.slane %v330, 4
      %v333 = vor.u32 %v332, %v328
      %v334 = vrot.slane %v333, 4
      %v336 = vshll.u32 %v269, 16
      %v338 = vrot.slane %v336, 5
      %v339 = vsel %vm315, %v334, %v338
      %v341 = vshrl.u32 %v270, 16
      %v343 = vrot.slane %v341, 4
      %v344 = vshll.u32 %v270, 16
      %v346 = vrot.slane %v344, 5
      %v347 = vor.u32 %v343, %v346
      %v348 = vrot.slane %v347, 4
      %v350 = vshll.u32 %v271, 16
      %v352 = vrot.slane %v350, 5
      %v353 = vsel %vm315, %v348, %v352
      %v354 = vshrl.u32 %v271, 16
      %v356 = vrot.slane %v354, 4
      %v357 = vor.u32 %v356, %v352
      %v358 = vrot.slane %v357, 4
      %v360 = vshll.u32 %v272, 16
      %v362 = vrot.slane %v360, 5
      %v363 = vsel %vm315, %v358, %v362
      %v365 = vshrl.u32 %v273, 16
      %v367 = vrot.slane %v365, 4
      %v368 = vshll.u32 %v273, 16
      %v370 = vrot.slane %v368, 5
      %v371 = vor.u32 %v367, %v370
      %v372 = vrot.slane %v371, 4
      %v374 = vshll.u32 %v274, 16
      %v376 = vrot.slane %v374, 5
      %v377 = vsel %vm315, %v372, %v376
      %v378 = vshrl.u32 %v274, 16
      %v380 = vrot.slane %v378, 4
      %v381 = vor.u32 %v380, %v376
      %v382 = vrot.slane %v381, 4
      %v384 = vshll.u32 %v275, 16
      %v386 = vrot.slane %v384, 5
      %v387 = vsel %vm315, %v382, %v386
      %v389 = vshrl.u32 %v276, 16
      %v391 = vrot.slane %v389, 4
      %v392 = vshll.u32 %v276, 16
      %v394 = vrot.slane %v392, 5
      %v395 = vor.u32 %v391, %v394
      %v396 = vrot.slane %v395, 4
      %v398 = vshll.u32 %v277, 16
      %v400 = vrot.slane %v398, 5
      %v401 = vsel %vm315, %v396, %v400
      %v402 = vshrl.u32 %v277, 16
      %v404 = vrot.slane %v402, 4
      %v405 = vor.u32 %v404, %v400
      %v406 = vrot.slane %v405, 4
      %v408 = vshll.u32 %v278, 16
      %v410 = vrot.slane %v408, 5
      %v411 = vsel %vm315, %v406, %v410
      %v413 = vshrl.u32 %v279, 16
      %v415 = vrot.slane %v413, 4
      %v416 = vshll.u32 %v279, 16
      %v418 = vrot.slane %v416, 5
      %v419 = vor.u32 %v415, %v418
      %v420 = vrot.slane %v419, 4
      %v422 = vshll.u32 %v280, 16
      %v424 = vrot.slane %v422, 5
      %v425 = vsel %vm315, %v420, %v424
      %v426 = vshrl.u32 %v280, 16
      %v428 = vrot.slane %v426, 4
      %v429 = vor.u32 %v428, %v424
      %v430 = vrot.slane %v429, 4
      %v432 = vshll.u32 %v281, 16
      %v434 = vrot.slane %v432, 5
      %v435 = vsel %vm315, %v430, %v434
      %v437 = vshrl.u32 %v282, 16
      %v439 = vrot.slane %v437, 4
      %v440 = vshll.u32 %v282, 16
      %v442 = vrot.slane %v440, 5
      %v443 = vor.u32 %v439, %v442
      %v444 = vrot.slane %v443, 4
      %v446 = vshll.u32 %v283, 16
      %v448 = vrot.slane %v446, 5
      %v449 = vsel %vm315, %v444, %v448
      %v450 = vshrl.u32 %v283, 16
      %v452 = vrot.slane %v450, 4
      %v453 = vor.u32 %v452, %v448
      %v454 = vrot.slane %v453, 4
      %v456 = vshll.u32 %v284, 16
      %v458 = vrot.slane %v456, 5
      %v459 = vsel %vm315, %v454, %v458
      %v461 = vshrl.u32 %v285, 16
      %v463 = vrot.slane %v461, 4
      %v464 = vshll.u32 %v285, 16
      %v466 = vrot.slane %v464, 5
      %v467 = vor.u32 %v463, %v466
      %v468 = vrot.slane %v467, 4
      %v470 = vshll.u32 %v286, 16
      %v472 = vrot.slane %v470, 5
      %v473 = vsel %vm315, %v468, %v472
      %v474 = vshrl.u32 %v286, 16
      %v476 = vrot.slane %v474, 4
      %v477 = vor.u32 %v476, %v472
      %v478 = vrot.slane %v477, 4
      %v480 = vshll.u32 %v287, 16
      %v482 = vrot.slane %v480, 5
      %v483 = vsel %vm315, %v478, %v482
      %v485 = vshrl.u32 %v288, 16
      %v487 = vrot.slane %v485, 4
      %v488 = vshll.u32 %v288, 16
      %v490 = vrot.slane %v488, 5
      %v491 = vor.u32 %v487, %v490
      %v492 = vrot.slane %v491, 4
      %v494 = vshll.u32 %v289, 16
      %v496 = vrot.slane %v494, 5
      %v497 = vsel %vm315, %v492, %v496
      %v498 = vshrl.u32 %v289, 16
      %v500 = vrot.slane %v498, 4
      %v501 = vor.u32 %v500, %v496
      %v502 = vrot.slane %v501, 4
      %v504 = vshll.u32 %v290, 16
      %v506 = vrot.slane %v504, 5
      %v507 = vsel %vm315, %v502, %v506
      %s508 = scalar_lea.vmem %s1, 64
      %v509 = vld [vmem:[%s508] sm:$0xf]
      %v510 = vld [vmem:[%s508 + $0x4] sm:$0xf]
      %v511 = vld [vmem:[%s508 + $0x8] sm:$0xf]
      %v512 = vld [vmem:[%s508 + $0xc] sm:$0xf]
      %v513 = vld [vmem:[%s508 + $0x10] sm:$0xf]
      %v514 = vld [vmem:[%s508 + $0x14] sm:$0xf]
      %v515 = vld [vmem:[%s508 + $0x18] sm:$0xf]
      %v516 = vld [vmem:[%s508 + $0x1c] sm:$0xf]
      %v517 = vld [vmem:[%s508 + $0x20] sm:$0xf]
      %v518 = vld [vmem:[%s508 + $0x24] sm:$0xf]
      %v519 = vld [vmem:[%s508 + $0x28] sm:$0xf]
      %v520 = vld [vmem:[%s508 + $0x2c] sm:$0xf]
      %v521 = vld [vmem:[%s508 + $0x30] sm:$0xf]
      %v522 = vld [vmem:[%s508 + $0x34] sm:$0xf]
      %v523 = vld [vmem:[%s508 + $0x38] sm:$0xf]
      %v524 = vld [vmem:[%s508 + $0x3c] sm:$0xf]
      %v525 = vunpack.c.l.b16 %v329
      %v526 = vunpack.c.l.b16 %v339
      %v527 = vunpack.c.l.b16 %v353
      %v528 = vunpack.c.l.b16 %v363
      %v529 = vunpack.c.l.b16 %v377
      %v530 = vunpack.c.l.b16 %v387
      %v531 = vunpack.c.l.b16 %v401
      %v532 = vunpack.c.l.b16 %v411
      %v533 = vunpack.c.l.b16 %v425
      %v534 = vunpack.c.l.b16 %v435
      %v535 = vunpack.c.l.b16 %v449
      %v536 = vunpack.c.l.b16 %v459
      %v537 = vunpack.c.l.b16 %v473
      %v538 = vunpack.c.l.b16 %v483
      %v539 = vunpack.c.l.b16 %v497
      %v540 = vunpack.c.l.b16 %v507
      %v541 = vpack.c.b16 %v526, %v525
      %v542 = vpack.c.b16 %v528, %v527
      %v543 = vpack.c.b16 %v530, %v529
      %v544 = vpack.c.b16 %v532, %v531
      %v545 = vpack.c.b16 %v534, %v533
      %v546 = vpack.c.b16 %v536, %v535
      %v547 = vpack.c.b16 %v538, %v537
      %v548 = vpack.c.b16 %v540, %v539
      %v573 = vunpack.c.l.b16 %v509
      %v574 = vunpack.c.l.b16 %v510
      %v575 = vunpack.c.l.b16 %v511
      %v576 = vunpack.c.l.b16 %v512
      %v577 = vunpack.c.l.b16 %v513
      %v578 = vunpack.c.l.b16 %v514
      %v579 = vunpack.c.l.b16 %v515
      %v580 = vunpack.c.l.b16 %v516
      %v581 = vunpack.c.l.b16 %v517
      %v582 = vunpack.c.l.b16 %v518
      %v583 = vunpack.c.l.b16 %v519
      %v584 = vunpack.c.l.b16 %v520
      %v585 = vunpack.c.l.b16 %v521
      %v586 = vunpack.c.l.b16 %v522
      %v587 = vunpack.c.l.b16 %v523
      %v588 = vunpack.c.l.b16 %v524
      %v589 = vpack.c.b16 %v574, %v573
      %v590 = vpack.c.b16 %v576, %v575
      %v591 = vpack.c.b16 %v578, %v577
      %v592 = vpack.c.b16 %v580, %v579
      %v593 = vpack.c.b16 %v582, %v581
      %v594 = vpack.c.b16 %v584, %v583
      %v595 = vpack.c.b16 %v586, %v585
      %v596 = vpack.c.b16 %v588, %v587
      %605 = vmatprep.subr.bf16.mxu0 0
      %606 = vmatpush1.bf16.msra.mxu0 %v589
      %607 = vmatprep.subr.bf16.mxu0 0
      %608 = vmatpush1.bf16.msra.mxu0 %v590
      %609 = vmatprep.subr.bf16.mxu0 0
      %610 = vmatpush1.bf16.msra.mxu0 %v591
      %611 = vmatprep.subr.bf16.mxu0 0
      %612 = vmatpush1.bf16.msra.mxu0 %v592
      %613 = vmatprep.subr.bf16.mxu0 0
      %614 = vmatpush1.bf16.msra.mxu0 %v593
      %615 = vmatprep.subr.bf16.mxu0 0
      %616 = vmatpush1.bf16.msra.mxu0 %v594
      %617 = vmatprep.subr.bf16.mxu0 0
      %618 = vmatpush1.bf16.msra.mxu0 %v595
      %619 = vmatprep.subr.bf16.mxu0 0
      %620 = vmatpush1.bf16.msra.mxu0 %v596
      %621 = vmatprep.subr.bf16.mxu0 0
      %622 = vmatpush1.bf16.msra.mxu0 0
      %623 = vmatprep.subr.bf16.mxu0 0
      %624 = vmatpush1.bf16.msra.mxu0 0
      %625 = vmatprep.subr.bf16.mxu0 0
      %626 = vmatpush1.bf16.msra.mxu0 0
      %627 = vmatprep.subr.bf16.mxu0 0
      %628 = vmatpush1.bf16.msra.mxu0 0
      %629 = vmatprep.subr.bf16.mxu0 0
      %630 = vmatpush1.bf16.msra.mxu0 0
      %631 = vmatprep.subr.bf16.mxu0 0
      %632 = vmatpush1.bf16.msra.mxu0 0
      %633 = vmatprep.subr.bf16.mxu0 0
      %634 = vmatpush1.bf16.msra.mxu0 0
      %635 = vmatprep.subr.bf16.mxu0 0
      %636 = vmatpush1.bf16.msra.mxu0 0
      %637 = vmatprep.mubr.bf16.mxu0 0
      %638 = vmatmul.mubr.bf16.gmra.mrb[0].mxu0 %v541
      %v639 = vpop.f32.mrb[0].mxu0
      %v640 = vadd.f32 0.0, %v639
      %v641 = vpop.f32.mrb[0].mxu0
      %v642 = vpop.f32.mrb[0].mxu0
      %v643 = vadd.f32 0.0, %v642
      %v644 = vpop.f32.mrb[0].mxu0
      %645 = vmatprep.mubr.bf16.mxu0 0
      %646 = vmatmul.mubr.bf16.gmra.mrb[0].mxu0 %v542
      %v647 = vpop.f32.mrb[0].mxu0
      %v648 = vadd.f32 0.0, %v647
      %v649 = vpop.f32.mrb[0].mxu0
      %v650 = vpop.f32.mrb[0].mxu0
      %v651 = vadd.f32 0.0, %v650
      %v652 = vpop.f32.mrb[0].mxu0
      %653 = vmatprep.mubr.bf16.mxu0 0
      %654 = vmatmul.mubr.bf16.gmra.mrb[0].mxu0 %v543
      %v655 = vpop.f32.mrb[0].mxu0
      %v656 = vadd.f32 0.0, %v655
      %v657 = vpop.f32.mrb[0].mxu0
      %v658 = vpop.f32.mrb[0].mxu0
      %v659 = vadd.f32 0.0, %v658
      %v660 = vpop.f32.mrb[0].mxu0
      %661 = vmatprep.mubr.bf16.mxu0 0
      %662 = vmatmul.mubr.bf16.gmra.mrb[0].mxu0 %v544
      %v663 = vpop.f32.mrb[0].mxu0
      %v664 = vadd.f32 0.0, %v663
      %v665 = vpop.f32.mrb[0].mxu0
      %v666 = vpop.f32.mrb[0].mxu0
      %v667 = vadd.f32 0.0, %v666
      %v668 = vpop.f32.mrb[0].mxu0
      %669 = vmatprep.mubr.bf16.mxu0 0
      %670 = vmatmul.mubr.bf16.gmra.mrb[0].mxu0 %v545
      %v671 = vpop.f32.mrb[0].mxu0
      %v672 = vadd.f32 0.0, %v671
      %v673 = vpop.f32.mrb[0].mxu0
      %v674 = vpop.f32.mrb[0].mxu0
      %v675 = vadd.f32 0.0, %v674
      %v676 = vpop.f32.mrb[0].mxu0
      %677 = vmatprep.mubr.bf16.mxu0 0
      %678 = vmatmul.mubr.bf16.gmra.mrb[0].mxu0 %v546
      %v679 = vpop.f32.mrb[0].mxu0
      %v680 = vadd.f32 0.0, %v679
      %v681 = vpop.f32.mrb[0].mxu0
      %v682 = vpop.f32.mrb[0].mxu0
      %v683 = vadd.f32 0.0, %v682
      %v684 = vpop.f32.mrb[0].mxu0
      %685 = vmatprep.mubr.bf16.mxu0 0
      %686 = vmatmul.mubr.bf16.gmra.mrb[0].mxu0 %v547
      %v687 = vpop.f32.mrb[0].mxu0
      %v688 = vadd.f32 0.0, %v687
      %v689 = vpop.f32.mrb[0].mxu0
      %v690 = vpop.f32.mrb[0].mxu0
      %v691 = vadd.f32 0.0, %v690
      %v692 = vpop.f32.mrb[0].mxu0
      %693 = vmatprep.mubr.bf16.mxu0 0
      %694 = vmatmul.mubr.bf16.gmra.mrb[0].mxu0 %v548
      %v695 = vpop.f32.mrb[0].mxu0
      %v696 = vadd.f32 0.0, %v695
      %v697 = vpop.f32.mrb[0].mxu0
      %v698 = vpop.f32.mrb[0].mxu0
      %v699 = vadd.f32 0.0, %v698
      %v700 = vpop.f32.mrb[0].mxu0
      %701 = vdwg.mxu0
      %v718 = vunpack.c.l.b16 %v267
      %v719 = vunpack.c.l.b16 %v268
      %v720 = vunpack.c.l.b16 %v270
      %v721 = vunpack.c.l.b16 %v271
      %v722 = vunpack.c.l.b16 %v273
      %v723 = vunpack.c.l.b16 %v274
      %v724 = vunpack.c.l.b16 %v276
      %v725 = vunpack.c.l.b16 %v277
      %v726 = vunpack.c.l.b16 %v279
      %v727 = vunpack.c.l.b16 %v280
      %v728 = vunpack.c.l.b16 %v282
      %v729 = vunpack.c.l.b16 %v283
      %v730 = vunpack.c.l.b16 %v285
      %v731 = vunpack.c.l.b16 %v286
      %v732 = vunpack.c.l.b16 %v288
      %v733 = vunpack.c.l.b16 %v289
      %v734 = vpack.c.b16 %v719, %v718
      %v735 = vpack.c.b16 %v721, %v720
      %v736 = vpack.c.b16 %v723, %v722
      %v737 = vpack.c.b16 %v725, %v724
      %v738 = vpack.c.b16 %v727, %v726
      %v739 = vpack.c.b16 %v729, %v728
      %v740 = vpack.c.b16 %v731, %v730
      %v741 = vpack.c.b16 %v733, %v732
      %v766 = vunpack.c.l.b16 %v297
      %v767 = vunpack.c.l.b16 %v298
      %v768 = vunpack.c.l.b16 %v299
      %v769 = vunpack.c.l.b16 %v300
      %v770 = vunpack.c.l.b16 %v301
      %v771 = vunpack.c.l.b16 %v302
      %v772 = vunpack.c.l.b16 %v303
      %v773 = vunpack.c.l.b16 %v304
      %v774 = vunpack.c.l.b16 %v305
      %v775 = vunpack.c.l.b16 %v306
      %v776 = vunpack.c.l.b16 %v307
      %v777 = vunpack.c.l.b16 %v308
      %v778 = vunpack.c.l.b16 %v309
      %v779 = vunpack.c.l.b16 %v310
      %v780 = vunpack.c.l.b16 %v311
      %v781 = vunpack.c.l.b16 %v312
      %v782 = vpack.c.b16 %v767, %v766
      %v783 = vpack.c.b16 %v769, %v768
      %v784 = vpack.c.b16 %v771, %v770
      %v785 = vpack.c.b16 %v773, %v772
      %v786 = vpack.c.b16 %v775, %v774
      %v787 = vpack.c.b16 %v777, %v776
      %v788 = vpack.c.b16 %v779, %v778
      %v789 = vpack.c.b16 %v781, %v780
      %798 = vmatprep.subr.bf16.mxu0 0
      %799 = vmatpush1.bf16.msra.mxu0 %v782
      %800 = vmatprep.subr.bf16.mxu0 0
      %801 = vmatpush1.bf16.msra.mxu0 %v783
      %802 = vmatprep.subr.bf16.mxu0 0
      %803 = vmatpush1.bf16.msra.mxu0 %v784
      %804 = vmatprep.subr.bf16.mxu0 0
      %805 = vmatpush1.bf16.msra.mxu0 %v785
      %806 = vmatprep.subr.bf16.mxu0 0
      %807 = vmatpush1.bf16.msra.mxu0 %v786
      %808 = vmatprep.subr.bf16.mxu0 0
      %809 = vmatpush1.bf16.msra.mxu0 %v787
      %810 = vmatprep.subr.bf16.mxu0 0
      %811 = vmatpush1.bf16.msra.mxu0 %v788
      %812 = vmatprep.subr.bf16.mxu0 0
      %813 = vmatpush1.bf16.msra.mxu0 %v789
      %814 = vmatprep.subr.bf16.mxu0 0
      %815 = vmatpush1.bf16.msra.mxu0 0
      %816 = vmatprep.subr.bf16.mxu0 0
      %817 = vmatpush1.bf16.msra.mxu0 0
      %818 = vmatprep.subr.bf16.mxu0 0
      %819 = vmatpush1.bf16.msra.mxu0 0
      %820 = vmatprep.subr.bf16.mxu0 0
      %821 = vmatpush1.bf16.msra.mxu0 0
      %822 = vmatprep.subr.bf16.mxu0 0
      %823 = vmatpush1.bf16.msra.mxu0 0
      %824 = vmatprep.subr.bf16.mxu0 0
      %825 = vmatpush1.bf16.msra.mxu0 0
      %826 = vmatprep.subr.bf16.mxu0 0
      %827 = vmatpush1.bf16.msra.mxu0 0
      %828 = vmatprep.subr.bf16.mxu0 0
      %829 = vmatpush1.bf16.msra.mxu0 0
      %830 = vmatprep.mubr.bf16.mxu0 0
      %831 = vmatmul.mubr.bf16.gmra.mrb[0].mxu0 %v734
      %v832 = vpop.f32.mrb[0].mxu0
      %v833 = vadd.f32 %v640, %v832
      %v834 = vpop.f32.mrb[0].mxu0
      %v835 = vpop.f32.mrb[0].mxu0
      %v836 = vadd.f32 %v643, %v835
      %v837 = vpop.f32.mrb[0].mxu0
      %838 = vmatprep.mubr.bf16.mxu0 0
      %839 = vmatmul.mubr.bf16.gmra.mrb[0].mxu0 %v735
      %v840 = vpop.f32.mrb[0].mxu0
      %v841 = vadd.f32 %v648, %v840
      %v842 = vpop.f32.mrb[0].mxu0
      %v843 = vpop.f32.mrb[0].mxu0
      %v844 = vadd.f32 %v651, %v843
      %v845 = vpop.f32.mrb[0].mxu0
      %846 = vmatprep.mubr.bf16.mxu0 0
      %847 = vmatmul.mubr.bf16.gmra.mrb[0].mxu0 %v736
      %v848 = vpop.f32.mrb[0].mxu0
      %v849 = vadd.f32 %v656, %v848
      %v850 = vpop.f32.mrb[0].mxu0
      %v851 = vpop.f32.mrb[0].mxu0
      %v852 = vadd.f32 %v659, %v851
      %v853 = vpop.f32.mrb[0].mxu0
      %854 = vmatprep.mubr.bf16.mxu0 0
      %855 = vmatmul.mubr.bf16.gmra.mrb[0].mxu0 %v737
      %v856 = vpop.f32.mrb[0].mxu0
      %v857 = vadd.f32 %v664, %v856
      %v858 = vpop.f32.mrb[0].mxu0
      %v859 = vpop.f32.mrb[0].mxu0
      %v860 = vadd.f32 %v667, %v859
      %v861 = vpop.f32.mrb[0].mxu0
      %862 = vmatprep.mubr.bf16.mxu0 0
      %863 = vmatmul.mubr.bf16.gmra.mrb[0].mxu0 %v738
      %v864 = vpop.f32.mrb[0].mxu0
      %v865 = vadd.f32 %v672, %v864
      %v866 = vpop.f32.mrb[0].mxu0
      %v867 = vpop.f32.mrb[0].mxu0
      %v868 = vadd.f32 %v675, %v867
      %v869 = vpop.f32.mrb[0].mxu0
      %870 = vmatprep.mubr.bf16.mxu0 0
      %871 = vmatmul.mubr.bf16.gmra.mrb[0].mxu0 %v739
      %v872 = vpop.f32.mrb[0].mxu0
      %v873 = vadd.f32 %v680, %v872
      %v874 = vpop.f32.mrb[0].mxu0
      %v875 = vpop.f32.mrb[0].mxu0
      %v876 = vadd.f32 %v683, %v875
      %v877 = vpop.f32.mrb[0].mxu0
      %878 = vmatprep.mubr.bf16.mxu0 0
      %879 = vmatmul.mubr.bf16.gmra.mrb[0].mxu0 %v740
      %v880 = vpop.f32.mrb[0].mxu0
      %v881 = vadd.f32 %v688, %v880
      %v882 = vpop.f32.mrb[0].mxu0
      %v883 = vpop.f32.mrb[0].mxu0
      %v884 = vadd.f32 %v691, %v883
      %v885 = vpop.f32.mrb[0].mxu0
      %886 = vmatprep.mubr.bf16.mxu0 0
      %887 = vmatmul.mubr.bf16.gmra.mrb[0].mxu0 %v741
      %v888 = vpop.f32.mrb[0].mxu0
      %v889 = vadd.f32 %v696, %v888
      %v890 = vpop.f32.mrb[0].mxu0
      %v891 = vpop.f32.mrb[0].mxu0
      %v892 = vadd.f32 %v699, %v891
      %v893 = vpop.f32.mrb[0].mxu0
      %894 = vdwg.mxu0
      %vm903 = vcmask 1042432
      %vm904 = vcmask 1046532
      %vm905 = vmor %vm903, %vm904
      %v906 = vrot.slane %v267, 5
      %v907 = vrot.slane %v906, 4
      %v908 = vrot.slane %v268, 5
      %v909 = vsel %vm905, %v907, %v908
      %v910 = vrot.slane %v908, 4
      %v911 = vrot.slane %v269, 5
      %v912 = vsel %vm905, %v910, %v911
      %v913 = vrot.slane %v270, 5
      %v914 = vrot.slane %v913, 4
      %v915 = vrot.slane %v271, 5
      %v916 = vsel %vm905, %v914, %v915
      %v917 = vrot.slane %v915, 4
      %v918 = vrot.slane %v272, 5
      %v919 = vsel %vm905, %v917, %v918
      %v920 = vrot.slane %v273, 5
      %v921 = vrot.slane %v920, 4
      %v922 = vrot.slane %v274, 5
      %v923 = vsel %vm905, %v921, %v922
      %v924 = vrot.slane %v922, 4
      %v925 = vrot.slane %v275, 5
      %v926 = vsel %vm905, %v924, %v925
      %v927 = vrot.slane %v276, 5
      %v928 = vrot.slane %v927, 4
      %v929 = vrot.slane %v277, 5
      %v930 = vsel %vm905, %v928, %v929
      %v931 = vrot.slane %v929, 4
      %v932 = vrot.slane %v278, 5
      %v933 = vsel %vm905, %v931, %v932
      %v934 = vrot.slane %v279, 5
      %v935 = vrot.slane %v934, 4
      %v936 = vrot.slane %v280, 5
      %v937 = vsel %vm905, %v935, %v936
      %v938 = vrot.slane %v936, 4
      %v939 = vrot.slane %v281, 5
      %v940 = vsel %vm905, %v938, %v939
      %v941 = vrot.slane %v282, 5
      %v942 = vrot.slane %v941, 4
      %v943 = vrot.slane %v283, 5
      %v944 = vsel %vm905, %v942, %v943
      %v945 = vrot.slane %v943, 4
      %v946 = vrot.slane %v284, 5
      %v947 = vsel %vm905, %v945, %v946
      %v948 = vrot.slane %v285, 5
      %v949 = vrot.slane %v948, 4
      %v950 = vrot.slane %v286, 5
      %v951 = vsel %vm905, %v949, %v950
      %v952 = vrot.slane %v950, 4
      %v953 = vrot.slane %v287, 5
      %v954 = vsel %vm905, %v952, %v953
      %v955 = vrot.slane %v288, 5
      %v956 = vrot.slane %v955, 4
      %v957 = vrot.slane %v289, 5
      %v958 = vsel %vm905, %v956, %v957
      %v959 = vrot.slane %v957, 4
      %v960 = vrot.slane %v290, 5
      %v961 = vsel %vm905, %v959, %v960
      %s962 = scalar_lea.vmem %s1, 128
      %v963 = vld [vmem:[%s962] sm:$0xf]
      %v964 = vld [vmem:[%s962 + $0x4] sm:$0xf]
      %v965 = vld [vmem:[%s962 + $0x8] sm:$0xf]
      %v966 = vld [vmem:[%s962 + $0xc] sm:$0xf]
      %v967 = vld [vmem:[%s962 + $0x10] sm:$0xf]
      %v968 = vld [vmem:[%s962 + $0x14] sm:$0xf]
      %v969 = vld [vmem:[%s962 + $0x18] sm:$0xf]
      %v970 = vld [vmem:[%s962 + $0x1c] sm:$0xf]
      %v971 = vld [vmem:[%s962 + $0x20] sm:$0xf]
      %v972 = vld [vmem:[%s962 + $0x24] sm:$0xf]
      %v973 = vld [vmem:[%s962 + $0x28] sm:$0xf]
      %v974 = vld [vmem:[%s962 + $0x2c] sm:$0xf]
      %v975 = vld [vmem:[%s962 + $0x30] sm:$0xf]
      %v976 = vld [vmem:[%s962 + $0x34] sm:$0xf]
      %v977 = vld [vmem:[%s962 + $0x38] sm:$0xf]
      %v978 = vld [vmem:[%s962 + $0x3c] sm:$0xf]
      %v979 = vunpack.c.l.b16 %v909
      %v980 = vunpack.c.l.b16 %v912
      %v981 = vunpack.c.l.b16 %v916
      %v982 = vunpack.c.l.b16 %v919
      %v983 = vunpack.c.l.b16 %v923
      %v984 = vunpack.c.l.b16 %v926
      %v985 = vunpack.c.l.b16 %v930
      %v986 = vunpack.c.l.b16 %v933
      %v987 = vunpack.c.l.b16 %v937
      %v988 = vunpack.c.l.b16 %v940
      %v989 = vunpack.c.l.b16 %v944
      %v990 = vunpack.c.l.b16 %v947
      %v991 = vunpack.c.l.b16 %v951
      %v992 = vunpack.c.l.b16 %v954
      %v993 = vunpack.c.l.b16 %v958
      %v994 = vunpack.c.l.b16 %v961
      %v995 = vpack.c.b16 %v980, %v979
      %v996 = vpack.c.b16 %v982, %v981
      %v997 = vpack.c.b16 %v984, %v983
      %v998 = vpack.c.b16 %v986, %v985
      %v999 = vpack.c.b16 %v988, %v987
      %v1000 = vpack.c.b16 %v990, %v989
      %v1001 = vpack.c.b16 %v992, %v991
      %v1002 = vpack.c.b16 %v994, %v993
      %v1027 = vunpack.c.l.b16 %v963
      %v1028 = vunpack.c.l.b16 %v964
      %v1029 = vunpack.c.l.b16 %v965
      %v1030 = vunpack.c.l.b16 %v966
      %v1031 = vunpack.c.l.b16 %v967
      %v1032 = vunpack.c.l.b16 %v968
      %v1033 = vunpack.c.l.b16 %v969
      %v1034 = vunpack.c.l.b16 %v970
      %v1035 = vunpack.c.l.b16 %v971
      %v1036 = vunpack.c.l.b16 %v972
      %v1037 = vunpack.c.l.b16 %v973
      %v1038 = vunpack.c.l.b16 %v974
      %v1039 = vunpack.c.l.b16 %v975
      %v1040 = vunpack.c.l.b16 %v976
      %v1041 = vunpack.c.l.b16 %v977
      %v1042 = vunpack.c.l.b16 %v978
      %v1043 = vpack.c.b16 %v1028, %v1027
      %v1044 = vpack.c.b16 %v1030, %v1029
      %v1045 = vpack.c.b16 %v1032, %v1031
      %v1046 = vpack.c.b16 %v1034, %v1033
      %v1047 = vpack.c.b16 %v1036, %v1035
      %v1048 = vpack.c.b16 %v1038, %v1037
      %v1049 = vpack.c.b16 %v1040, %v1039
      %v1050 = vpack.c.b16 %v1042, %v1041
      %1059 = vmatprep.subr.bf16.mxu0 0
      %1060 = vmatpush1.bf16.msra.mxu0 %v1043
      %1061 = vmatprep.subr.bf16.mxu0 0
      %1062 = vmatpush1.bf16.msra.mxu0 %v1044
      %1063 = vmatprep.subr.bf16.mxu0 0
      %1064 = vmatpush1.bf16.msra.mxu0 %v1045
      %1065 = vmatprep.subr.bf16.mxu0 0
      %1066 = vmatpush1.bf16.msra.mxu0 %v1046
      %1067 = vmatprep.subr.bf16.mxu0 0
      %1068 = vmatpush1.bf16.msra.mxu0 %v1047
      %1069 = vmatprep.subr.bf16.mxu0 0
      %1070 = vmatpush1.bf16.msra.mxu0 %v1048
      %1071 = vmatprep.subr.bf16.mxu0 0
      %1072 = vmatpush1.bf16.msra.mxu0 %v1049
      %1073 = vmatprep.subr.bf16.mxu0 0
      %1074 = vmatpush1.bf16.msra.mxu0 %v1050
      %1075 = vmatprep.subr.bf16.mxu0 0
      %1076 = vmatpush1.bf16.msra.mxu0 0
      %1077 = vmatprep.subr.bf16.mxu0 0
      %1078 = vmatpush1.bf16.msra.mxu0 0
      %1079 = vmatprep.subr.bf16.mxu0 0
      %1080 = vmatpush1.bf16.msra.mxu0 0
      %1081 = vmatprep.subr.bf16.mxu0 0
      %1082 = vmatpush1.bf16.msra.mxu0 0
      %1083 = vmatprep.subr.bf16.mxu0 0
      %1084 = vmatpush1.bf16.msra.mxu0 0
      %1085 = vmatprep.subr.bf16.mxu0 0
      %1086 = vmatpush1.bf16.msra.mxu0 0
      %1087 = vmatprep.subr.bf16.mxu0 0
      %1088 = vmatpush1.bf16.msra.mxu0 0
      %1089 = vmatprep.subr.bf16.mxu0 0
      %1090 = vmatpush1.bf16.msra.mxu0 0
      %1091 = vmatprep.mubr.bf16.mxu0 0
      %1092 = vmatmul.mubr.bf16.gmra.mrb[0].mxu0 %v995
      %v1093 = vpop.f32.mrb[0].mxu0
      %v1094 = vadd.f32 0.0, %v1093
      %v1095 = vpop.f32.mrb[0].mxu0
      %v1096 = vpop.f32.mrb[0].mxu0
      %v1097 = vadd.f32 0.0, %v1096
      %v1098 = vpop.f32.mrb[0].mxu0
      %1099 = vmatprep.mubr.bf16.mxu0 0
      %1100 = vmatmul.mubr.bf16.gmra.mrb[0].mxu0 %v996
      %v1101 = vpop.f32.mrb[0].mxu0
      %v1102 = vadd.f32 0.0, %v1101
      %v1103 = vpop.f32.mrb[0].mxu0
      %v1104 = vpop.f32.mrb[0].mxu0
      %v1105 = vadd.f32 0.0, %v1104
      %v1106 = vpop.f32.mrb[0].mxu0
      %1107 = vmatprep.mubr.bf16.mxu0 0
      %1108 = vmatmul.mubr.bf16.gmra.mrb[0].mxu0 %v997
      %v1109 = vpop.f32.mrb[0].mxu0
      %v1110 = vadd.f32 0.0, %v1109
      %v1111 = vpop.f32.mrb[0].mxu0
      %v1112 = vpop.f32.mrb[0].mxu0
      %v1113 = vadd.f32 0.0, %v1112
      %v1114 = vpop.f32.mrb[0].mxu0
      %1115 = vmatprep.mubr.bf16.mxu0 0
      %1116 = vmatmul.mubr.bf16.gmra.mrb[0].mxu0 %v998
      %v1117 = vpop.f32.mrb[0].mxu0
      %v1118 = vadd.f32 0.0, %v1117
      %v1119 = vpop.f32.mrb[0].mxu0
      %v1120 = vpop.f32.mrb[0].mxu0
      %v1121 = vadd.f32 0.0, %v1120
      %v1122 = vpop.f32.mrb[0].mxu0
      %1123 = vmatprep.mubr.bf16.mxu0 0
      %1124 = vmatmul.mubr.bf16.gmra.mrb[0].mxu0 %v999
      %v1125 = vpop.f32.mrb[0].mxu0
      %v1126 = vadd.f32 0.0, %v1125
      %v1127 = vpop.f32.mrb[0].mxu0
      %v1128 = vpop.f32.mrb[0].mxu0
      %v1129 = vadd.f32 0.0, %v1128
      %v1130 = vpop.f32.mrb[0].mxu0
      %1131 = vmatprep.mubr.bf16.mxu0 0
      %1132 = vmatmul.mubr.bf16.gmra.mrb[0].mxu0 %v1000
      %v1133 = vpop.f32.mrb[0].mxu0
      %v1134 = vadd.f32 0.0, %v1133
      %v1135 = vpop.f32.mrb[0].mxu0
      %v1136 = vpop.f32.mrb[0].mxu0
      %v1137 = vadd.f32 0.0, %v1136
      %v1138 = vpop.f32.mrb[0].mxu0
      %1139 = vmatprep.mubr.bf16.mxu0 0
      %1140 = vmatmul.mubr.bf16.gmra.mrb[0].mxu0 %v1001
      %v1141 = vpop.f32.mrb[0].mxu0
      %v1142 = vadd.f32 0.0, %v1141
      %v1143 = vpop.f32.mrb[0].mxu0
      %v1144 = vpop.f32.mrb[0].mxu0
      %v1145 = vadd.f32 0.0, %v1144
      %v1146 = vpop.f32.mrb[0].mxu0
      %1147 = vmatprep.mubr.bf16.mxu0 0
      %1148 = vmatmul.mubr.bf16.gmra.mrb[0].mxu0 %v1002
      %v1149 = vpop.f32.mrb[0].mxu0
      %v1150 = vadd.f32 0.0, %v1149
      %v1151 = vpop.f32.mrb[0].mxu0
      %v1152 = vpop.f32.mrb[0].mxu0
      %v1153 = vadd.f32 0.0, %v1152
      %v1154 = vpop.f32.mrb[0].mxu0
      %1155 = vdwg.mxu0
      %v1156 = vadd.f32 %v833, %v1094
      %v1157 = vadd.f32 %v836, %v1097
      %v1158 = vadd.f32 %v841, %v1102
      %v1159 = vadd.f32 %v844, %v1105
      %v1160 = vadd.f32 %v849, %v1110
      %v1161 = vadd.f32 %v852, %v1113
      %v1162 = vadd.f32 %v857, %v1118
      %v1163 = vadd.f32 %v860, %v1121
      %v1164 = vadd.f32 %v865, %v1126
      %v1165 = vadd.f32 %v868, %v1129
      %v1166 = vadd.f32 %v873, %v1134
      %v1167 = vadd.f32 %v876, %v1137
      %v1168 = vadd.f32 %v881, %v1142
      %v1169 = vadd.f32 %v884, %v1145
      %v1170 = vadd.f32 %v889, %v1150
      %v1171 = vadd.f32 %v892, %v1153
      %s1172 = scalar_lea.vmem %s1, 192
      %v1173 = vld [vmem:[%s1172] sm:$0xf]
      %v1174 = vld [vmem:[%s1172 + $0x4] sm:$0xf]
      %v1175 = vld [vmem:[%s1172 + $0x8] sm:$0xf]
      %v1176 = vld [vmem:[%s1172 + $0xc] sm:$0xf]
      %v1177 = vld [vmem:[%s1172 + $0x10] sm:$0xf]
      %v1178 = vld [vmem:[%s1172 + $0x14] sm:$0xf]
      %v1179 = vld [vmem:[%s1172 + $0x18] sm:$0xf]
      %v1180 = vld [vmem:[%s1172 + $0x1c] sm:$0xf]
      %v1181 = vld [vmem:[%s1172 + $0x20] sm:$0xf]
      %v1182 = vld [vmem:[%s1172 + $0x24] sm:$0xf]
      %v1183 = vld [vmem:[%s1172 + $0x28] sm:$0xf]
      %v1184 = vld [vmem:[%s1172 + $0x2c] sm:$0xf]
      %v1185 = vld [vmem:[%s1172 + $0x30] sm:$0xf]
      %v1186 = vld [vmem:[%s1172 + $0x34] sm:$0xf]
      %v1187 = vld [vmem:[%s1172 + $0x38] sm:$0xf]
      %v1188 = vld [vmem:[%s1172 + $0x3c] sm:$0xf]
      %v1191 = vunpack.c.l.b16 %v291
      %v1192 = vunpack.c.l.b16 %v292
      %v1193 = vpack.c.b16 %v1192, %v1191
      %v1211 = vunpack.c.l.b16 %v1173
      %v1212 = vunpack.c.l.b16 %v1174
      %v1213 = vunpack.c.l.b16 %v1175
      %v1214 = vunpack.c.l.b16 %v1176
      %v1215 = vunpack.c.l.b16 %v1177
      %v1216 = vunpack.c.l.b16 %v1178
      %v1217 = vunpack.c.l.b16 %v1179
      %v1218 = vunpack.c.l.b16 %v1180
      %v1219 = vunpack.c.l.b16 %v1181
      %v1220 = vunpack.c.l.b16 %v1182
      %v1221 = vunpack.c.l.b16 %v1183
      %v1222 = vunpack.c.l.b16 %v1184
      %v1223 = vunpack.c.l.b16 %v1185
      %v1224 = vunpack.c.l.b16 %v1186
      %v1225 = vunpack.c.l.b16 %v1187
      %v1226 = vunpack.c.l.b16 %v1188
      %v1227 = vpack.c.b16 %v1212, %v1211
      %v1228 = vpack.c.b16 %v1214, %v1213
      %v1229 = vpack.c.b16 %v1216, %v1215
      %v1230 = vpack.c.b16 %v1218, %v1217
      %v1231 = vpack.c.b16 %v1220, %v1219
      %v1232 = vpack.c.b16 %v1222, %v1221
      %v1233 = vpack.c.b16 %v1224, %v1223
      %v1234 = vpack.c.b16 %v1226, %v1225
      %1243 = vmatprep.subr.bf16.mxu0 0
      %1244 = vmatpush1.bf16.msra.mxu0 %v1227
      %1245 = vmatprep.subr.bf16.mxu0 0
      %1246 = vmatpush1.bf16.msra.mxu0 %v1228
      %1247 = vmatprep.subr.bf16.mxu0 0
      %1248 = vmatpush1.bf16.msra.mxu0 %v1229
      %1249 = vmatprep.subr.bf16.mxu0 0
      %1250 = vmatpush1.bf16.msra.mxu0 %v1230
      %1251 = vmatprep.subr.bf16.mxu0 0
      %1252 = vmatpush1.bf16.msra.mxu0 %v1231
      %1253 = vmatprep.subr.bf16.mxu0 0
      %1254 = vmatpush1.bf16.msra.mxu0 %v1232
      %1255 = vmatprep.subr.bf16.mxu0 0
      %1256 = vmatpush1.bf16.msra.mxu0 %v1233
      %1257 = vmatprep.subr.bf16.mxu0 0
      %1258 = vmatpush1.bf16.msra.mxu0 %v1234
      %1259 = vmatprep.subr.bf16.mxu0 0
      %1260 = vmatpush1.bf16.msra.mxu0 0
      %1261 = vmatprep.subr.bf16.mxu0 0
      %1262 = vmatpush1.bf16.msra.mxu0 0
      %1263 = vmatprep.subr.bf16.mxu0 0
      %1264 = vmatpush1.bf16.msra.mxu0 0
      %1265 = vmatprep.subr.bf16.mxu0 0
      %1266 = vmatpush1.bf16.msra.mxu0 0
      %1267 = vmatprep.subr.bf16.mxu0 0
      %1268 = vmatpush1.bf16.msra.mxu0 0
      %1269 = vmatprep.subr.bf16.mxu0 0
      %1270 = vmatpush1.bf16.msra.mxu0 0
      %1271 = vmatprep.subr.bf16.mxu0 0
      %1272 = vmatpush1.bf16.msra.mxu0 0
      %1273 = vmatprep.subr.bf16.mxu0 0
      %1274 = vmatpush1.bf16.msra.mxu0 0
      %1275 = vmatprep.mubr.bf16.mxu0 0
      %1276 = vmatmul.mubr.bf16.gmra.mrb[0].mxu0 %v735
      %v1277 = vpop.f32.mrb[0].mxu0
      %v1278 = vadd.f32 0.0, %v1277
      %v1279 = vpop.f32.mrb[0].mxu0
      %v1280 = vpop.f32.mrb[0].mxu0
      %v1281 = vadd.f32 0.0, %v1280
      %v1282 = vpop.f32.mrb[0].mxu0
      %1283 = vmatprep.mubr.bf16.mxu0 0
      %1284 = vmatmul.mubr.bf16.gmra.mrb[0].mxu0 %v736
      %v1285 = vpop.f32.mrb[0].mxu0
      %v1286 = vadd.f32 0.0, %v1285
      %v1287 = vpop.f32.mrb[0].mxu0
      %v1288 = vpop.f32.mrb[0].mxu0
      %v1289 = vadd.f32 0.0, %v1288
      %v1290 = vpop.f32.mrb[0].mxu0
      %1291 = vmatprep.mubr.bf16.mxu0 0
      %1292 = vmatmul.mubr.bf16.gmra.mrb[0].mxu0 %v737
      %v1293 = vpop.f32.mrb[0].mxu0
      %v1294 = vadd.f32 0.0, %v1293
      %v1295 = vpop.f32.mrb[0].mxu0
      %v1296 = vpop.f32.mrb[0].mxu0
      %v1297 = vadd.f32 0.0, %v1296
      %v1298 = vpop.f32.mrb[0].mxu0
      %1299 = vmatprep.mubr.bf16.mxu0 0
      %1300 = vmatmul.mubr.bf16.gmra.mrb[0].mxu0 %v738
      %v1301 = vpop.f32.mrb[0].mxu0
      %v1302 = vadd.f32 0.0, %v1301
      %v1303 = vpop.f32.mrb[0].mxu0
      %v1304 = vpop.f32.mrb[0].mxu0
      %v1305 = vadd.f32 0.0, %v1304
      %v1306 = vpop.f32.mrb[0].mxu0
      %1307 = vmatprep.mubr.bf16.mxu0 0
      %1308 = vmatmul.mubr.bf16.gmra.mrb[0].mxu0 %v739
      %v1309 = vpop.f32.mrb[0].mxu0
      %v1310 = vadd.f32 0.0, %v1309
      %v1311 = vpop.f32.mrb[0].mxu0
      %v1312 = vpop.f32.mrb[0].mxu0
      %v1313 = vadd.f32 0.0, %v1312
      %v1314 = vpop.f32.mrb[0].mxu0
      %1315 = vmatprep.mubr.bf16.mxu0 0
      %1316 = vmatmul.mubr.bf16.gmra.mrb[0].mxu0 %v740
      %v1317 = vpop.f32.mrb[0].mxu0
      %v1318 = vadd.f32 0.0, %v1317
      %v1319 = vpop.f32.mrb[0].mxu0
      %v1320 = vpop.f32.mrb[0].mxu0
      %v1321 = vadd.f32 0.0, %v1320
      %v1322 = vpop.f32.mrb[0].mxu0
      %1323 = vmatprep.mubr.bf16.mxu0 0
      %1324 = vmatmul.mubr.bf16.gmra.mrb[0].mxu0 %v741
      %v1325 = vpop.f32.mrb[0].mxu0
      %v1326 = vadd.f32 0.0, %v1325
      %v1327 = vpop.f32.mrb[0].mxu0
      %v1328 = vpop.f32.mrb[0].mxu0
      %v1329 = vadd.f32 0.0, %v1328
      %v1330 = vpop.f32.mrb[0].mxu0
      %1331 = vmatprep.mubr.bf16.mxu0 0
      %1332 = vmatmul.mubr.bf16.gmra.mrb[0].mxu0 %v1193
      %v1333 = vpop.f32.mrb[0].mxu0
      %v1334 = vadd.f32 0.0, %v1333
      %v1335 = vpop.f32.mrb[0].mxu0
      %v1336 = vpop.f32.mrb[0].mxu0
      %v1337 = vadd.f32 0.0, %v1336
      %v1338 = vpop.f32.mrb[0].mxu0
      %1339 = vdwg.mxu0
      %v1340 = vadd.f32 %v1156, %v1278
      %v1341 = vadd.f32 %v1157, %v1281
      %v1342 = vadd.f32 %v1158, %v1286
      %v1343 = vadd.f32 %v1159, %v1289
      %v1344 = vadd.f32 %v1160, %v1294
      %v1345 = vadd.f32 %v1161, %v1297
      %v1346 = vadd.f32 %v1162, %v1302
      %v1347 = vadd.f32 %v1163, %v1305
      %v1348 = vadd.f32 %v1164, %v1310
      %v1349 = vadd.f32 %v1165, %v1313
      %v1350 = vadd.f32 %v1166, %v1318
      %v1351 = vadd.f32 %v1167, %v1321
      %v1352 = vadd.f32 %v1168, %v1326
      %v1353 = vadd.f32 %v1169, %v1329
      %v1354 = vadd.f32 %v1170, %v1334
      %v1355 = vadd.f32 %v1171, %v1337
      %v1357 = vshrl.u32 %v291, 16
      %v1359 = vrot.slane %v1357, 4
      %v1360 = vshll.u32 %v291, 16
      %v1362 = vrot.slane %v1360, 5
      %v1363 = vor.u32 %v1359, %v1362
      %v1364 = vrot.slane %v1363, 4
      %v1366 = vshll.u32 %v292, 16
      %v1368 = vrot.slane %v1366, 5
      %v1369 = vsel %vm315, %v1364, %v1368
      %v1370 = vshrl.u32 %v292, 16
      %v1372 = vrot.slane %v1370, 4
      %v1373 = vor.u32 %v1372, %v1368
      %v1374 = vrot.slane %v1373, 4
      %v1376 = vshll.u32 %v293, 16
      %v1378 = vrot.slane %v1376, 5
      %v1379 = vsel %vm315, %v1374, %v1378
      %s1380 = scalar_lea.vmem %s1, 256
      %v1381 = vld [vmem:[%s1380] sm:$0xf]
      %v1382 = vld [vmem:[%s1380 + $0x4] sm:$0xf]
      %v1383 = vld [vmem:[%s1380 + $0x8] sm:$0xf]
      %v1384 = vld [vmem:[%s1380 + $0xc] sm:$0xf]
      %v1385 = vld [vmem:[%s1380 + $0x10] sm:$0xf]
      %v1386 = vld [vmem:[%s1380 + $0x14] sm:$0xf]
      %v1387 = vld [vmem:[%s1380 + $0x18] sm:$0xf]
      %v1388 = vld [vmem:[%s1380 + $0x1c] sm:$0xf]
      %v1389 = vld [vmem:[%s1380 + $0x20] sm:$0xf]
      %v1390 = vld [vmem:[%s1380 + $0x24] sm:$0xf]
      %v1391 = vld [vmem:[%s1380 + $0x28] sm:$0xf]
      %v1392 = vld [vmem:[%s1380 + $0x2c] sm:$0xf]
      %v1393 = vld [vmem:[%s1380 + $0x30] sm:$0xf]
      %v1394 = vld [vmem:[%s1380 + $0x34] sm:$0xf]
      %v1395 = vld [vmem:[%s1380 + $0x38] sm:$0xf]
      %v1396 = vld [vmem:[%s1380 + $0x3c] sm:$0xf]
      %v1397 = vunpack.c.l.b16 %v1369
      %v1398 = vunpack.c.l.b16 %v1379
      %v1399 = vpack.c.b16 %v1398, %v1397
      %v1417 = vunpack.c.l.b16 %v1381
      %v1418 = vunpack.c.l.b16 %v1382
      %v1419 = vunpack.c.l.b16 %v1383
      %v1420 = vunpack.c.l.b16 %v1384
      %v1421 = vunpack.c.l.b16 %v1385
      %v1422 = vunpack.c.l.b16 %v1386
      %v1423 = vunpack.c.l.b16 %v1387
      %v1424 = vunpack.c.l.b16 %v1388
      %v1425 = vunpack.c.l.b16 %v1389
      %v1426 = vunpack.c.l.b16 %v1390
      %v1427 = vunpack.c.l.b16 %v1391
      %v1428 = vunpack.c.l.b16 %v1392
      %v1429 = vunpack.c.l.b16 %v1393
      %v1430 = vunpack.c.l.b16 %v1394
      %v1431 = vunpack.c.l.b16 %v1395
      %v1432 = vunpack.c.l.b16 %v1396
      %v1433 = vpack.c.b16 %v1418, %v1417
      %v1434 = vpack.c.b16 %v1420, %v1419
      %v1435 = vpack.c.b16 %v1422, %v1421
      %v1436 = vpack.c.b16 %v1424, %v1423
      %v1437 = vpack.c.b16 %v1426, %v1425
      %v1438 = vpack.c.b16 %v1428, %v1427
      %v1439 = vpack.c.b16 %v1430, %v1429
      %v1440 = vpack.c.b16 %v1432, %v1431
      %1449 = vmatprep.subr.bf16.mxu0 0
      %1450 = vmatpush1.bf16.msra.mxu0 %v1433
      %1451 = vmatprep.subr.bf16.mxu0 0
      %1452 = vmatpush1.bf16.msra.mxu0 %v1434
      %1453 = vmatprep.subr.bf16.mxu0 0
      %1454 = vmatpush1.bf16.msra.mxu0 %v1435
      %1455 = vmatprep.subr.bf16.mxu0 0
      %1456 = vmatpush1.bf16.msra.mxu0 %v1436
      %1457 = vmatprep.subr.bf16.mxu0 0
      %1458 = vmatpush1.bf16.msra.mxu0 %v1437
      %1459 = vmatprep.subr.bf16.mxu0 0
      %1460 = vmatpush1.bf16.msra.mxu0 %v1438
      %1461 = vmatprep.subr.bf16.mxu0 0
      %1462 = vmatpush1.bf16.msra.mxu0 %v1439
      %1463 = vmatprep.subr.bf16.mxu0 0
      %1464 = vmatpush1.bf16.msra.mxu0 %v1440
      %1465 = vmatprep.subr.bf16.mxu0 0
      %1466 = vmatpush1.bf16.msra.mxu0 0
      %1467 = vmatprep.subr.bf16.mxu0 0
      %1468 = vmatpush1.bf16.msra.mxu0 0
      %1469 = vmatprep.subr.bf16.mxu0 0
      %1470 = vmatpush1.bf16.msra.mxu0 0
      %1471 = vmatprep.subr.bf16.mxu0 0
      %1472 = vmatpush1.bf16.msra.mxu0 0
      %1473 = vmatprep.subr.bf16.mxu0 0
      %1474 = vmatpush1.bf16.msra.mxu0 0
      %1475 = vmatprep.subr.bf16.mxu0 0
      %1476 = vmatpush1.bf16.msra.mxu0 0
      %1477 = vmatprep.subr.bf16.mxu0 0
      %1478 = vmatpush1.bf16.msra.mxu0 0
      %1479 = vmatprep.subr.bf16.mxu0 0
      %1480 = vmatpush1.bf16.msra.mxu0 0
      %1481 = vmatprep.mubr.bf16.mxu0 0
      %1482 = vmatmul.mubr.bf16.gmra.mrb[0].mxu0 %v542
      %v1483 = vpop.f32.mrb[0].mxu0
      %v1484 = vadd.f32 0.0, %v1483
      %v1485 = vpop.f32.mrb[0].mxu0
      %v1486 = vpop.f32.mrb[0].mxu0
      %v1487 = vadd.f32 0.0, %v1486
      %v1488 = vpop.f32.mrb[0].mxu0
      %1489 = vmatprep.mubr.bf16.mxu0 0
      %1490 = vmatmul.mubr.bf16.gmra.mrb[0].mxu0 %v543
      %v1491 = vpop.f32.mrb[0].mxu0
      %v1492 = vadd.f32 0.0, %v1491
      %v1493 = vpop.f32.mrb[0].mxu0
      %v1494 = vpop.f32.mrb[0].mxu0
      %v1495 = vadd.f32 0.0, %v1494
      %v1496 = vpop.f32.mrb[0].mxu0
      %1497 = vmatprep.mubr.bf16.mxu0 0
      %1498 = vmatmul.mubr.bf16.gmra.mrb[0].mxu0 %v544
      %v1499 = vpop.f32.mrb[0].mxu0
      %v1500 = vadd.f32 0.0, %v1499
      %v1501 = vpop.f32.mrb[0].mxu0
      %v1502 = vpop.f32.mrb[0].mxu0
      %v1503 = vadd.f32 0.0, %v1502
      %v1504 = vpop.f32.mrb[0].mxu0
      %1505 = vmatprep.mubr.bf16.mxu0 0
      %1506 = vmatmul.mubr.bf16.gmra.mrb[0].mxu0 %v545
      %v1507 = vpop.f32.mrb[0].mxu0
      %v1508 = vadd.f32 0.0, %v1507
      %v1509 = vpop.f32.mrb[0].mxu0
      %v1510 = vpop.f32.mrb[0].mxu0
      %v1511 = vadd.f32 0.0, %v1510
      %v1512 = vpop.f32.mrb[0].mxu0
      %1513 = vmatprep.mubr.bf16.mxu0 0
      %1514 = vmatmul.mubr.bf16.gmra.mrb[0].mxu0 %v546
      %v1515 = vpop.f32.mrb[0].mxu0
      %v1516 = vadd.f32 0.0, %v1515
      %v1517 = vpop.f32.mrb[0].mxu0
      %v1518 = vpop.f32.mrb[0].mxu0
      %v1519 = vadd.f32 0.0, %v1518
      %v1520 = vpop.f32.mrb[0].mxu0
      %1521 = vmatprep.mubr.bf16.mxu0 0
      %1522 = vmatmul.mubr.bf16.gmra.mrb[0].mxu0 %v547
      %v1523 = vpop.f32.mrb[0].mxu0
      %v1524 = vadd.f32 0.0, %v1523
      %v1525 = vpop.f32.mrb[0].mxu0
      %v1526 = vpop.f32.mrb[0].mxu0
      %v1527 = vadd.f32 0.0, %v1526
      %v1528 = vpop.f32.mrb[0].mxu0
      %1529 = vmatprep.mubr.bf16.mxu0 0
      %1530 = vmatmul.mubr.bf16.gmra.mrb[0].mxu0 %v548
      %v1531 = vpop.f32.mrb[0].mxu0
      %v1532 = vadd.f32 0.0, %v1531
      %v1533 = vpop.f32.mrb[0].mxu0
      %v1534 = vpop.f32.mrb[0].mxu0
      %v1535 = vadd.f32 0.0, %v1534
      %v1536 = vpop.f32.mrb[0].mxu0
      %1537 = vmatprep.mubr.bf16.mxu0 0
      %1538 = vmatmul.mubr.bf16.gmra.mrb[0].mxu0 %v1399
      %v1539 = vpop.f32.mrb[0].mxu0
      %v1540 = vadd.f32 0.0, %v1539
      %v1541 = vpop.f32.mrb[0].mxu0
      %v1542 = vpop.f32.mrb[0].mxu0
      %v1543 = vadd.f32 0.0, %v1542
      %v1544 = vpop.f32.mrb[0].mxu0
      %1545 = vdwg.mxu0
      %v1546 = vadd.f32 %v1340, %v1484
      %v1547 = vadd.f32 %v1341, %v1487
      %v1548 = vadd.f32 %v1342, %v1492
      %v1549 = vadd.f32 %v1343, %v1495
      %v1550 = vadd.f32 %v1344, %v1500
      %v1551 = vadd.f32 %v1345, %v1503
      %v1552 = vadd.f32 %v1346, %v1508
      %v1553 = vadd.f32 %v1347, %v1511
      %v1554 = vadd.f32 %v1348, %v1516
      %v1555 = vadd.f32 %v1349, %v1519
      %v1556 = vadd.f32 %v1350, %v1524
      %v1557 = vadd.f32 %v1351, %v1527
      %v1558 = vadd.f32 %v1352, %v1532
      %v1559 = vadd.f32 %v1353, %v1535
      %v1560 = vadd.f32 %v1354, %v1540
      %v1561 = vadd.f32 %v1355, %v1543
      %v1563 = vrot.slane %v291, 5
      %v1564 = vrot.slane %v1563, 4
      %v1565 = vrot.slane %v292, 5
      %v1566 = vsel %vm905, %v1564, %v1565
      %v1567 = vrot.slane %v1565, 4
      %v1568 = vrot.slane %v293, 5
      %v1569 = vsel %vm905, %v1567, %v1568
      %s1570 = scalar_lea.vmem %s1, 320
      %v1571 = vld [vmem:[%s1570] sm:$0xf]
      %v1572 = vld [vmem:[%s1570 + $0x4] sm:$0xf]
      %v1573 = vld [vmem:[%s1570 + $0x8] sm:$0xf]
      %v1574 = vld [vmem:[%s1570 + $0xc] sm:$0xf]
      %v1575 = vld [vmem:[%s1570 + $0x10] sm:$0xf]
      %v1576 = vld [vmem:[%s1570 + $0x14] sm:$0xf]
      %v1577 = vld [vmem:[%s1570 + $0x18] sm:$0xf]
      %v1578 = vld [vmem:[%s1570 + $0x1c] sm:$0xf]
      %v1579 = vld [vmem:[%s1570 + $0x20] sm:$0xf]
      %v1580 = vld [vmem:[%s1570 + $0x24] sm:$0xf]
      %v1581 = vld [vmem:[%s1570 + $0x28] sm:$0xf]
      %v1582 = vld [vmem:[%s1570 + $0x2c] sm:$0xf]
      %v1583 = vld [vmem:[%s1570 + $0x30] sm:$0xf]
      %v1584 = vld [vmem:[%s1570 + $0x34] sm:$0xf]
      %v1585 = vld [vmem:[%s1570 + $0x38] sm:$0xf]
      %v1586 = vld [vmem:[%s1570 + $0x3c] sm:$0xf]
      %v1587 = vunpack.c.l.b16 %v1566
      %v1588 = vunpack.c.l.b16 %v1569
      %v1589 = vpack.c.b16 %v1588, %v1587
      %v1607 = vunpack.c.l.b16 %v1571
      %v1608 = vunpack.c.l.b16 %v1572
      %v1609 = vunpack.c.l.b16 %v1573
      %v1610 = vunpack.c.l.b16 %v1574
      %v1611 = vunpack.c.l.b16 %v1575
      %v1612 = vunpack.c.l.b16 %v1576
      %v1613 = vunpack.c.l.b16 %v1577
      %v1614 = vunpack.c.l.b16 %v1578
      %v1615 = vunpack.c.l.b16 %v1579
      %v1616 = vunpack.c.l.b16 %v1580
      %v1617 = vunpack.c.l.b16 %v1581
      %v1618 = vunpack.c.l.b16 %v1582
      %v1619 = vunpack.c.l.b16 %v1583
      %v1620 = vunpack.c.l.b16 %v1584
      %v1621 = vunpack.c.l.b16 %v1585
      %v1622 = vunpack.c.l.b16 %v1586
      %v1623 = vpack.c.b16 %v1608, %v1607
      %v1624 = vpack.c.b16 %v1610, %v1609
      %v1625 = vpack.c.b16 %v1612, %v1611
      %v1626 = vpack.c.b16 %v1614, %v1613
      %v1627 = vpack.c.b16 %v1616, %v1615
      %v1628 = vpack.c.b16 %v1618, %v1617
      %v1629 = vpack.c.b16 %v1620, %v1619
      %v1630 = vpack.c.b16 %v1622, %v1621
      %1639 = vmatprep.subr.bf16.mxu0 0
      %1640 = vmatpush1.bf16.msra.mxu0 %v1623
      %1641 = vmatprep.subr.bf16.mxu0 0
      %1642 = vmatpush1.bf16.msra.mxu0 %v1624
      %1643 = vmatprep.subr.bf16.mxu0 0
      %1644 = vmatpush1.bf16.msra.mxu0 %v1625
      %1645 = vmatprep.subr.bf16.mxu0 0
      %1646 = vmatpush1.bf16.msra.mxu0 %v1626
      %1647 = vmatprep.subr.bf16.mxu0 0
      %1648 = vmatpush1.bf16.msra.mxu0 %v1627
      %1649 = vmatprep.subr.bf16.mxu0 0
      %1650 = vmatpush1.bf16.msra.mxu0 %v1628
      %1651 = vmatprep.subr.bf16.mxu0 0
      %1652 = vmatpush1.bf16.msra.mxu0 %v1629
      %1653 = vmatprep.subr.bf16.mxu0 0
      %1654 = vmatpush1.bf16.msra.mxu0 %v1630
      %1655 = vmatprep.subr.bf16.mxu0 0
      %1656 = vmatpush1.bf16.msra.mxu0 0
      %1657 = vmatprep.subr.bf16.mxu0 0
      %1658 = vmatpush1.bf16.msra.mxu0 0
      %1659 = vmatprep.subr.bf16.mxu0 0
      %1660 = vmatpush1.bf16.msra.mxu0 0
      %1661 = vmatprep.subr.bf16.mxu0 0
      %1662 = vmatpush1.bf16.msra.mxu0 0
      %1663 = vmatprep.subr.bf16.mxu0 0
      %1664 = vmatpush1.bf16.msra.mxu0 0
      %1665 = vmatprep.subr.bf16.mxu0 0
      %1666 = vmatpush1.bf16.msra.mxu0 0
      %1667 = vmatprep.subr.bf16.mxu0 0
      %1668 = vmatpush1.bf16.msra.mxu0 0
      %1669 = vmatprep.subr.bf16.mxu0 0
      %1670 = vmatpush1.bf16.msra.mxu0 0
      %1671 = vmatprep.mubr.bf16.mxu0 0
      %1672 = vmatmul.mubr.bf16.gmra.mrb[0].mxu0 %v996
      %v1673 = vpop.f32.mrb[0].mxu0
      %v1674 = vadd.f32 0.0, %v1673
      %v1675 = vpop.f32.mrb[0].mxu0
      %v1676 = vpop.f32.mrb[0].mxu0
      %v1677 = vadd.f32 0.0, %v1676
      %v1678 = vpop.f32.mrb[0].mxu0
      %1679 = vmatprep.mubr.bf16.mxu0 0
      %1680 = vmatmul.mubr.bf16.gmra.mrb[0].mxu0 %v997
      %v1681 = vpop.f32.mrb[0].mxu0
      %v1682 = vadd.f32 0.0, %v1681
      %v1683 = vpop.f32.mrb[0].mxu0
      %v1684 = vpop.f32.mrb[0].mxu0
      %v1685 = vadd.f32 0.0, %v1684
      %v1686 = vpop.f32.mrb[0].mxu0
      %1687 = vmatprep.mubr.bf16.mxu0 0
      %1688 = vmatmul.mubr.bf16.gmra.mrb[0].mxu0 %v998
      %v1689 = vpop.f32.mrb[0].mxu0
      %v1690 = vadd.f32 0.0, %v1689
      %v1691 = vpop.f32.mrb[0].mxu0
      %v1692 = vpop.f32.mrb[0].mxu0
      %v1693 = vadd.f32 0.0, %v1692
      %v1694 = vpop.f32.mrb[0].mxu0
      %1695 = vmatprep.mubr.bf16.mxu0 0
      %1696 = vmatmul.mubr.bf16.gmra.mrb[0].mxu0 %v999
      %v1697 = vpop.f32.mrb[0].mxu0
      %v1698 = vadd.f32 0.0, %v1697
      %v1699 = vpop.f32.mrb[0].mxu0
      %v1700 = vpop.f32.mrb[0].mxu0
      %v1701 = vadd.f32 0.0, %v1700
      %v1702 = vpop.f32.mrb[0].mxu0
      %1703 = vmatprep.mubr.bf16.mxu0 0
      %1704 = vmatmul.mubr.bf16.gmra.mrb[0].mxu0 %v1000
      %v1705 = vpop.f32.mrb[0].mxu0
      %v1706 = vadd.f32 0.0, %v1705
      %v1707 = vpop.f32.mrb[0].mxu0
      %v1708 = vpop.f32.mrb[0].mxu0
      %v1709 = vadd.f32 0.0, %v1708
      %v1710 = vpop.f32.mrb[0].mxu0
      %1711 = vmatprep.mubr.bf16.mxu0 0
      %1712 = vmatmul.mubr.bf16.gmra.mrb[0].mxu0 %v1001
      %v1713 = vpop.f32.mrb[0].mxu0
      %v1714 = vadd.f32 0.0, %v1713
      %v1715 = vpop.f32.mrb[0].mxu0
      %v1716 = vpop.f32.mrb[0].mxu0
      %v1717 = vadd.f32 0.0, %v1716
      %v1718 = vpop.f32.mrb[0].mxu0
      %1719 = vmatprep.mubr.bf16.mxu0 0
      %1720 = vmatmul.mubr.bf16.gmra.mrb[0].mxu0 %v1002
      %v1721 = vpop.f32.mrb[0].mxu0
      %v1722 = vadd.f32 0.0, %v1721
      %v1723 = vpop.f32.mrb[0].mxu0
      %v1724 = vpop.f32.mrb[0].mxu0
      %v1725 = vadd.f32 0.0, %v1724
      %v1726 = vpop.f32.mrb[0].mxu0
      %1727 = vmatprep.mubr.bf16.mxu0 0
      %1728 = vmatmul.mubr.bf16.gmra.mrb[0].mxu0 %v1589
      %v1729 = vpop.f32.mrb[0].mxu0
      %v1730 = vadd.f32 0.0, %v1729
      %v1731 = vpop.f32.mrb[0].mxu0
      %v1732 = vpop.f32.mrb[0].mxu0
      %v1733 = vadd.f32 0.0, %v1732
      %v1734 = vpop.f32.mrb[0].mxu0
      %1735 = vdwg.mxu0
      %v1736 = vadd.f32 %v1546, %v1674
      %v1737 = vadd.f32 %v1547, %v1677
      %v1738 = vadd.f32 %v1548, %v1682
      %v1739 = vadd.f32 %v1549, %v1685
      %v1740 = vadd.f32 %v1550, %v1690
      %v1741 = vadd.f32 %v1551, %v1693
      %v1742 = vadd.f32 %v1552, %v1698
      %v1743 = vadd.f32 %v1553, %v1701
      %v1744 = vadd.f32 %v1554, %v1706
      %v1745 = vadd.f32 %v1555, %v1709
      %v1746 = vadd.f32 %v1556, %v1714
      %v1747 = vadd.f32 %v1557, %v1717
      %v1748 = vadd.f32 %v1558, %v1722
      %v1749 = vadd.f32 %v1559, %v1725
      %v1750 = vadd.f32 %v1560, %v1730
      %v1751 = vadd.f32 %v1561, %v1733
      %s1752 = scalar_lea.vmem %s1, 384
      %v1753 = vld [vmem:[%s1752] sm:$0xf]
      %v1754 = vld [vmem:[%s1752 + $0x4] sm:$0xf]
      %v1755 = vld [vmem:[%s1752 + $0x8] sm:$0xf]
      %v1756 = vld [vmem:[%s1752 + $0xc] sm:$0xf]
      %v1757 = vld [vmem:[%s1752 + $0x10] sm:$0xf]
      %v1758 = vld [vmem:[%s1752 + $0x14] sm:$0xf]
      %v1759 = vld [vmem:[%s1752 + $0x18] sm:$0xf]
      %v1760 = vld [vmem:[%s1752 + $0x1c] sm:$0xf]
      %v1761 = vld [vmem:[%s1752 + $0x20] sm:$0xf]
      %v1762 = vld [vmem:[%s1752 + $0x24] sm:$0xf]
      %v1763 = vld [vmem:[%s1752 + $0x28] sm:$0xf]
      %v1764 = vld [vmem:[%s1752 + $0x2c] sm:$0xf]
      %v1765 = vld [vmem:[%s1752 + $0x30] sm:$0xf]
      %v1766 = vld [vmem:[%s1752 + $0x34] sm:$0xf]
      %v1767 = vld [vmem:[%s1752 + $0x38] sm:$0xf]
      %v1768 = vld [vmem:[%s1752 + $0x3c] sm:$0xf]
      %v1771 = vunpack.c.l.b16 %v294
      %v1772 = vunpack.c.l.b16 %v295
      %v1773 = vpack.c.b16 %v1772, %v1771
      %v1791 = vunpack.c.l.b16 %v1753
      %v1792 = vunpack.c.l.b16 %v1754
      %v1793 = vunpack.c.l.b16 %v1755
      %v1794 = vunpack.c.l.b16 %v1756
      %v1795 = vunpack.c.l.b16 %v1757
      %v1796 = vunpack.c.l.b16 %v1758
      %v1797 = vunpack.c.l.b16 %v1759
      %v1798 = vunpack.c.l.b16 %v1760
      %v1799 = vunpack.c.l.b16 %v1761
      %v1800 = vunpack.c.l.b16 %v1762
      %v1801 = vunpack.c.l.b16 %v1763
      %v1802 = vunpack.c.l.b16 %v1764
      %v1803 = vunpack.c.l.b16 %v1765
      %v1804 = vunpack.c.l.b16 %v1766
      %v1805 = vunpack.c.l.b16 %v1767
      %v1806 = vunpack.c.l.b16 %v1768
      %v1807 = vpack.c.b16 %v1792, %v1791
      %v1808 = vpack.c.b16 %v1794, %v1793
      %v1809 = vpack.c.b16 %v1796, %v1795
      %v1810 = vpack.c.b16 %v1798, %v1797
      %v1811 = vpack.c.b16 %v1800, %v1799
      %v1812 = vpack.c.b16 %v1802, %v1801
      %v1813 = vpack.c.b16 %v1804, %v1803
      %v1814 = vpack.c.b16 %v1806, %v1805
      %1823 = vmatprep.subr.bf16.mxu0 0
      %1824 = vmatpush1.bf16.msra.mxu0 %v1807
      %1825 = vmatprep.subr.bf16.mxu0 0
      %1826 = vmatpush1.bf16.msra.mxu0 %v1808
      %1827 = vmatprep.subr.bf16.mxu0 0
      %1828 = vmatpush1.bf16.msra.mxu0 %v1809
      %1829 = vmatprep.subr.bf16.mxu0 0
      %1830 = vmatpush1.bf16.msra.mxu0 %v1810
      %1831 = vmatprep.subr.bf16.mxu0 0
      %1832 = vmatpush1.bf16.msra.mxu0 %v1811
      %1833 = vmatprep.subr.bf16.mxu0 0
      %1834 = vmatpush1.bf16.msra.mxu0 %v1812
      %1835 = vmatprep.subr.bf16.mxu0 0
      %1836 = vmatpush1.bf16.msra.mxu0 %v1813
      %1837 = vmatprep.subr.bf16.mxu0 0
      %1838 = vmatpush1.bf16.msra.mxu0 %v1814
      %1839 = vmatprep.subr.bf16.mxu0 0
      %1840 = vmatpush1.bf16.msra.mxu0 0
      %1841 = vmatprep.subr.bf16.mxu0 0
      %1842 = vmatpush1.bf16.msra.mxu0 0
      %1843 = vmatprep.subr.bf16.mxu0 0
      %1844 = vmatpush1.bf16.msra.mxu0 0
      %1845 = vmatprep.subr.bf16.mxu0 0
      %1846 = vmatpush1.bf16.msra.mxu0 0
      %1847 = vmatprep.subr.bf16.mxu0 0
      %1848 = vmatpush1.bf16.msra.mxu0 0
      %1849 = vmatprep.subr.bf16.mxu0 0
      %1850 = vmatpush1.bf16.msra.mxu0 0
      %1851 = vmatprep.subr.bf16.mxu0 0
      %1852 = vmatpush1.bf16.msra.mxu0 0
      %1853 = vmatprep.subr.bf16.mxu0 0
      %1854 = vmatpush1.bf16.msra.mxu0 0
      %1855 = vmatprep.mubr.bf16.mxu0 0
      %1856 = vmatmul.mubr.bf16.gmra.mrb[0].mxu0 %v736
      %v1857 = vpop.f32.mrb[0].mxu0
      %v1858 = vadd.f32 0.0, %v1857
      %v1859 = vpop.f32.mrb[0].mxu0
      %v1860 = vpop.f32.mrb[0].mxu0
      %v1861 = vadd.f32 0.0, %v1860
      %v1862 = vpop.f32.mrb[0].mxu0
      %1863 = vmatprep.mubr.bf16.mxu0 0
      %1864 = vmatmul.mubr.bf16.gmra.mrb[0].mxu0 %v737
      %v1865 = vpop.f32.mrb[0].mxu0
      %v1866 = vadd.f32 0.0, %v1865
      %v1867 = vpop.f32.mrb[0].mxu0
      %v1868 = vpop.f32.mrb[0].mxu0
      %v1869 = vadd.f32 0.0, %v1868
      %v1870 = vpop.f32.mrb[0].mxu0
      %1871 = vmatprep.mubr.bf16.mxu0 0
      %1872 = vmatmul.mubr.bf16.gmra.mrb[0].mxu0 %v738
      %v1873 = vpop.f32.mrb[0].mxu0
      %v1874 = vadd.f32 0.0, %v1873
      %v1875 = vpop.f32.mrb[0].mxu0
      %v1876 = vpop.f32.mrb[0].mxu0
      %v1877 = vadd.f32 0.0, %v1876
      %v1878 = vpop.f32.mrb[0].mxu0
      %1879 = vmatprep.mubr.bf16.mxu0 0
      %1880 = vmatmul.mubr.bf16.gmra.mrb[0].mxu0 %v739
      %v1881 = vpop.f32.mrb[0].mxu0
      %v1882 = vadd.f32 0.0, %v1881
      %v1883 = vpop.f32.mrb[0].mxu0
      %v1884 = vpop.f32.mrb[0].mxu0
      %v1885 = vadd.f32 0.0, %v1884
      %v1886 = vpop.f32.mrb[0].mxu0
      %1887 = vmatprep.mubr.bf16.mxu0 0
      %1888 = vmatmul.mubr.bf16.gmra.mrb[0].mxu0 %v740
      %v1889 = vpop.f32.mrb[0].mxu0
      %v1890 = vadd.f32 0.0, %v1889
      %v1891 = vpop.f32.mrb[0].mxu0
      %v1892 = vpop.f32.mrb[0].mxu0
      %v1893 = vadd.f32 0.0, %v1892
      %v1894 = vpop.f32.mrb[0].mxu0
      %1895 = vmatprep.mubr.bf16.mxu0 0
      %1896 = vmatmul.mubr.bf16.gmra.mrb[0].mxu0 %v741
      %v1897 = vpop.f32.mrb[0].mxu0
      %v1898 = vadd.f32 0.0, %v1897
      %v1899 = vpop.f32.mrb[0].mxu0
      %v1900 = vpop.f32.mrb[0].mxu0
      %v1901 = vadd.f32 0.0, %v1900
      %v1902 = vpop.f32.mrb[0].mxu0
      %1903 = vmatprep.mubr.bf16.mxu0 0
      %1904 = vmatmul.mubr.bf16.gmra.mrb[0].mxu0 %v1193
      %v1905 = vpop.f32.mrb[0].mxu0
      %v1906 = vadd.f32 0.0, %v1905
      %v1907 = vpop.f32.mrb[0].mxu0
      %v1908 = vpop.f32.mrb[0].mxu0
      %v1909 = vadd.f32 0.0, %v1908
      %v1910 = vpop.f32.mrb[0].mxu0
      %1911 = vmatprep.mubr.bf16.mxu0 0
      %1912 = vmatmul.mubr.bf16.gmra.mrb[0].mxu0 %v1773
      %v1913 = vpop.f32.mrb[0].mxu0
      %v1914 = vadd.f32 0.0, %v1913
      %v1915 = vpop.f32.mrb[0].mxu0
      %v1916 = vpop.f32.mrb[0].mxu0
      %v1917 = vadd.f32 0.0, %v1916
      %v1918 = vpop.f32.mrb[0].mxu0
      %1919 = vdwg.mxu0
      %v1920 = vadd.f32 %v1736, %v1858
      %v1921 = vadd.f32 %v1737, %v1861
      %v1922 = vadd.f32 %v1738, %v1866
      %v1923 = vadd.f32 %v1739, %v1869
      %v1924 = vadd.f32 %v1740, %v1874
      %v1925 = vadd.f32 %v1741, %v1877
      %v1926 = vadd.f32 %v1742, %v1882
      %v1927 = vadd.f32 %v1743, %v1885
      %v1928 = vadd.f32 %v1744, %v1890
      %v1929 = vadd.f32 %v1745, %v1893
      %v1930 = vadd.f32 %v1746, %v1898
      %v1931 = vadd.f32 %v1747, %v1901
      %v1932 = vadd.f32 %v1748, %v1906
      %v1933 = vadd.f32 %v1749, %v1909
      %v1934 = vadd.f32 %v1750, %v1914
      %v1935 = vadd.f32 %v1751, %v1917
      %v1937 = vshrl.u32 %v294, 16
      %v1939 = vrot.slane %v1937, 4
      %v1940 = vshll.u32 %v294, 16
      %v1942 = vrot.slane %v1940, 5
      %v1943 = vor.u32 %v1939, %v1942
      %v1944 = vrot.slane %v1943, 4
      %v1946 = vshll.u32 %v295, 16
      %v1948 = vrot.slane %v1946, 5
      %v1949 = vsel %vm315, %v1944, %v1948
      %v1950 = vshrl.u32 %v295, 16
      %v1952 = vrot.slane %v1950, 4
      %v1953 = vor.u32 %v1952, %v1948
      %v1954 = vrot.slane %v1953, 4
      %v1956 = vshll.u32 %v296, 16
      %v1958 = vrot.slane %v1956, 5
      %v1959 = vsel %vm315, %v1954, %v1958
      %s1960 = scalar_lea.vmem %s1, 448
      %v1961 = vld [vmem:[%s1960] sm:$0xf]
      %v1962 = vld [vmem:[%s1960 + $0x4] sm:$0xf]
      %v1963 = vld [vmem:[%s1960 + $0x8] sm:$0xf]
      %v1964 = vld [vmem:[%s1960 + $0xc] sm:$0xf]
      %v1965 = vld [vmem:[%s1960 + $0x10] sm:$0xf]
      %v1966 = vld [vmem:[%s1960 + $0x14] sm:$0xf]
      %v1967 = vld [vmem:[%s1960 + $0x18] sm:$0xf]
      %v1968 = vld [vmem:[%s1960 + $0x1c] sm:$0xf]
      %v1969 = vld [vmem:[%s1960 + $0x20] sm:$0xf]
      %v1970 = vld [vmem:[%s1960 + $0x24] sm:$0xf]
      %v1971 = vld [vmem:[%s1960 + $0x28] sm:$0xf]
      %v1972 = vld [vmem:[%s1960 + $0x2c] sm:$0xf]
      %v1973 = vld [vmem:[%s1960 + $0x30] sm:$0xf]
      %v1974 = vld [vmem:[%s1960 + $0x34] sm:$0xf]
      %v1975 = vld [vmem:[%s1960 + $0x38] sm:$0xf]
      %v1976 = vld [vmem:[%s1960 + $0x3c] sm:$0xf]
      %v1977 = vunpack.c.l.b16 %v1949
      %v1978 = vunpack.c.l.b16 %v1959
      %v1979 = vpack.c.b16 %v1978, %v1977
      %v1997 = vunpack.c.l.b16 %v1961
      %v1998 = vunpack.c.l.b16 %v1962
      %v1999 = vunpack.c.l.b16 %v1963
      %v2000 = vunpack.c.l.b16 %v1964
      %v2001 = vunpack.c.l.b16 %v1965
      %v2002 = vunpack.c.l.b16 %v1966
      %v2003 = vunpack.c.l.b16 %v1967
      %v2004 = vunpack.c.l.b16 %v1968
      %v2005 = vunpack.c.l.b16 %v1969
      %v2006 = vunpack.c.l.b16 %v1970
      %v2007 = vunpack.c.l.b16 %v1971
      %v2008 = vunpack.c.l.b16 %v1972
      %v2009 = vunpack.c.l.b16 %v1973
      %v2010 = vunpack.c.l.b16 %v1974
      %v2011 = vunpack.c.l.b16 %v1975
      %v2012 = vunpack.c.l.b16 %v1976
      %v2013 = vpack.c.b16 %v1998, %v1997
      %v2014 = vpack.c.b16 %v2000, %v1999
      %v2015 = vpack.c.b16 %v2002, %v2001
      %v2016 = vpack.c.b16 %v2004, %v2003
      %v2017 = vpack.c.b16 %v2006, %v2005
      %v2018 = vpack.c.b16 %v2008, %v2007
      %v2019 = vpack.c.b16 %v2010, %v2009
      %v2020 = vpack.c.b16 %v2012, %v2011
      %2029 = vmatprep.subr.bf16.mxu0 0
      %2030 = vmatpush1.bf16.msra.mxu0 %v2013
      %2031 = vmatprep.subr.bf16.mxu0 0
      %2032 = vmatpush1.bf16.msra.mxu0 %v2014
      %2033 = vmatprep.subr.bf16.mxu0 0
      %2034 = vmatpush1.bf16.msra.mxu0 %v2015
      %2035 = vmatprep.subr.bf16.mxu0 0
      %2036 = vmatpush1.bf16.msra.mxu0 %v2016
      %2037 = vmatprep.subr.bf16.mxu0 0
      %2038 = vmatpush1.bf16.msra.mxu0 %v2017
      %2039 = vmatprep.subr.bf16.mxu0 0
      %2040 = vmatpush1.bf16.msra.mxu0 %v2018
      %2041 = vmatprep.subr.bf16.mxu0 0
      %2042 = vmatpush1.bf16.msra.mxu0 %v2019
      %2043 = vmatprep.subr.bf16.mxu0 0
      %2044 = vmatpush1.bf16.msra.mxu0 %v2020
      %2045 = vmatprep.subr.bf16.mxu0 0
      %2046 = vmatpush1.bf16.msra.mxu0 0
      %2047 = vmatprep.subr.bf16.mxu0 0
      %2048 = vmatpush1.bf16.msra.mxu0 0
      %2049 = vmatprep.subr.bf16.mxu0 0
      %2050 = vmatpush1.bf16.msra.mxu0 0
      %2051 = vmatprep.subr.bf16.mxu0 0
      %2052 = vmatpush1.bf16.msra.mxu0 0
      %2053 = vmatprep.subr.bf16.mxu0 0
      %2054 = vmatpush1.bf16.msra.mxu0 0
      %2055 = vmatprep.subr.bf16.mxu0 0
      %2056 = vmatpush1.bf16.msra.mxu0 0
      %2057 = vmatprep.subr.bf16.mxu0 0
      %2058 = vmatpush1.bf16.msra.mxu0 0
      %2059 = vmatprep.subr.bf16.mxu0 0
      %2060 = vmatpush1.bf16.msra.mxu0 0
      %2061 = vmatprep.mubr.bf16.mxu0 0
      %2062 = vmatmul.mubr.bf16.gmra.mrb[0].mxu0 %v543
      %v2063 = vpop.f32.mrb[0].mxu0
      %v2064 = vadd.f32 0.0, %v2063
      %v2065 = vpop.f32.mrb[0].mxu0
      %v2066 = vpop.f32.mrb[0].mxu0
      %v2067 = vadd.f32 0.0, %v2066
      %v2068 = vpop.f32.mrb[0].mxu0
      %2069 = vmatprep.mubr.bf16.mxu0 0
      %2070 = vmatmul.mubr.bf16.gmra.mrb[0].mxu0 %v544
      %v2071 = vpop.f32.mrb[0].mxu0
      %v2072 = vadd.f32 0.0, %v2071
      %v2073 = vpop.f32.mrb[0].mxu0
      %v2074 = vpop.f32.mrb[0].mxu0
      %v2075 = vadd.f32 0.0, %v2074
      %v2076 = vpop.f32.mrb[0].mxu0
      %2077 = vmatprep.mubr.bf16.mxu0 0
      %2078 = vmatmul.mubr.bf16.gmra.mrb[0].mxu0 %v545
      %v2079 = vpop.f32.mrb[0].mxu0
      %v2080 = vadd.f32 0.0, %v2079
      %v2081 = vpop.f32.mrb[0].mxu0
      %v2082 = vpop.f32.mrb[0].mxu0
      %v2083 = vadd.f32 0.0, %v2082
      %v2084 = vpop.f32.mrb[0].mxu0
      %2085 = vmatprep.mubr.bf16.mxu0 0
      %2086 = vmatmul.mubr.bf16.gmra.mrb[0].mxu0 %v546
      %v2087 = vpop.f32.mrb[0].mxu0
      %v2088 = vadd.f32 0.0, %v2087
      %v2089 = vpop.f32.mrb[0].mxu0
      %v2090 = vpop.f32.mrb[0].mxu0
      %v2091 = vadd.f32 0.0, %v2090
      %v2092 = vpop.f32.mrb[0].mxu0
      %2093 = vmatprep.mubr.bf16.mxu0 0
      %2094 = vmatmul.mubr.bf16.gmra.mrb[0].mxu0 %v547
      %v2095 = vpop.f32.mrb[0].mxu0
      %v2096 = vadd.f32 0.0, %v2095
      %v2097 = vpop.f32.mrb[0].mxu0
      %v2098 = vpop.f32.mrb[0].mxu0
      %v2099 = vadd.f32 0.0, %v2098
      %v2100 = vpop.f32.mrb[0].mxu0
      %2101 = vmatprep.mubr.bf16.mxu0 0
      %2102 = vmatmul.mubr.bf16.gmra.mrb[0].mxu0 %v548
      %v2103 = vpop.f32.mrb[0].mxu0
      %v2104 = vadd.f32 0.0, %v2103
      %v2105 = vpop.f32.mrb[0].mxu0
      %v2106 = vpop.f32.mrb[0].mxu0
      %v2107 = vadd.f32 0.0, %v2106
      %v2108 = vpop.f32.mrb[0].mxu0
      %2109 = vmatprep.mubr.bf16.mxu0 0
      %2110 = vmatmul.mubr.bf16.gmra.mrb[0].mxu0 %v1399
      %v2111 = vpop.f32.mrb[0].mxu0
      %v2112 = vadd.f32 0.0, %v2111
      %v2113 = vpop.f32.mrb[0].mxu0
      %v2114 = vpop.f32.mrb[0].mxu0
      %v2115 = vadd.f32 0.0, %v2114
      %v2116 = vpop.f32.mrb[0].mxu0
      %2117 = vmatprep.mubr.bf16.mxu0 0
      %2118 = vmatmul.mubr.bf16.gmra.mrb[0].mxu0 %v1979
      %v2119 = vpop.f32.mrb[0].mxu0
      %v2120 = vadd.f32 0.0, %v2119
      %v2121 = vpop.f32.mrb[0].mxu0
      %v2122 = vpop.f32.mrb[0].mxu0
      %v2123 = vadd.f32 0.0, %v2122
      %v2124 = vpop.f32.mrb[0].mxu0
      %2125 = vdwg.mxu0
      %v2126 = vadd.f32 %v1920, %v2064
      %v2127 = vadd.f32 %v1921, %v2067
      %v2128 = vadd.f32 %v1922, %v2072
      %v2129 = vadd.f32 %v1923, %v2075
      %v2130 = vadd.f32 %v1924, %v2080
      %v2131 = vadd.f32 %v1925, %v2083
      %v2132 = vadd.f32 %v1926, %v2088
      %v2133 = vadd.f32 %v1927, %v2091
      %v2134 = vadd.f32 %v1928, %v2096
      %v2135 = vadd.f32 %v1929, %v2099
      %v2136 = vadd.f32 %v1930, %v2104
      %v2137 = vadd.f32 %v1931, %v2107
      %v2138 = vadd.f32 %v1932, %v2112
      %v2139 = vadd.f32 %v1933, %v2115
      %v2140 = vadd.f32 %v1934, %v2120
      %v2141 = vadd.f32 %v1935, %v2123
      %v2143 = vrot.slane %v294, 5
      %v2144 = vrot.slane %v2143, 4
      %v2145 = vrot.slane %v295, 5
      %v2146 = vsel %vm905, %v2144, %v2145
      %v2147 = vrot.slane %v2145, 4
      %v2148 = vrot.slane %v296, 5
      %v2149 = vsel %vm905, %v2147, %v2148
      %s2150 = scalar_lea.vmem %s1, 512
      %v2151 = vld [vmem:[%s2150] sm:$0xf]
      %v2152 = vld [vmem:[%s2150 + $0x4] sm:$0xf]
      %v2153 = vld [vmem:[%s2150 + $0x8] sm:$0xf]
      %v2154 = vld [vmem:[%s2150 + $0xc] sm:$0xf]
      %v2155 = vld [vmem:[%s2150 + $0x10] sm:$0xf]
      %v2156 = vld [vmem:[%s2150 + $0x14] sm:$0xf]
      %v2157 = vld [vmem:[%s2150 + $0x18] sm:$0xf]
      %v2158 = vld [vmem:[%s2150 + $0x1c] sm:$0xf]
      %v2159 = vld [vmem:[%s2150 + $0x20] sm:$0xf]
      %v2160 = vld [vmem:[%s2150 + $0x24] sm:$0xf]
      %v2161 = vld [vmem:[%s2150 + $0x28] sm:$0xf]
      %v2162 = vld [vmem:[%s2150 + $0x2c] sm:$0xf]
      %v2163 = vld [vmem:[%s2150 + $0x30] sm:$0xf]
      %v2164 = vld [vmem:[%s2150 + $0x34] sm:$0xf]
      %v2165 = vld [vmem:[%s2150 + $0x38] sm:$0xf]
      %v2166 = vld [vmem:[%s2150 + $0x3c] sm:$0xf]
      %v2167 = vunpack.c.l.b16 %v2146
      %v2168 = vunpack.c.l.b16 %v2149
      %v2169 = vpack.c.b16 %v2168, %v2167
      %v2187 = vunpack.c.l.b16 %v2151
      %v2188 = vunpack.c.l.b16 %v2152
      %v2189 = vunpack.c.l.b16 %v2153
      %v2190 = vunpack.c.l.b16 %v2154
      %v2191 = vunpack.c.l.b16 %v2155
      %v2192 = vunpack.c.l.b16 %v2156
      %v2193 = vunpack.c.l.b16 %v2157
      %v2194 = vunpack.c.l.b16 %v2158
      %v2195 = vunpack.c.l.b16 %v2159
      %v2196 = vunpack.c.l.b16 %v2160
      %v2197 = vunpack.c.l.b16 %v2161
      %v2198 = vunpack.c.l.b16 %v2162
      %v2199 = vunpack.c.l.b16 %v2163
      %v2200 = vunpack.c.l.b16 %v2164
      %v2201 = vunpack.c.l.b16 %v2165
      %v2202 = vunpack.c.l.b16 %v2166
      %v2203 = vpack.c.b16 %v2188, %v2187
      %v2204 = vpack.c.b16 %v2190, %v2189
      %v2205 = vpack.c.b16 %v2192, %v2191
      %v2206 = vpack.c.b16 %v2194, %v2193
      %v2207 = vpack.c.b16 %v2196, %v2195
      %v2208 = vpack.c.b16 %v2198, %v2197
      %v2209 = vpack.c.b16 %v2200, %v2199
      %v2210 = vpack.c.b16 %v2202, %v2201
      %2219 = vmatprep.subr.bf16.mxu0 0
      %2220 = vmatpush1.bf16.msra.mxu0 %v2203
      %2221 = vmatprep.subr.bf16.mxu0 0
      %2222 = vmatpush1.bf16.msra.mxu0 %v2204
      %2223 = vmatprep.subr.bf16.mxu0 0
      %2224 = vmatpush1.bf16.msra.mxu0 %v2205
      %2225 = vmatprep.subr.bf16.mxu0 0
      %2226 = vmatpush1.bf16.msra.mxu0 %v2206
      %2227 = vmatprep.subr.bf16.mxu0 0
      %2228 = vmatpush1.bf16.msra.mxu0 %v2207
      %2229 = vmatprep.subr.bf16.mxu0 0
      %2230 = vmatpush1.bf16.msra.mxu0 %v2208
      %2231 = vmatprep.subr.bf16.mxu0 0
      %2232 = vmatpush1.bf16.msra.mxu0 %v2209
      %2233 = vmatprep.subr.bf16.mxu0 0
      %2234 = vmatpush1.bf16.msra.mxu0 %v2210
      %2235 = vmatprep.subr.bf16.mxu0 0
      %2236 = vmatpush1.bf16.msra.mxu0 0
      %2237 = vmatprep.subr.bf16.mxu0 0
      %2238 = vmatpush1.bf16.msra.mxu0 0
      %2239 = vmatprep.subr.bf16.mxu0 0
      %2240 = vmatpush1.bf16.msra.mxu0 0
      %2241 = vmatprep.subr.bf16.mxu0 0
      %2242 = vmatpush1.bf16.msra.mxu0 0
      %2243 = vmatprep.subr.bf16.mxu0 0
      %2244 = vmatpush1.bf16.msra.mxu0 0
      %2245 = vmatprep.subr.bf16.mxu0 0
      %2246 = vmatpush1.bf16.msra.mxu0 0
      %2247 = vmatprep.subr.bf16.mxu0 0
      %2248 = vmatpush1.bf16.msra.mxu0 0
      %2249 = vmatprep.subr.bf16.mxu0 0
      %2250 = vmatpush1.bf16.msra.mxu0 0
      %2251 = vmatprep.mubr.bf16.mxu0 0
      %2252 = vmatmul.mubr.bf16.gmra.mrb[0].mxu0 %v997
      %v2253 = vpop.f32.mrb[0].mxu0
      %v2254 = vadd.f32 0.0, %v2253
      %v2255 = vpop.f32.mrb[0].mxu0
      %v2256 = vpop.f32.mrb[0].mxu0
      %v2257 = vadd.f32 0.0, %v2256
      %v2258 = vpop.f32.mrb[0].mxu0
      %2259 = vmatprep.mubr.bf16.mxu0 0
      %2260 = vmatmul.mubr.bf16.gmra.mrb[0].mxu0 %v998
      %v2261 = vpop.f32.mrb[0].mxu0
      %v2262 = vadd.f32 0.0, %v2261
      %v2263 = vpop.f32.mrb[0].mxu0
      %v2264 = vpop.f32.mrb[0].mxu0
      %v2265 = vadd.f32 0.0, %v2264
      %v2266 = vpop.f32.mrb[0].mxu0
      %2267 = vmatprep.mubr.bf16.mxu0 0
      %2268 = vmatmul.mubr.bf16.gmra.mrb[0].mxu0 %v999
      %v2269 = vpop.f32.mrb[0].mxu0
      %v2270 = vadd.f32 0.0, %v2269
      %v2271 = vpop.f32.mrb[0].mxu0
      %v2272 = vpop.f32.mrb[0].mxu0
      %v2273 = vadd.f32 0.0, %v2272
      %v2274 = vpop.f32.mrb[0].mxu0
      %2275 = vmatprep.mubr.bf16.mxu0 0
      %2276 = vmatmul.mubr.bf16.gmra.mrb[0].mxu0 %v1000
      %v2277 = vpop.f32.mrb[0].mxu0
      %v2278 = vadd.f32 0.0, %v2277
      %v2279 = vpop.f32.mrb[0].mxu0
      %v2280 = vpop.f32.mrb[0].mxu0
      %v2281 = vadd.f32 0.0, %v2280
      %v2282 = vpop.f32.mrb[0].mxu0
      %2283 = vmatprep.mubr.bf16.mxu0 0
      %2284 = vmatmul.mubr.bf16.gmra.mrb[0].mxu0 %v1001
      %v2285 = vpop.f32.mrb[0].mxu0
      %v2286 = vadd.f32 0.0, %v2285
      %v2287 = vpop.f32.mrb[0].mxu0
      %v2288 = vpop.f32.mrb[0].mxu0
      %v2289 = vadd.f32 0.0, %v2288
      %v2290 = vpop.f32.mrb[0].mxu0
      %2291 = vmatprep.mubr.bf16.mxu0 0
      %2292 = vmatmul.mubr.bf16.gmra.mrb[0].mxu0 %v1002
      %v2293 = vpop.f32.mrb[0].mxu0
      %v2294 = vadd.f32 0.0, %v2293
      %v2295 = vpop.f32.mrb[0].mxu0
      %v2296 = vpop.f32.mrb[0].mxu0
      %v2297 = vadd.f32 0.0, %v2296
      %v2298 = vpop.f32.mrb[0].mxu0
      %2299 = vmatprep.mubr.bf16.mxu0 0
      %2300 = vmatmul.mubr.bf16.gmra.mrb[0].mxu0 %v1589
      %v2301 = vpop.f32.mrb[0].mxu0
      %v2302 = vadd.f32 0.0, %v2301
      %v2303 = vpop.f32.mrb[0].mxu0
      %v2304 = vpop.f32.mrb[0].mxu0
      %v2305 = vadd.f32 0.0, %v2304
      %v2306 = vpop.f32.mrb[0].mxu0
      %2307 = vmatprep.mubr.bf16.mxu0 0
      %2308 = vmatmul.mubr.bf16.gmra.mrb[0].mxu0 %v2169
      %v2309 = vpop.f32.mrb[0].mxu0
      %v2310 = vadd.f32 0.0, %v2309
      %v2311 = vpop.f32.mrb[0].mxu0
      %v2312 = vpop.f32.mrb[0].mxu0
      %v2313 = vadd.f32 0.0, %v2312
      %v2314 = vpop.f32.mrb[0].mxu0
      %2315 = vdwg.mxu0
      %v2316 = vadd.f32 %v2126, %v2254
      %v2317 = vadd.f32 %v2127, %v2257
      %v2318 = vadd.f32 %v2128, %v2262
      %v2319 = vadd.f32 %v2129, %v2265
      %v2320 = vadd.f32 %v2130, %v2270
      %v2321 = vadd.f32 %v2131, %v2273
      %v2322 = vadd.f32 %v2132, %v2278
      %v2323 = vadd.f32 %v2133, %v2281
      %v2324 = vadd.f32 %v2134, %v2286
      %v2325 = vadd.f32 %v2135, %v2289
      %v2326 = vadd.f32 %v2136, %v2294
      %v2327 = vadd.f32 %v2137, %v2297
      %v2328 = vadd.f32 %v2138, %v2302
      %v2329 = vadd.f32 %v2139, %v2305
      %v2330 = vadd.f32 %v2140, %v2310
      %v2331 = vadd.f32 %v2141, %v2313
      %v2332 = vld [vmem:[%s2] sm:$0x1]
      %v2334 = vlaneseq
      %v2335 = vshrl.u32 %v2334, 7
      %v2336 = vsub.s32 0, %v2335
      %v2337 = vrot.slane %v2332, %v2336
      %v2339 = vadd.f32 %v2316, %v2337
      %v2340 = vadd.f32 %v2317, %v2337
      %v2341 = vadd.f32 %v2318, %v2337
      %v2342 = vadd.f32 %v2319, %v2337
      %v2343 = vadd.f32 %v2320, %v2337
      %v2344 = vadd.f32 %v2321, %v2337
      %v2345 = vadd.f32 %v2322, %v2337
      %v2346 = vadd.f32 %v2323, %v2337
      %v2347 = vadd.f32 %v2324, %v2337
      %v2348 = vadd.f32 %v2325, %v2337
      %v2349 = vadd.f32 %v2326, %v2337
      %v2350 = vadd.f32 %v2327, %v2337
      %v2351 = vadd.f32 %v2328, %v2337
      %v2352 = vadd.f32 %v2329, %v2337
      %v2353 = vadd.f32 %v2330, %v2337
      %v2354 = vadd.f32 %v2331, %v2337
      %v2355 = vxor.u32 %v2339, 2147483648
      %v2356 = vxor.u32 %v2340, 2147483648
      %v2357 = vxor.u32 %v2341, 2147483648
      %v2358 = vxor.u32 %v2342, 2147483648
      %v2359 = vxor.u32 %v2343, 2147483648
      %v2360 = vxor.u32 %v2344, 2147483648
      %v2361 = vxor.u32 %v2345, 2147483648
      %v2362 = vxor.u32 %v2346, 2147483648
      %v2363 = vxor.u32 %v2347, 2147483648
      %v2364 = vxor.u32 %v2348, 2147483648
      %v2365 = vxor.u32 %v2349, 2147483648
      %v2366 = vxor.u32 %v2350, 2147483648
      %v2367 = vxor.u32 %v2351, 2147483648
      %v2368 = vxor.u32 %v2352, 2147483648
      %v2369 = vxor.u32 %v2353, 2147483648
      %v2370 = vxor.u32 %v2354, 2147483648
      %v2371 = vmul.f32 %v2355, 1.442695
      %v2372 = vpow.pop %v2371
      %v2373 = vmul.f32 %v2356, 1.442695
      %v2374 = vpow.pop %v2373
      %v2375 = vmul.f32 %v2357, 1.442695
      %v2376 = vpow.pop %v2375
      %v2377 = vmul.f32 %v2358, 1.442695
      %v2378 = vpow.pop %v2377
      %v2379 = vmul.f32 %v2359, 1.442695
      %v2380 = vpow.pop %v2379
      %v2381 = vmul.f32 %v2360, 1.442695
      %v2382 = vpow.pop %v2381
      %v2383 = vmul.f32 %v2361, 1.442695
      %v2384 = vpow.pop %v2383
      %v2385 = vmul.f32 %v2362, 1.442695
      %v2386 = vpow.pop %v2385
      %v2387 = vmul.f32 %v2363, 1.442695
      %v2388 = vpow.pop %v2387
      %v2389 = vmul.f32 %v2364, 1.442695
      %v2390 = vpow.pop %v2389
      %v2391 = vmul.f32 %v2365, 1.442695
      %v2392 = vpow.pop %v2391
      %v2393 = vmul.f32 %v2366, 1.442695
      %v2394 = vpow.pop %v2393
      %v2395 = vmul.f32 %v2367, 1.442695
      %v2396 = vpow.pop %v2395
      %v2397 = vmul.f32 %v2368, 1.442695
      %v2398 = vpow.pop %v2397
      %v2399 = vmul.f32 %v2369, 1.442695
      %v2400 = vpow.pop %v2399
      %v2401 = vmul.f32 %v2370, 1.442695
      %v2402 = vpow.pop %v2401
      %v2403 = vadd.f32 %v2372, 1.0
      %v2404 = vadd.f32 %v2374, 1.0
      %v2405 = vadd.f32 %v2376, 1.0
      %v2406 = vadd.f32 %v2378, 1.0
      %v2407 = vadd.f32 %v2380, 1.0
      %v2408 = vadd.f32 %v2382, 1.0
      %v2409 = vadd.f32 %v2384, 1.0
      %v2410 = vadd.f32 %v2386, 1.0
      %v2411 = vadd.f32 %v2388, 1.0
      %v2412 = vadd.f32 %v2390, 1.0
      %v2413 = vadd.f32 %v2392, 1.0
      %v2414 = vadd.f32 %v2394, 1.0
      %v2415 = vadd.f32 %v2396, 1.0
      %v2416 = vadd.f32 %v2398, 1.0
      %v2417 = vadd.f32 %v2400, 1.0
      %v2418 = vadd.f32 %v2402, 1.0
      %v2419 = vrcp.pop %v2403
      %v2420 = vmul.f32 1.0, %v2419
      %v2421 = vrcp.pop %v2404
      %v2422 = vmul.f32 1.0, %v2421
      %v2423 = vrcp.pop %v2405
      %v2424 = vmul.f32 1.0, %v2423
      %v2425 = vrcp.pop %v2406
      %v2426 = vmul.f32 1.0, %v2425
      %v2427 = vrcp.pop %v2407
      %v2428 = vmul.f32 1.0, %v2427
      %v2429 = vrcp.pop %v2408
      %v2430 = vmul.f32 1.0, %v2429
      %v2431 = vrcp.pop %v2409
      %v2432 = vmul.f32 1.0, %v2431
      %v2433 = vrcp.pop %v2410
      %v2434 = vmul.f32 1.0, %v2433
      %v2435 = vrcp.pop %v2411
      %v2436 = vmul.f32 1.0, %v2435
      %v2437 = vrcp.pop %v2412
      %v2438 = vmul.f32 1.0, %v2437
      %v2439 = vrcp.pop %v2413
      %v2440 = vmul.f32 1.0, %v2439
      %v2441 = vrcp.pop %v2414
      %v2442 = vmul.f32 1.0, %v2441
      %v2443 = vrcp.pop %v2415
      %v2444 = vmul.f32 1.0, %v2443
      %v2445 = vrcp.pop %v2416
      %v2446 = vmul.f32 1.0, %v2445
      %v2447 = vrcp.pop %v2417
      %v2448 = vmul.f32 1.0, %v2447
      %v2449 = vrcp.pop %v2418
      %v2450 = vmul.f32 1.0, %v2449
      %v2451 = vmul.f32 %v2339, %v2420
      %v2452 = vmul.f32 %v2340, %v2422
      %v2453 = vmul.f32 %v2341, %v2424
      %v2454 = vmul.f32 %v2342, %v2426
      %v2455 = vmul.f32 %v2343, %v2428
      %v2456 = vmul.f32 %v2344, %v2430
      %v2457 = vmul.f32 %v2345, %v2432
      %v2458 = vmul.f32 %v2346, %v2434
      %v2459 = vmul.f32 %v2347, %v2436
      %v2460 = vmul.f32 %v2348, %v2438
      %v2461 = vmul.f32 %v2349, %v2440
      %v2462 = vmul.f32 %v2350, %v2442
      %v2463 = vmul.f32 %v2351, %v2444
      %v2464 = vmul.f32 %v2352, %v2446
      %v2465 = vmul.f32 %v2353, %v2448
      %v2466 = vmul.f32 %v2354, %v2450
      %v2467 = vld [vmem:[%s249] sm:$0xff]
      %v2468 = vld [vmem:[%s249 + $0x8] sm:$0xff]
      %v2469 = vld [vmem:[%s249 + $0x10] sm:$0xff]
      %v2470 = vld [vmem:[%s249 + $0x18] sm:$0xff]
      %v2471 = vld [vmem:[%s249 + $0x20] sm:$0xff]
      %v2472 = vld [vmem:[%s249 + $0x28] sm:$0xff]
      %v2473 = vld [vmem:[%s249 + $0x30] sm:$0xff]
      %v2474 = vld [vmem:[%s249 + $0x38] sm:$0xff]
      %v2475 = vld [vmem:[%s249 + $0x40] sm:$0xff]
      %v2476 = vld [vmem:[%s249 + $0x48] sm:$0xff]
      %v2477 = vld [vmem:[%s249 + $0x50] sm:$0xff]
      %v2478 = vld [vmem:[%s249 + $0x58] sm:$0xff]
      %v2479 = vld [vmem:[%s249 + $0x60] sm:$0xff]
      %v2480 = vld [vmem:[%s249 + $0x68] sm:$0xff]
      %v2481 = vld [vmem:[%s249 + $0x70] sm:$0xff]
      %v2482 = vld [vmem:[%s249 + $0x78] sm:$0xff]
      %v2483 = vadd.f32 %v2451, %v2467
      %v2484 = vadd.f32 %v2452, %v2468
      %v2485 = vadd.f32 %v2453, %v2469
      %v2486 = vadd.f32 %v2454, %v2470
      %v2487 = vadd.f32 %v2455, %v2471
      %v2488 = vadd.f32 %v2456, %v2472
      %v2489 = vadd.f32 %v2457, %v2473
      %v2490 = vadd.f32 %v2458, %v2474
      %v2491 = vadd.f32 %v2459, %v2475
      %v2492 = vadd.f32 %v2460, %v2476
      %v2493 = vadd.f32 %v2461, %v2477
      %v2494 = vadd.f32 %v2462, %v2478
      %v2495 = vadd.f32 %v2463, %v2479
      %v2496 = vadd.f32 %v2464, %v2480
      %v2497 = vadd.f32 %v2465, %v2481
      %v2498 = vadd.f32 %v2466, %v2482
      %2499 = vst [vmem:[%s260] sm:$0xff] %v2483
      %2500 = vst [vmem:[%s260 + $0x8] sm:$0xff] %v2484
      %2501 = vst [vmem:[%s260 + $0x10] sm:$0xff] %v2485
      %2502 = vst [vmem:[%s260 + $0x18] sm:$0xff] %v2486
      %2503 = vst [vmem:[%s260 + $0x20] sm:$0xff] %v2487
      %2504 = vst [vmem:[%s260 + $0x28] sm:$0xff] %v2488
      %2505 = vst [vmem:[%s260 + $0x30] sm:$0xff] %v2489
      %2506 = vst [vmem:[%s260 + $0x38] sm:$0xff] %v2490
      %2507 = vst [vmem:[%s260 + $0x40] sm:$0xff] %v2491
      %2508 = vst [vmem:[%s260 + $0x48] sm:$0xff] %v2492
      %2509 = vst [vmem:[%s260 + $0x50] sm:$0xff] %v2493
      %2510 = vst [vmem:[%s260 + $0x58] sm:$0xff] %v2494
      %2511 = vst [vmem:[%s260 + $0x60] sm:$0xff] %v2495
      %2512 = vst [vmem:[%s260 + $0x68] sm:$0xff] %v2496
      %2513 = vst [vmem:[%s260 + $0x70] sm:$0xff] %v2497
      %2514 = vst [vmem:[%s260 + $0x78] sm:$0xff] %v2498
      %s2515 = smul.u32 8, %s20
      %p2516 = scmp.lt.s32.totalorder %s19, 1
      %s2517 = scalar_select %p2516, %s19, 1
      %p2518 = scmp.lt.s32.totalorder %s2515, 15
      %s2519 = scalar_select %p2518, %s2515, 15
      %s2520 = smul.addr %s2519, 2
      %s2521 = smul.addr %s2517, 32
      %s2522 = sadd.s32 %s2520, %s2521
      %s2523 = smul.addr %s2522, 8
      %s2524 = scalar_lea.vmem %s4, %s2523
      // Predicated region
      $region37: #{sbottleneck_forward.3} parent=35 // pred_check
        %p2525 = pneg %p143
      $region38: #{sbottleneck_forward.3} parent=35 // pred_check_branch
        %2527 = sbr.rel (%p2525) target = $region40
      $region39: #{sbottleneck_forward.3} parent=35 // pred_region
        %s2528 = smul.u32 8, %s20
      $region40: #{sbottleneck_forward.3} parent=35 // pred_fallthru
        _
    $region36: #{sbottleneck_forward.3} parent=5 // pred_fallthru
      _
    %p2529 = scmp.le.s32.totalorder 2, %s10
    // Predicated region
    $region41: #{sbottleneck_forward.3} parent=5 // pred_check
      %p2530 = pneg %p2529
    $region42: #{sbottleneck_forward.3} parent=5 // pred_check_branch
      %2532 = sbr.rel (%p2530) target = $region44
    $region43: #{sbottleneck_forward.3} parent=5 // pred_region
      %s2533 = ssub.s32 %s10, 2
      // Predicated region
      $region45: #{sbottleneck_forward.3} parent=43 // pred_check
        %p2534 = pneg %p149
      $region46: #{sbottleneck_forward.3} parent=43 // pred_check_branch
        %2536 = sbr.rel (%p2534) target = $region48
      $region47: #{sbottleneck_forward.3} parent=43 // pred_region
        %s2537 = smul.u32 8, %s22
        %p2538 = scmp.lt.s32.totalorder %s21, 1
        %s2539 = scalar_select %p2538, %s21, 1
        %p2540 = scmp.lt.s32.totalorder %s2537, 15
        %s2541 = scalar_select %p2540, %s2537, 15
        %s2542 = smul.addr %s2541, 2
        %s2543 = smul.addr %s2539, 32
        %s2544 = sadd.s32 %s2542, %s2543
        %s2545 = smul.addr %s2544, 8
        %s2546 = scalar_lea.vmem %s4, %s2545
      $region48: #{sbottleneck_forward.3} parent=43 // pred_fallthru
        _
    $region44: #{sbottleneck_forward.3} parent=5 // pred_fallthru
      _
  $region6: #{sbottleneck_forward.3} parent=0 // loop_footer
    %s14 = sadd.s32 1, %s10
  $region7: #{sbottleneck_forward.3} parent=0 // loop_footer_branch
    %9 = sbr.rel target = $region3
  $region8: #{sbottleneck_forward.3} parent=0 // loop_exit
    _

// kernel: sbottleneck_forward.2
$region0: #{sbottleneck_forward.2}
  #allocation0 [shape = 'u32[]', space=smem, size = 0x4, offset = 0x4, fixed_abs, tag = 'smem constant byte address 0x4 - core index']
  #allocation1 [shape = 'u32[144,128]{1,0:T(1,128)}', space=vmem, size = 0x12000, scoped, tag = 'internal scratch']
  %s0 = inlined_call_operand.vmem [shape: bf16[2,18,18,128], index: 0, kind: input, shape index: {}]
  %s1 = inlined_call_operand.vmem [shape: bf16[9,128,128], index: 1, kind: input, shape index: {}]
  %s2 = inlined_call_operand.vmem [shape: f32[1,128], index: 2, kind: input, shape index: {}]
  %s3 = inlined_call_operand.vmem [shape: bf16[2,16,16,128], index: 3, kind: output, shape index: {}]
  %s4 = sld [smem:[#allocation0]]
  $region45: #{sbottleneck_forward.2} parent=0
    _
  %s6 = ssub.s32 1, %s4
  %s7 = scalar_select 0, %s6, %s4
  loop: start=0, step=1, limit=6
  $region2: #{sbottleneck_forward.2} parent=0 // loop_pre_header
    _
  $region3: #{sbottleneck_forward.2} parent=0 // loop_header
    %s9 = sphi 0, %s13
    %p10 = scmp.ge.s32.totalorder %s9, 6
    %s16 = sphi 0, %s28
    %s17 = sphi 0, %s24
    %s18 = sphi 0, %s16
    %s19 = sphi 0, %s17
    %s20 = sphi 0, %s18
    %s21 = sphi 0, %s19
    %s31 = sphi 0, %s33
    %s34 = sphi 0, %s31
    %s35 = sphi 0, %s34
    %s51 = sphi 0, %s35
    %s55 = sphi 0, %s55
    %s57 = sphi 0, %s55
    %s58 = sphi 0, %s57
    %s72 = sphi 0, %s58
    %s76 = sphi 0, %s76
    %s78 = sphi 0, %s76
    %s79 = sphi 0, %s78
    %s93 = sphi 0, %s79
    %s101 = sphi 0, %s103
    %s104 = sphi 0, %s101
    %s105 = sphi 0, %s104
    %s121 = sphi 0, %s105
  $region4: #{sbottleneck_forward.2} parent=0 // loop_header_branch
    %12 = sbr.rel (%p10) target = $region8
  $region5: #{sbottleneck_forward.2} parent=0 // loop_body
    %s14 = ssub.s32 %s9, 1
    %s15 = ssub.s32 %s9, 2
    %s22 = sadd.s32 1, %s17
    %p23 = scmp.ge.s32.totalorder %s22, 2
    %s24 = scalar_select %p23, 0, %s22
    %s25 = sadd.s32 1, %s16
    %s26 = scalar_select %p23, %s25, %s16
    %p27 = scmp.ge.s32.totalorder %s26, 2
    %s28 = scalar_select %p27, 0, %s26
    %s29 = ssub.s32 %s16, %s28
    %p30 = scmp.eq.s32.totalorder %s29, 0
    %s32 = sadd.s32 %s31, 1
    %s33 = scalar_select %p30, %s31, %s32
    %p36 = pneg %p30
    %p37 = scmp.eq.s32.totalorder %s9, 3
    %p38 = por %p36, %p37
    %p39 = scmp.ne.s32.totalorder %s31, %s34
    %p40 = scmp.eq.s32.totalorder %s9, 0
    %p41 = por %p39, %p40
    %p42 = scmp.ne.s32.totalorder %s31, %s34
    %p43 = scmp.eq.s32.totalorder %s14, 3
    %p44 = por %p42, %p43
    %p45 = scmp.ne.s32.totalorder %s34, %s35
    %p46 = scmp.eq.s32.totalorder %s14, 0
    %p47 = por %p45, %p46
    %p48 = scmp.ne.s32.totalorder %s34, %s35
    %p49 = scmp.eq.s32.totalorder %s15, 3
    %p50 = por %p48, %p49
    %p52 = scmp.ne.s32.totalorder %s35, %s51
    %p53 = scmp.eq.s32.totalorder %s15, 0
    %p54 = por %p52, %p53
    %s56 = sadd.s32 %s55, 1
    %p59 = scmp.eq.s32.totalorder %s9, 3
    %p60 = scmp.ne.s32.totalorder %s55, %s57
    %p61 = scmp.eq.s32.totalorder %s9, 0
    %p62 = por %p60, %p61
    %p63 = scmp.ne.s32.totalorder %s55, %s57
    %p64 = scmp.eq.s32.totalorder %s14, 3
    %p65 = por %p63, %p64
    %p66 = scmp.ne.s32.totalorder %s57, %s58
    %p67 = scmp.eq.s32.totalorder %s14, 0
    %p68 = por %p66, %p67
    %p69 = scmp.ne.s32.totalorder %s57, %s58
    %p70 = scmp.eq.s32.totalorder %s15, 3
    %p71 = por %p69, %p70
    %p73 = scmp.ne.s32.totalorder %s58, %s72
    %p74 = scmp.eq.s32.totalorder %s15, 0
    %p75 = por %p73, %p74
    %s77 = sadd.s32 %s76, 1
    %p80 = scmp.eq.s32.totalorder %s9, 3
    %p81 = scmp.ne.s32.totalorder %s76, %s78
    %p82 = scmp.eq.s32.totalorder %s9, 0
    %p83 = por %p81, %p82
    %p84 = scmp.ne.s32.totalorder %s76, %s78
    %p85 = scmp.eq.s32.totalorder %s14, 3
    %p86 = por %p84, %p85
    %p87 = scmp.ne.s32.totalorder %s78, %s79
    %p88 = scmp.eq.s32.totalorder %s14, 0
    %p89 = por %p87, %p88
    %p90 = scmp.ne.s32.totalorder %s78, %s79
    %p91 = scmp.eq.s32.totalorder %s15, 3
    %p92 = por %p90, %p91
    %p94 = scmp.ne.s32.totalorder %s79, %s93
    %p95 = scmp.eq.s32.totalorder %s15, 0
    %p96 = por %p94, %p95
    %s97 = ssub.s32 %s16, %s28
    %s98 = ssub.s32 %s17, %s24
    %s99 = sor.u32 %s97, %s98
    %p100 = scmp.eq.s32.totalorder %s99, 0
    %s102 = sadd.s32 %s101, 1
    %s103 = scalar_select %p100, %s101, %s102
    %p106 = pneg %p100
    %p107 = scmp.eq.s32.totalorder %s9, 3
    %p108 = por %p106, %p107
    %p109 = scmp.ne.s32.totalorder %s101, %s104
    %p110 = scmp.eq.s32.totalorder %s9, 0
    %p111 = por %p109, %p110
    %p112 = scmp.ne.s32.totalorder %s101, %s104
    %p113 = scmp.eq.s32.totalorder %s14, 3
    %p114 = por %p112, %p113
    %p115 = scmp.ne.s32.totalorder %s104, %s105
    %p116 = scmp.eq.s32.totalorder %s14, 0
    %p117 = por %p115, %p116
    %p118 = scmp.ne.s32.totalorder %s104, %s105
    %p119 = scmp.eq.s32.totalorder %s15, 3
    %p120 = por %p118, %p119
    %p122 = scmp.ne.s32.totalorder %s105, %s121
    %p123 = scmp.eq.s32.totalorder %s15, 0
    %p124 = por %p122, %p123
    %p125 = scmp.le.s32.totalorder 1, %s9
    %p126 = scmp.lt.s32.totalorder %s9, 5
    %p127 = pnand %p125, %p126
    %p128 = pneg %p127
    // Predicated region
    $region9: #{sbottleneck_forward.2} parent=5 // pred_check
      _
    $region10: #{sbottleneck_forward.2} parent=5 // pred_check_branch
      %130 = sbr.rel (%p127) target = $region12
    $region11: #{sbottleneck_forward.2} parent=5 // pred_region
      %s131 = ssub.s32 %s9, 1
      // Predicated region
      $region13: #{sbottleneck_forward.2} parent=11 // pred_check
        %p132 = pneg %p68
      $region14: #{sbottleneck_forward.2} parent=11 // pred_check_branch
        %134 = sbr.rel (%p132) target = $region16
      $region15: #{sbottleneck_forward.2} parent=11 // pred_region
        _
      $region16: #{sbottleneck_forward.2} parent=11 // pred_fallthru
        _
      // Predicated region
      $region17: #{sbottleneck_forward.2} parent=11 // pred_check
        %p135 = pneg %p89
      $region18: #{sbottleneck_forward.2} parent=11 // pred_check_branch
        %137 = sbr.rel (%p135) target = $region20
      $region19: #{sbottleneck_forward.2} parent=11 // pred_region
        _
      $region20: #{sbottleneck_forward.2} parent=11 // pred_fallthru
        _
    $region12: #{sbottleneck_forward.2} parent=5 // pred_fallthru
      _
    %p138 = scmp.lt.s32.totalorder %s9, 4
    // Predicated region
    $region21: #{sbottleneck_forward.2} parent=5 // pred_check
      %p139 = pneg %p138
    $region22: #{sbottleneck_forward.2} parent=5 // pred_check_branch
      %141 = sbr.rel (%p139) target = $region24
    $region23: #{sbottleneck_forward.2} parent=5 // pred_region
      // Predicated region
      $region25: #{sbottleneck_forward.2} parent=23 // pred_check
        %p142 = pneg %p41
      $region26: #{sbottleneck_forward.2} parent=23 // pred_check_branch
        %144 = sbr.rel (%p142) target = $region28
      $region27: #{sbottleneck_forward.2} parent=23 // pred_region
        %p145 = scmp.lt.s32.totalorder %s16, 1
        %s146 = scalar_select %p145, %s16, 1
        %s147 = smul.addr %s146, 54
        %s148 = smul.addr %s147, 4
        %s149 = scalar_lea.vmem %s0, %s148
      $region28: #{sbottleneck_forward.2} parent=23 // pred_fallthru
        _
    $region24: #{sbottleneck_forward.2} parent=5 // pred_fallthru
      _
    %p150 = scmp.le.s32.totalorder 1, %s9
    %p151 = scmp.lt.s32.totalorder %s9, 5
    %p152 = pnand %p150, %p151
    %p153 = pneg %p152
    // Predicated region
    $region29: #{sbottleneck_forward.2} parent=5 // pred_check
      _
    $region30: #{sbottleneck_forward.2} parent=5 // pred_check_branch
      %155 = sbr.rel (%p152) target = $region32
    $region31: #{sbottleneck_forward.2} parent=5 // pred_region
      %s156 = ssub.s32 %s9, 1
      %p157 = scmp.lt.s32.totalorder %s18, 1
      %s158 = scalar_select %p157, %s18, 1
      %s159 = smul.addr %s158, 54
      %s160 = smul.addr %s159, 4
      %s161 = scalar_lea.vmem %s0, %s160
      %p162 = pneg %p47
      %p163 = pneg %p44
      %p164 = pneg %p68
      %p165 = pneg %p65
      %p166 = pneg %p89
      %p167 = pneg %p86
      %p168 = pneg %p117
      %p169 = pneg %p114
      %s170 = smul.u32 8, %s19
      %p171 = scmp.lt.s32.totalorder %s18, 1
      %s172 = scalar_select %p171, %s18, 1
      %p173 = scmp.lt.s32.totalorder %s170, 15
      %s174 = scalar_select %p173, %s170, 15
      %s175 = smul.addr %s174, 2
      %s176 = smul.addr %s172, 32
      %s177 = sadd.s32 %s175, %s176
      %s178 = smul.addr %s177, 4
      %s179 = scalar_lea.vmem %s3, %s178
      %p180 = scmp.lt.s32.totalorder %s18, 1
      %s181 = scalar_select %p180, %s18, 1
      %s182 = smul.addr %s181, 54
      %s183 = smul.addr %s182, 4
      %s184 = scalar_lea.vmem %s0, %s183
      %s185 = smul.u32 8, %s19
      %p186 = scmp.lt.s32.totalorder %s18, 1
      %s187 = scalar_select %p186, %s18, 1
      %p188 = scmp.lt.s32.totalorder %s185, 15
      %s189 = scalar_select %p188, %s185, 15
      %s190 = smul.addr %s189, 2
      %s191 = smul.addr %s187, 32
      %s192 = sadd.s32 %s190, %s191
      %s193 = smul.addr %s192, 4
      %s194 = scalar_lea.vmem %s3, %s193
      %s195 = smul.u32 8, %s19
      %s197 = smul.u32 %s19, 8
      %s198 = smul.u32 %s197, 3
      %s199 = smul.addr %s198, 4
      %s200 = scalar_lea.vmem %s184, %s199
      %v201 = vld [vmem:[%s200] sm:$0xf]
      %v202 = vld [vmem:[%s200 + $0x4] sm:$0xf]
      %v203 = vld [vmem:[%s200 + $0x8] sm:$0x1]
      %v204 = vld [vmem:[%s200 + $0xc] sm:$0xf]
      %v205 = vld [vmem:[%s200 + $0x10] sm:$0xf]
      %v206 = vld [vmem:[%s200 + $0x14] sm:$0x1]
      %v207 = vld [vmem:[%s200 + $0x18] sm:$0xf]
      %v208 = vld [vmem:[%s200 + $0x1c] sm:$0xf]
      %v209 = vld [vmem:[%s200 + $0x20] sm:$0x1]
      %v210 = vld [vmem:[%s200 + $0x24] sm:$0xf]
      %v211 = vld [vmem:[%s200 + $0x28] sm:$0xf]
      %v212 = vld [vmem:[%s200 + $0x2c] sm:$0x1]
      %v213 = vld [vmem:[%s200 + $0x30] sm:$0xf]
      %v214 = vld [vmem:[%s200 + $0x34] sm:$0xf]
      %v215 = vld [vmem:[%s200 + $0x38] sm:$0x1]
      %v216 = vld [vmem:[%s200 + $0x3c] sm:$0xf]
      %v217 = vld [vmem:[%s200 + $0x40] sm:$0xf]
      %v218 = vld [vmem:[%s200 + $0x44] sm:$0x1]
      %v219 = vld [vmem:[%s200 + $0x48] sm:$0xf]
      %v220 = vld [vmem:[%s200 + $0x4c] sm:$0xf]
      %v221 = vld [vmem:[%s200 + $0x50] sm:$0x1]
      %v222 = vld [vmem:[%s200 + $0x54] sm:$0xf]
      %v223 = vld [vmem:[%s200 + $0x58] sm:$0xf]
      %v224 = vld [vmem:[%s200 + $0x5c] sm:$0x1]
      %v225 = vld [vmem:[%s200 + $0x60] sm:$0xf]
      %v226 = vld [vmem:[%s200 + $0x64] sm:$0xf]
      %v227 = vld [vmem:[%s200 + $0x68] sm:$0x1]
      %v228 = vld [vmem:[%s200 + $0x6c] sm:$0xf]
      %v229 = vld [vmem:[%s200 + $0x70] sm:$0xf]
      %v230 = vld [vmem:[%s200 + $0x74] sm:$0x1]
      %v231 = vld [vmem:[%s1] sm:$0xf]
      %v232 = vld [vmem:[%s1 + $0x4] sm:$0xf]
      %v233 = vld [vmem:[%s1 + $0x8] sm:$0xf]
      %v234 = vld [vmem:[%s1 + $0xc] sm:$0xf]
      %v235 = vld [vmem:[%s1 + $0x10] sm:$0xf]
      %v236 = vld [vmem:[%s1 + $0x14] sm:$0xf]
      %v237 = vld [vmem:[%s1 + $0x18] sm:$0xf]
      %v238 = vld [vmem:[%s1 + $0x1c] sm:$0xf]
      %v239 = vld [vmem:[%s1 + $0x20] sm:$0xf]
      %v240 = vld [vmem:[%s1 + $0x24] sm:$0xf]
      %v241 = vld [vmem:[%s1 + $0x28] sm:$0xf]
      %v242 = vld [vmem:[%s1 + $0x2c] sm:$0xf]
      %v243 = vld [vmem:[%s1 + $0x30] sm:$0xf]
      %v244 = vld [vmem:[%s1 + $0x34] sm:$0xf]
      %v245 = vld [vmem:[%s1 + $0x38] sm:$0xf]
      %v246 = vld [vmem:[%s1 + $0x3c] sm:$0xf]
      %vm247 = vsmask.f32 3328
      %vm248 = vsmask.f32 7440
      %vm249 = vmor %vm247, %vm248
      %v251 = vshrl.u32 %v201, 16
      %v253 = vrot.slane %v251, 4
      %v254 = vshll.u32 %v201, 16
      %v256 = vrot.slane %v254, 5
      %v257 = vor.u32 %v253, %v256
      %v258 = vrot.slane %v257, 4
      %v260 = vshll.u32 %v202, 16
      %v262 = vrot.slane %v260, 5
      %v263 = vsel %vm249, %v258, %v262
      %v264 = vshrl.u32 %v202, 16
      %v266 = vrot.slane %v264, 4
      %v267 = vor.u32 %v266, %v262
      %v268 = vrot.slane %v267, 4
      %v270 = vshll.u32 %v203, 16
      %v272 = vrot.slane %v270, 5
      %v273 = vsel %vm249, %v268, %v272
      %v275 = vshrl.u32 %v204, 16
      %v277 = vrot.slane %v275, 4
      %v278 = vshll.u32 %v204, 16
      %v280 = vrot.slane %v278, 5
      %v281 = vor.u32 %v277, %v280
      %v282 = vrot.slane %v281, 4
      %v284 = vshll.u32 %v205, 16
      %v286 = vrot.slane %v284, 5
      %v287 = vsel %vm249, %v282, %v286
      %v288 = vshrl.u32 %v205, 16
      %v290 = vrot.slane %v288, 4
      %v291 = vor.u32 %v290, %v286
      %v292 = vrot.slane %v291, 4
      %v294 = vshll.u32 %v206, 16
      %v296 = vrot.slane %v294, 5
      %v297 = vsel %vm249, %v292, %v296
      %v299 = vshrl.u32 %v207, 16
      %v301 = vrot.slane %v299, 4
      %v302 = vshll.u32 %v207, 16
      %v304 = vrot.slane %v302, 5
      %v305 = vor.u32 %v301, %v304
      %v306 = vrot.slane %v305, 4
      %v308 = vshll.u32 %v208, 16
      %v310 = vrot.slane %v308, 5
      %v311 = vsel %vm249, %v306, %v310
      %v312 = vshrl.u32 %v208, 16
      %v314 = vrot.slane %v312, 4
      %v315 = vor.u32 %v314, %v310
      %v316 = vrot.slane %v315, 4
      %v318 = vshll.u32 %v209, 16
      %v320 = vrot.slane %v318, 5
      %v321 = vsel %vm249, %v316, %v320
      %v323 = vshrl.u32 %v210, 16
      %v325 = vrot.slane %v323, 4
      %v326 = vshll.u32 %v210, 16
      %v328 = vrot.slane %v326, 5
      %v329 = vor.u32 %v325, %v328
      %v330 = vrot.slane %v329, 4
      %v332 = vshll.u32 %v211, 16
      %v334 = vrot.slane %v332, 5
      %v335 = vsel %vm249, %v330, %v334
      %v336 = vshrl.u32 %v211, 16
      %v338 = vrot.slane %v336, 4
      %v339 = vor.u32 %v338, %v334
      %v340 = vrot.slane %v339, 4
      %v342 = vshll.u32 %v212, 16
      %v344 = vrot.slane %v342, 5
      %v345 = vsel %vm249, %v340, %v344
      %v347 = vshrl.u32 %v213, 16
      %v349 = vrot.slane %v347, 4
      %v350 = vshll.u32 %v213, 16
      %v352 = vrot.slane %v350, 5
      %v353 = vor.u32 %v349, %v352
      %v354 = vrot.slane %v353, 4
      %v356 = vshll.u32 %v214, 16
      %v358 = vrot.slane %v356, 5
      %v359 = vsel %vm249, %v354, %v358
      %v360 = vshrl.u32 %v214, 16
      %v362 = vrot.slane %v360, 4
      %v363 = vor.u32 %v362, %v358
      %v364 = vrot.slane %v363, 4
      %v366 = vshll.u32 %v215, 16
      %v368 = vrot.slane %v366, 5
      %v369 = vsel %vm249, %v364, %v368
      %v371 = vshrl.u32 %v216, 16
      %v373 = vrot.slane %v371, 4
      %v374 = vshll.u32 %v216, 16
      %v376 = vrot.slane %v374, 5
      %v377 = vor.u32 %v373, %v376
      %v378 = vrot.slane %v377, 4
      %v380 = vshll.u32 %v217, 16
      %v382 = vrot.slane %v380, 5
      %v383 = vsel %vm249, %v378, %v382
      %v384 = vshrl.u32 %v217, 16
      %v386 = vrot.slane %v384, 4
      %v387 = vor.u32 %v386, %v382
      %v388 = vrot.slane %v387, 4
      %v390 = vshll.u32 %v218, 16
      %v392 = vrot.slane %v390, 5
      %v393 = vsel %vm249, %v388, %v392
      %v395 = vshrl.u32 %v219, 16
      %v397 = vrot.slane %v395, 4
      %v398 = vshll.u32 %v219, 16
      %v400 = vrot.slane %v398, 5
      %v401 = vor.u32 %v397, %v400
      %v402 = vrot.slane %v401, 4
      %v404 = vshll.u32 %v220, 16
      %v406 = vrot.slane %v404, 5
      %v407 = vsel %vm249, %v402, %v406
      %v408 = vshrl.u32 %v220, 16
      %v410 = vrot.slane %v408, 4
      %v411 = vor.u32 %v410, %v406
      %v412 = vrot.slane %v411, 4
      %v414 = vshll.u32 %v221, 16
      %v416 = vrot.slane %v414, 5
      %v417 = vsel %vm249, %v412, %v416
      %v419 = vshrl.u32 %v222, 16
      %v421 = vrot.slane %v419, 4
      %v422 = vshll.u32 %v222, 16
      %v424 = vrot.slane %v422, 5
      %v425 = vor.u32 %v421, %v424
      %v426 = vrot.slane %v425, 4
      %v428 = vshll.u32 %v223, 16
      %v430 = vrot.slane %v428, 5
      %v431 = vsel %vm249, %v426, %v430
      %v432 = vshrl.u32 %v223, 16
      %v434 = vrot.slane %v432, 4
      %v435 = vor.u32 %v434, %v430
      %v436 = vrot.slane %v435, 4
      %v438 = vshll.u32 %v224, 16
      %v440 = vrot.slane %v438, 5
      %v441 = vsel %vm249, %v436, %v440
      %s442 = scalar_lea.vmem %s1, 64
      %v443 = vld [vmem:[%s442] sm:$0xf]
      %v444 = vld [vmem:[%s442 + $0x4] sm:$0xf]
      %v445 = vld [vmem:[%s442 + $0x8] sm:$0xf]
      %v446 = vld [vmem:[%s442 + $0xc] sm:$0xf]
      %v447 = vld [vmem:[%s442 + $0x10] sm:$0xf]
      %v448 = vld [vmem:[%s442 + $0x14] sm:$0xf]
      %v449 = vld [vmem:[%s442 + $0x18] sm:$0xf]
      %v450 = vld [vmem:[%s442 + $0x1c] sm:$0xf]
      %v451 = vld [vmem:[%s442 + $0x20] sm:$0xf]
      %v452 = vld [vmem:[%s442 + $0x24] sm:$0xf]
      %v453 = vld [vmem:[%s442 + $0x28] sm:$0xf]
      %v454 = vld [vmem:[%s442 + $0x2c] sm:$0xf]
      %v455 = vld [vmem:[%s442 + $0x30] sm:$0xf]
      %v456 = vld [vmem:[%s442 + $0x34] sm:$0xf]
      %v457 = vld [vmem:[%s442 + $0x38] sm:$0xf]
      %v458 = vld [vmem:[%s442 + $0x3c] sm:$0xf]
      %v459 = vunpack.c.l.b16 %v263
      %v460 = vunpack.c.l.b16 %v273
      %v461 = vunpack.c.l.b16 %v287
      %v462 = vunpack.c.l.b16 %v297
      %v463 = vunpack.c.l.b16 %v311
      %v464 = vunpack.c.l.b16 %v321
      %v465 = vunpack.c.l.b16 %v335
      %v466 = vunpack.c.l.b16 %v345
      %v467 = vunpack.c.l.b16 %v359
      %v468 = vunpack.c.l.b16 %v369
      %v469 = vunpack.c.l.b16 %v383
      %v470 = vunpack.c.l.b16 %v393
      %v471 = vunpack.c.l.b16 %v407
      %v472 = vunpack.c.l.b16 %v417
      %v473 = vunpack.c.l.b16 %v431
      %v474 = vunpack.c.l.b16 %v441
      %v475 = vpack.c.b16 %v460, %v459
      %v476 = vpack.c.b16 %v462, %v461
      %v477 = vpack.c.b16 %v464, %v463
      %v478 = vpack.c.b16 %v466, %v465
      %v479 = vpack.c.b16 %v468, %v467
      %v480 = vpack.c.b16 %v470, %v469
      %v481 = vpack.c.b16 %v472, %v471
      %v482 = vpack.c.b16 %v474, %v473
      %v507 = vunpack.c.l.b16 %v443
      %v508 = vunpack.c.l.b16 %v444
      %v509 = vunpack.c.l.b16 %v445
      %v510 = vunpack.c.l.b16 %v446
      %v511 = vunpack.c.l.b16 %v447
      %v512 = vunpack.c.l.b16 %v448
      %v513 = vunpack.c.l.b16 %v449
      %v514 = vunpack.c.l.b16 %v450
      %v515 = vunpack.c.l.b16 %v451
      %v516 = vunpack.c.l.b16 %v452
      %v517 = vunpack.c.l.b16 %v453
      %v518 = vunpack.c.l.b16 %v454
      %v519 = vunpack.c.l.b16 %v455
      %v520 = vunpack.c.l.b16 %v456
      %v521 = vunpack.c.l.b16 %v457
      %v522 = vunpack.c.l.b16 %v458
      %v523 = vpack.c.b16 %v508, %v507
      %v524 = vpack.c.b16 %v510, %v509
      %v525 = vpack.c.b16 %v512, %v511
      %v526 = vpack.c.b16 %v514, %v513
      %v527 = vpack.c.b16 %v516, %v515
      %v528 = vpack.c.b16 %v518, %v517
      %v529 = vpack.c.b16 %v520, %v519
      %v530 = vpack.c.b16 %v522, %v521
      %539 = vmatprep.subr.bf16.mxu0 0
      %540 = vmatpush1.bf16.msra.mxu0 %v523
      %541 = vmatprep.subr.bf16.mxu0 0
      %542 = vmatpush1.bf16.msra.mxu0 %v524
      %543 = vmatprep.subr.bf16.mxu0 0
      %544 = vmatpush1.bf16.msra.mxu0 %v525
      %545 = vmatprep.subr.bf16.mxu0 0
      %546 = vmatpush1.bf16.msra.mxu0 %v526
      %547 = vmatprep.subr.bf16.mxu0 0
      %548 = vmatpush1.bf16.msra.mxu0 %v527
      %549 = vmatprep.subr.bf16.mxu0 0
      %550 = vmatpush1.bf16.msra.mxu0 %v528
      %551 = vmatprep.subr.bf16.mxu0 0
      %552 = vmatpush1.bf16.msra.mxu0 %v529
      %553 = vmatprep.subr.bf16.mxu0 0
      %554 = vmatpush1.bf16.msra.mxu0 %v530
      %555 = vmatprep.subr.bf16.mxu0 0
      %556 = vmatpush1.bf16.msra.mxu0 0
      %557 = vmatprep.subr.bf16.mxu0 0
      %558 = vmatpush1.bf16.msra.mxu0 0
      %559 = vmatprep.subr.bf16.mxu0 0
      %560 = vmatpush1.bf16.msra.mxu0 0
      %561 = vmatprep.subr.bf16.mxu0 0
      %562 = vmatpush1.bf16.msra.mxu0 0
      %563 = vmatprep.subr.bf16.mxu0 0
      %564 = vmatpush1.bf16.msra.mxu0 0
      %565 = vmatprep.subr.bf16.mxu0 0
      %566 = vmatpush1.bf16.msra.mxu0 0
      %567 = vmatprep.subr.bf16.mxu0 0
      %568 = vmatpush1.bf16.msra.mxu0 0
      %569 = vmatprep.subr.bf16.mxu0 0
      %570 = vmatpush1.bf16.msra.mxu0 0
      %571 = vmatprep.mubr.bf16.mxu0 0
      %572 = vmatmul.mubr.bf16.gmra.mrb[0].mxu0 %v475
      %v573 = vpop.f32.mrb[0].mxu0
      %v574 = vadd.f32 0.0, %v573
      %v575 = vpop.f32.mrb[0].mxu0
      %v576 = vpop.f32.mrb[0].mxu0
      %v577 = vadd.f32 0.0, %v576
      %v578 = vpop.f32.mrb[0].mxu0
      %579 = vmatprep.mubr.bf16.mxu0 0
      %580 = vmatmul.mubr.bf16.gmra.mrb[0].mxu0 %v476
      %v581 = vpop.f32.mrb[0].mxu0
      %v582 = vadd.f32 0.0, %v581
      %v583 = vpop.f32.mrb[0].mxu0
      %v584 = vpop.f32.mrb[0].mxu0
      %v585 = vadd.f32 0.0, %v584
      %v586 = vpop.f32.mrb[0].mxu0
      %587 = vmatprep.mubr.bf16.mxu0 0
      %588 = vmatmul.mubr.bf16.gmra.mrb[0].mxu0 %v477
      %v589 = vpop.f32.mrb[0].mxu0
      %v590 = vadd.f32 0.0, %v589
      %v591 = vpop.f32.mrb[0].mxu0
      %v592 = vpop.f32.mrb[0].mxu0
      %v593 = vadd.f32 0.0, %v592
      %v594 = vpop.f32.mrb[0].mxu0
      %595 = vmatprep.mubr.bf16.mxu0 0
      %596 = vmatmul.mubr.bf16.gmra.mrb[0].mxu0 %v478
      %v597 = vpop.f32.mrb[0].mxu0
      %v598 = vadd.f32 0.0, %v597
      %v599 = vpop.f32.mrb[0].mxu0
      %v600 = vpop.f32.mrb[0].mxu0
      %v601 = vadd.f32 0.0, %v600
      %v602 = vpop.f32.mrb[0].mxu0
      %603 = vmatprep.mubr.bf16.mxu0 0
      %604 = vmatmul.mubr.bf16.gmra.mrb[0].mxu0 %v479
      %v605 = vpop.f32.mrb[0].mxu0
      %v606 = vadd.f32 0.0, %v605
      %v607 = vpop.f32.mrb[0].mxu0
      %v608 = vpop.f32.mrb[0].mxu0
      %v609 = vadd.f32 0.0, %v608
      %v610 = vpop.f32.mrb[0].mxu0
      %611 = vmatprep.mubr.bf16.mxu0 0
      %612 = vmatmul.mubr.bf16.gmra.mrb[0].mxu0 %v480
      %v613 = vpop.f32.mrb[0].mxu0
      %v614 = vadd.f32 0.0, %v613
      %v615 = vpop.f32.mrb[0].mxu0
      %v616 = vpop.f32.mrb[0].mxu0
      %v617 = vadd.f32 0.0, %v616
      %v618 = vpop.f32.mrb[0].mxu0
      %619 = vmatprep.mubr.bf16.mxu0 0
      %620 = vmatmul.mubr.bf16.gmra.mrb[0].mxu0 %v481
      %v621 = vpop.f32.mrb[0].mxu0
      %v622 = vadd.f32 0.0, %v621
      %v623 = vpop.f32.mrb[0].mxu0
      %v624 = vpop.f32.mrb[0].mxu0
      %v625 = vadd.f32 0.0, %v624
      %v626 = vpop.f32.mrb[0].mxu0
      %627 = vmatprep.mubr.bf16.mxu0 0
      %628 = vmatmul.mubr.bf16.gmra.mrb[0].mxu0 %v482
      %v629 = vpop.f32.mrb[0].mxu0
      %v630 = vadd.f32 0.0, %v629
      %v631 = vpop.f32.mrb[0].mxu0
      %v632 = vpop.f32.mrb[0].mxu0
      %v633 = vadd.f32 0.0, %v632
      %v634 = vpop.f32.mrb[0].mxu0
      %635 = vdwg.mxu0
      %v652 = vunpack.c.l.b16 %v201
      %v653 = vunpack.c.l.b16 %v202
      %v654 = vunpack.c.l.b16 %v204
      %v655 = vunpack.c.l.b16 %v205
      %v656 = vunpack.c.l.b16 %v207
      %v657 = vunpack.c.l.b16 %v208
      %v658 = vunpack.c.l.b16 %v210
      %v659 = vunpack.c.l.b16 %v211
      %v660 = vunpack.c.l.b16 %v213
      %v661 = vunpack.c.l.b16 %v214
      %v662 = vunpack.c.l.b16 %v216
      %v663 = vunpack.c.l.b16 %v217
      %v664 = vunpack.c.l.b16 %v219
      %v665 = vunpack.c.l.b16 %v220
      %v666 = vunpack.c.l.b16 %v222
      %v667 = vunpack.c.l.b16 %v223
      %v668 = vpack.c.b16 %v653, %v652
      %v669 = vpack.c.b16 %v655, %v654
      %v670 = vpack.c.b16 %v657, %v656
      %v671 = vpack.c.b16 %v659, %v658
      %v672 = vpack.c.b16 %v661, %v660
      %v673 = vpack.c.b16 %v663, %v662
      %v674 = vpack.c.b16 %v665, %v664
      %v675 = vpack.c.b16 %v667, %v666
      %v700 = vunpack.c.l.b16 %v231
      %v701 = vunpack.c.l.b16 %v232
      %v702 = vunpack.c.l.b16 %v233
      %v703 = vunpack.c.l.b16 %v234
      %v704 = vunpack.c.l.b16 %v235
      %v705 = vunpack.c.l.b16 %v236
      %v706 = vunpack.c.l.b16 %v237
      %v707 = vunpack.c.l.b16 %v238
      %v708 = vunpack.c.l.b16 %v239
      %v709 = vunpack.c.l.b16 %v240
      %v710 = vunpack.c.l.b16 %v241
      %v711 = vunpack.c.l.b16 %v242
      %v712 = vunpack.c.l.b16 %v243
      %v713 = vunpack.c.l.b16 %v244
      %v714 = vunpack.c.l.b16 %v245
      %v715 = vunpack.c.l.b16 %v246
      %v716 = vpack.c.b16 %v701, %v700
      %v717 = vpack.c.b16 %v703, %v702
      %v718 = vpack.c.b16 %v705, %v704
      %v719 = vpack.c.b16 %v707, %v706
      %v720 = vpack.c.b16 %v709, %v708
      %v721 = vpack.c.b16 %v711, %v710
      %v722 = vpack.c.b16 %v713, %v712
      %v723 = vpack.c.b16 %v715, %v714
      %732 = vmatprep.subr.bf16.mxu0 0
      %733 = vmatpush1.bf16.msra.mxu0 %v716
      %734 = vmatprep.subr.bf16.mxu0 0
      %735 = vmatpush1.bf16.msra.mxu0 %v717
      %736 = vmatprep.subr.bf16.mxu0 0
      %737 = vmatpush1.bf16.msra.mxu0 %v718
      %738 = vmatprep.subr.bf16.mxu0 0
      %739 = vmatpush1.bf16.msra.mxu0 %v719
      %740 = vmatprep.subr.bf16.mxu0 0
      %741 = vmatpush1.bf16.msra.mxu0 %v720
      %742 = vmatprep.subr.bf16.mxu0 0
      %743 = vmatpush1.bf16.msra.mxu0 %v721
      %744 = vmatprep.subr.bf16.mxu0 0
      %745 = vmatpush1.bf16.msra.mxu0 %v722
      %746 = vmatprep.subr.bf16.mxu0 0
      %747 = vmatpush1.bf16.msra.mxu0 %v723
      %748 = vmatprep.subr.bf16.mxu0 0
      %749 = vmatpush1.bf16.msra.mxu0 0
      %750 = vmatprep.subr.bf16.mxu0 0
      %751 = vmatpush1.bf16.msra.mxu0 0
      %752 = vmatprep.subr.bf16.mxu0 0
      %753 = vmatpush1.bf16.msra.mxu0 0
      %754 = vmatprep.subr.bf16.mxu0 0
      %755 = vmatpush1.bf16.msra.mxu0 0
      %756 = vmatprep.subr.bf16.mxu0 0
      %757 = vmatpush1.bf16.msra.mxu0 0
      %758 = vmatprep.subr.bf16.mxu0 0
      %759 = vmatpush1.bf16.msra.mxu0 0
      %760 = vmatprep.subr.bf16.mxu0 0
      %761 = vmatpush1.bf16.msra.mxu0 0
      %762 = vmatprep.subr.bf16.mxu0 0
      %763 = vmatpush1.bf16.msra.mxu0 0
      %764 = vmatprep.mubr.bf16.mxu0 0
      %765 = vmatmul.mubr.bf16.gmra.mrb[0].mxu0 %v668
      %v766 = vpop.f32.mrb[0].mxu0
      %v767 = vadd.f32 %v574, %v766
      %v768 = vpop.f32.mrb[0].mxu0
      %v769 = vpop.f32.mrb[0].mxu0
      %v770 = vadd.f32 %v577, %v769
      %v771 = vpop.f32.mrb[0].mxu0
      %772 = vmatprep.mubr.bf16.mxu0 0
      %773 = vmatmul.mubr.bf16.gmra.mrb[0].mxu0 %v669
      %v774 = vpop.f32.mrb[0].mxu0
      %v775 = vadd.f32 %v582, %v774
      %v776 = vpop.f32.mrb[0].mxu0
      %v777 = vpop.f32.mrb[0].mxu0
      %v778 = vadd.f32 %v585, %v777
      %v779 = vpop.f32.mrb[0].mxu0
      %780 = vmatprep.mubr.bf16.mxu0 0
      %781 = vmatmul.mubr.bf16.gmra.mrb[0].mxu0 %v670
      %v782 = vpop.f32.mrb[0].mxu0
      %v783 = vadd.f32 %v590, %v782
      %v784 = vpop.f32.mrb[0].mxu0
      %v785 = vpop.f32.mrb[0].mxu0
      %v786 = vadd.f32 %v593, %v785
      %v787 = vpop.f32.mrb[0].mxu0
      %788 = vmatprep.mubr.bf16.mxu0 0
      %789 = vmatmul.mubr.bf16.gmra.mrb[0].mxu0 %v671
      %v790 = vpop.f32.mrb[0].mxu0
      %v791 = vadd.f32 %v598, %v790
      %v792 = vpop.f32.mrb[0].mxu0
      %v793 = vpop.f32.mrb[0].mxu0
      %v794 = vadd.f32 %v601, %v793
      %v795 = vpop.f32.mrb[0].mxu0
      %796 = vmatprep.mubr.bf16.mxu0 0
      %797 = vmatmul.mubr.bf16.gmra.mrb[0].mxu0 %v672
      %v798 = vpop.f32.mrb[0].mxu0
      %v799 = vadd.f32 %v606, %v798
      %v800 = vpop.f32.mrb[0].mxu0
      %v801 = vpop.f32.mrb[0].mxu0
      %v802 = vadd.f32 %v609, %v801
      %v803 = vpop.f32.mrb[0].mxu0
      %804 = vmatprep.mubr.bf16.mxu0 0
      %805 = vmatmul.mubr.bf16.gmra.mrb[0].mxu0 %v673
      %v806 = vpop.f32.mrb[0].mxu0
      %v807 = vadd.f32 %v614, %v806
      %v808 = vpop.f32.mrb[0].mxu0
      %v809 = vpop.f32.mrb[0].mxu0
      %v810 = vadd.f32 %v617, %v809
      %v811 = vpop.f32.mrb[0].mxu0
      %812 = vmatprep.mubr.bf16.mxu0 0
      %813 = vmatmul.mubr.bf16.gmra.mrb[0].mxu0 %v674
      %v814 = vpop.f32.mrb[0].mxu0
      %v815 = vadd.f32 %v622, %v814
      %v816 = vpop.f32.mrb[0].mxu0
      %v817 = vpop.f32.mrb[0].mxu0
      %v818 = vadd.f32 %v625, %v817
      %v819 = vpop.f32.mrb[0].mxu0
      %820 = vmatprep.mubr.bf16.mxu0 0
      %821 = vmatmul.mubr.bf16.gmra.mrb[0].mxu0 %v675
      %v822 = vpop.f32.mrb[0].mxu0
      %v823 = vadd.f32 %v630, %v822
      %v824 = vpop.f32.mrb[0].mxu0
      %v825 = vpop.f32.mrb[0].mxu0
      %v826 = vadd.f32 %v633, %v825
      %v827 = vpop.f32.mrb[0].mxu0
      %828 = vdwg.mxu0
      %vm837 = vcmask 1042432
      %vm838 = vcmask 1046532
      %vm839 = vmor %vm837, %vm838
      %v840 = vrot.slane %v201, 5
      %v841 = vrot.slane %v840, 4
      %v842 = vrot.slane %v202, 5
      %v843 = vsel %vm839, %v841, %v842
      %v844 = vrot.slane %v842, 4
      %v845 = vrot.slane %v203, 5
      %v846 = vsel %vm839, %v844, %v845
      %v847 = vrot.slane %v204, 5
      %v848 = vrot.slane %v847, 4
      %v849 = vrot.slane %v205, 5
      %v850 = vsel %vm839, %v848, %v849
      %v851 = vrot.slane %v849, 4
      %v852 = vrot.slane %v206, 5
      %v853 = vsel %vm839, %v851, %v852
      %v854 = vrot.slane %v207, 5
      %v855 = vrot.slane %v854, 4
      %v856 = vrot.slane %v208, 5
      %v857 = vsel %vm839, %v855, %v856
      %v858 = vrot.slane %v856, 4
      %v859 = vrot.slane %v209, 5
      %v860 = vsel %vm839, %v858, %v859
      %v861 = vrot.slane %v210, 5
      %v862 = vrot.slane %v861, 4
      %v863 = vrot.slane %v211, 5
      %v864 = vsel %vm839, %v862, %v863
      %v865 = vrot.slane %v863, 4
      %v866 = vrot.slane %v212, 5
      %v867 = vsel %vm839, %v865, %v866
      %v868 = vrot.slane %v213, 5
      %v869 = vrot.slane %v868, 4
      %v870 = vrot.slane %v214, 5
      %v871 = vsel %vm839, %v869, %v870
      %v872 = vrot.slane %v870, 4
      %v873 = vrot.slane %v215, 5
      %v874 = vsel %vm839, %v872, %v873
      %v875 = vrot.slane %v216, 5
      %v876 = vrot.slane %v875, 4
      %v877 = vrot.slane %v217, 5
      %v878 = vsel %vm839, %v876, %v877
      %v879 = vrot.slane %v877, 4
      %v880 = vrot.slane %v218, 5
      %v881 = vsel %vm839, %v879, %v880
      %v882 = vrot.slane %v219, 5
      %v883 = vrot.slane %v882, 4
      %v884 = vrot.slane %v220, 5
      %v885 = vsel %vm839, %v883, %v884
      %v886 = vrot.slane %v884, 4
      %v887 = vrot.slane %v221, 5
      %v888 = vsel %vm839, %v886, %v887
      %v889 = vrot.slane %v222, 5
      %v890 = vrot.slane %v889, 4
      %v891 = vrot.slane %v223, 5
      %v892 = vsel %vm839, %v890, %v891
      %v893 = vrot.slane %v891, 4
      %v894 = vrot.slane %v224, 5
      %v895 = vsel %vm839, %v893, %v894
      %s896 = scalar_lea.vmem %s1, 128
      %v897 = vld [vmem:[%s896] sm:$0xf]
      %v898 = vld [vmem:[%s896 + $0x4] sm:$0xf]
      %v899 = vld [vmem:[%s896 + $0x8] sm:$0xf]
      %v900 = vld [vmem:[%s896 + $0xc] sm:$0xf]
      %v901 = vld [vmem:[%s896 + $0x10] sm:$0xf]
      %v902 = vld [vmem:[%s896 + $0x14] sm:$0xf]
      %v903 = vld [vmem:[%s896 + $0x18] sm:$0xf]
      %v904 = vld [vmem:[%s896 + $0x1c] sm:$0xf]
      %v905 = vld [vmem:[%s896 + $0x20] sm:$0xf]
      %v906 = vld [vmem:[%s896 + $0x24] sm:$0xf]
      %v907 = vld [vmem:[%s896 + $0x28] sm:$0xf]
      %v908 = vld [vmem:[%s896 + $0x2c] sm:$0xf]
      %v909 = vld [vmem:[%s896 + $0x30] sm:$0xf]
      %v910 = vld [vmem:[%s896 + $0x34] sm:$0xf]
      %v911 = vld [vmem:[%s896 + $0x38] sm:$0xf]
      %v912 = vld [vmem:[%s896 + $0x3c] sm:$0xf]
      %v913 = vunpack.c.l.b16 %v843
      %v914 = vunpack.c.l.b16 %v846
      %v915 = vunpack.c.l.b16 %v850
      %v916 = vunpack.c.l.b16 %v853
      %v917 = vunpack.c.l.b16 %v857
      %v918 = vunpack.c.l.b16 %v860
      %v919 = vunpack.c.l.b16 %v864
      %v920 = vunpack.c.l.b16 %v867
      %v921 = vunpack.c.l.b16 %v871
      %v922 = vunpack.c.l.b16 %v874
      %v923 = vunpack.c.l.b16 %v878
      %v924 = vunpack.c.l.b16 %v881
      %v925 = vunpack.c.l.b16 %v885
      %v926 = vunpack.c.l.b16 %v888
      %v927 = vunpack.c.l.b16 %v892
      %v928 = vunpack.c.l.b16 %v895
      %v929 = vpack.c.b16 %v914, %v913
      %v930 = vpack.c.b16 %v916, %v915
      %v931 = vpack.c.b16 %v918, %v917
      %v932 = vpack.c.b16 %v920, %v919
      %v933 = vpack.c.b16 %v922, %v921
      %v934 = vpack.c.b16 %v924, %v923
      %v935 = vpack.c.b16 %v926, %v925
      %v936 = vpack.c.b16 %v928, %v927
      %v961 = vunpack.c.l.b16 %v897
      %v962 = vunpack.c.l.b16 %v898
      %v963 = vunpack.c.l.b16 %v899
      %v964 = vunpack.c.l.b16 %v900
      %v965 = vunpack.c.l.b16 %v901
      %v966 = vunpack.c.l.b16 %v902
      %v967 = vunpack.c.l.b16 %v903
      %v968 = vunpack.c.l.b16 %v904
      %v969 = vunpack.c.l.b16 %v905
      %v970 = vunpack.c.l.b16 %v906
      %v971 = vunpack.c.l.b16 %v907
      %v972 = vunpack.c.l.b16 %v908
      %v973 = vunpack.c.l.b16 %v909
      %v974 = vunpack.c.l.b16 %v910
      %v975 = vunpack.c.l.b16 %v911
      %v976 = vunpack.c.l.b16 %v912
      %v977 = vpack.c.b16 %v962, %v961
      %v978 = vpack.c.b16 %v964, %v963
      %v979 = vpack.c.b16 %v966, %v965
      %v980 = vpack.c.b16 %v968, %v967
      %v981 = vpack.c.b16 %v970, %v969
      %v982 = vpack.c.b16 %v972, %v971
      %v983 = vpack.c.b16 %v974, %v973
      %v984 = vpack.c.b16 %v976, %v975
      %993 = vmatprep.subr.bf16.mxu0 0
      %994 = vmatpush1.bf16.msra.mxu0 %v977
      %995 = vmatprep.subr.bf16.mxu0 0
      %996 = vmatpush1.bf16.msra.mxu0 %v978
      %997 = vmatprep.subr.bf16.mxu0 0
      %998 = vmatpush1.bf16.msra.mxu0 %v979
      %999 = vmatprep.subr.bf16.mxu0 0
      %1000 = vmatpush1.bf16.msra.mxu0 %v980
      %1001 = vmatprep.subr.bf16.mxu0 0
      %1002 = vmatpush1.bf16.msra.mxu0 %v981
      %1003 = vmatprep.subr.bf16.mxu0 0
      %1004 = vmatpush1.bf16.msra.mxu0 %v982
      %1005 = vmatprep.subr.bf16.mxu0 0
      %1006 = vmatpush1.bf16.msra.mxu0 %v983
      %1007 = vmatprep.subr.bf16.mxu0 0
      %1008 = vmatpush1.bf16.msra.mxu0 %v984
      %1009 = vmatprep.subr.bf16.mxu0 0
      %1010 = vmatpush1.bf16.msra.mxu0 0
      %1011 = vmatprep.subr.bf16.mxu0 0
      %1012 = vmatpush1.bf16.msra.mxu0 0
      %1013 = vmatprep.subr.bf16.mxu0 0
      %1014 = vmatpush1.bf16.msra.mxu0 0
      %1015 = vmatprep.subr.bf16.mxu0 0
      %1016 = vmatpush1.bf16.msra.mxu0 0
      %1017 = vmatprep.subr.bf16.mxu0 0
      %1018 = vmatpush1.bf16.msra.mxu0 0
      %1019 = vmatprep.subr.bf16.mxu0 0
      %1020 = vmatpush1.bf16.msra.mxu0 0
      %1021 = vmatprep.subr.bf16.mxu0 0
      %1022 = vmatpush1.bf16.msra.mxu0 0
      %1023 = vmatprep.subr.bf16.mxu0 0
      %1024 = vmatpush1.bf16.msra.mxu0 0
      %1025 = vmatprep.mubr.bf16.mxu0 0
      %1026 = vmatmul.mubr.bf16.gmra.mrb[0].mxu0 %v929
      %v1027 = vpop.f32.mrb[0].mxu0
      %v1028 = vadd.f32 0.0, %v1027
      %v1029 = vpop.f32.mrb[0].mxu0
      %v1030 = vpop.f32.mrb[0].mxu0
      %v1031 = vadd.f32 0.0, %v1030
      %v1032 = vpop.f32.mrb[0].mxu0
      %1033 = vmatprep.mubr.bf16.mxu0 0
      %1034 = vmatmul.mubr.bf16.gmra.mrb[0].mxu0 %v930
      %v1035 = vpop.f32.mrb[0].mxu0
      %v1036 = vadd.f32 0.0, %v1035
      %v1037 = vpop.f32.mrb[0].mxu0
      %v1038 = vpop.f32.mrb[0].mxu0
      %v1039 = vadd.f32 0.0, %v1038
      %v1040 = vpop.f32.mrb[0].mxu0
      %1041 = vmatprep.mubr.bf16.mxu0 0
      %1042 = vmatmul.mubr.bf16.gmra.mrb[0].mxu0 %v931
      %v1043 = vpop.f32.mrb[0].mxu0
      %v1044 = vadd.f32 0.0, %v1043
      %v1045 = vpop.f32.mrb[0].mxu0
      %v1046 = vpop.f32.mrb[0].mxu0
      %v1047 = vadd.f32 0.0, %v1046
      %v1048 = vpop.f32.mrb[0].mxu0
      %1049 = vmatprep.mubr.bf16.mxu0 0
      %1050 = vmatmul.mubr.bf16.gmra.mrb[0].mxu0 %v932
      %v1051 = vpop.f32.mrb[0].mxu0
      %v1052 = vadd.f32 0.0, %v1051
      %v1053 = vpop.f32.mrb[0].mxu0
      %v1054 = vpop.f32.mrb[0].mxu0
      %v1055 = vadd.f32 0.0, %v1054
      %v1056 = vpop.f32.mrb[0].mxu0
      %1057 = vmatprep.mubr.bf16.mxu0 0
      %1058 = vmatmul.mubr.bf16.gmra.mrb[0].mxu0 %v933
      %v1059 = vpop.f32.mrb[0].mxu0
      %v1060 = vadd.f32 0.0, %v1059
      %v1061 = vpop.f32.mrb[0].mxu0
      %v1062 = vpop.f32.mrb[0].mxu0
      %v1063 = vadd.f32 0.0, %v1062
      %v1064 = vpop.f32.mrb[0].mxu0
      %1065 = vmatprep.mubr.bf16.mxu0 0
      %1066 = vmatmul.mubr.bf16.gmra.mrb[0].mxu0 %v934
      %v1067 = vpop.f32.mrb[0].mxu0
      %v1068 = vadd.f32 0.0, %v1067
      %v1069 = vpop.f32.mrb[0].mxu0
      %v1070 = vpop.f32.mrb[0].mxu0
      %v1071 = vadd.f32 0.0, %v1070
      %v1072 = vpop.f32.mrb[0].mxu0
      %1073 = vmatprep.mubr.bf16.mxu0 0
      %1074 = vmatmul.mubr.bf16.gmra.mrb[0].mxu0 %v935
      %v1075 = vpop.f32.mrb[0].mxu0
      %v1076 = vadd.f32 0.0, %v1075
      %v1077 = vpop.f32.mrb[0].mxu0
      %v1078 = vpop.f32.mrb[0].mxu0
      %v1079 = vadd.f32 0.0, %v1078
      %v1080 = vpop.f32.mrb[0].mxu0
      %1081 = vmatprep.mubr.bf16.mxu0 0
      %1082 = vmatmul.mubr.bf16.gmra.mrb[0].mxu0 %v936
      %v1083 = vpop.f32.mrb[0].mxu0
      %v1084 = vadd.f32 0.0, %v1083
      %v1085 = vpop.f32.mrb[0].mxu0
      %v1086 = vpop.f32.mrb[0].mxu0
      %v1087 = vadd.f32 0.0, %v1086
      %v1088 = vpop.f32.mrb[0].mxu0
      %1089 = vdwg.mxu0
      %v1090 = vadd.f32 %v767, %v1028
      %v1091 = vadd.f32 %v770, %v1031
      %v1092 = vadd.f32 %v775, %v1036
      %v1093 = vadd.f32 %v778, %v1039
      %v1094 = vadd.f32 %v783, %v1044
      %v1095 = vadd.f32 %v786, %v1047
      %v1096 = vadd.f32 %v791, %v1052
      %v1097 = vadd.f32 %v794, %v1055
      %v1098 = vadd.f32 %v799, %v1060
      %v1099 = vadd.f32 %v802, %v1063
      %v1100 = vadd.f32 %v807, %v1068
      %v1101 = vadd.f32 %v810, %v1071
      %v1102 = vadd.f32 %v815, %v1076
      %v1103 = vadd.f32 %v818, %v1079
      %v1104 = vadd.f32 %v823, %v1084
      %v1105 = vadd.f32 %v826, %v1087
      %s1106 = scalar_lea.vmem %s1, 192
      %v1107 = vld [vmem:[%s1106] sm:$0xf]
      %v1108 = vld [vmem:[%s1106 + $0x4] sm:$0xf]
      %v1109 = vld [vmem:[%s1106 + $0x8] sm:$0xf]
      %v1110 = vld [vmem:[%s1106 + $0xc] sm:$0xf]
      %v1111 = vld [vmem:[%s1106 + $0x10] sm:$0xf]
      %v1112 = vld [vmem:[%s1106 + $0x14] sm:$0xf]
      %v1113 = vld [vmem:[%s1106 + $0x18] sm:$0xf]
      %v1114 = vld [vmem:[%s1106 + $0x1c] sm:$0xf]
      %v1115 = vld [vmem:[%s1106 + $0x20] sm:$0xf]
      %v1116 = vld [vmem:[%s1106 + $0x24] sm:$0xf]
      %v1117 = vld [vmem:[%s1106 + $0x28] sm:$0xf]
      %v1118 = vld [vmem:[%s1106 + $0x2c] sm:$0xf]
      %v1119 = vld [vmem:[%s1106 + $0x30] sm:$0xf]
      %v1120 = vld [vmem:[%s1106 + $0x34] sm:$0xf]
      %v1121 = vld [vmem:[%s1106 + $0x38] sm:$0xf]
      %v1122 = vld [vmem:[%s1106 + $0x3c] sm:$0xf]
      %v1125 = vunpack.c.l.b16 %v225
      %v1126 = vunpack.c.l.b16 %v226
      %v1127 = vpack.c.b16 %v1126, %v1125
      %v1145 = vunpack.c.l.b16 %v1107
      %v1146 = vunpack.c.l.b16 %v1108
      %v1147 = vunpack.c.l.b16 %v1109
      %v1148 = vunpack.c.l.b16 %v1110
      %v1149 = vunpack.c.l.b16 %v1111
      %v1150 = vunpack.c.l.b16 %v1112
      %v1151 = vunpack.c.l.b16 %v1113
      %v1152 = vunpack.c.l.b16 %v1114
      %v1153 = vunpack.c.l.b16 %v1115
      %v1154 = vunpack.c.l.b16 %v1116
      %v1155 = vunpack.c.l.b16 %v1117
      %v1156 = vunpack.c.l.b16 %v1118
      %v1157 = vunpack.c.l.b16 %v1119
      %v1158 = vunpack.c.l.b16 %v1120
      %v1159 = vunpack.c.l.b16 %v1121
      %v1160 = vunpack.c.l.b16 %v1122
      %v1161 = vpack.c.b16 %v1146, %v1145
      %v1162 = vpack.c.b16 %v1148, %v1147
      %v1163 = vpack.c.b16 %v1150, %v1149
      %v1164 = vpack.c.b16 %v1152, %v1151
      %v1165 = vpack.c.b16 %v1154, %v1153
      %v1166 = vpack.c.b16 %v1156, %v1155
      %v1167 = vpack.c.b16 %v1158, %v1157
      %v1168 = vpack.c.b16 %v1160, %v1159
      %1177 = vmatprep.subr.bf16.mxu0 0
      %1178 = vmatpush1.bf16.msra.mxu0 %v1161
      %1179 = vmatprep.subr.bf16.mxu0 0
      %1180 = vmatpush1.bf16.msra.mxu0 %v1162
      %1181 = vmatprep.subr.bf16.mxu0 0
      %1182 = vmatpush1.bf16.msra.mxu0 %v1163
      %1183 = vmatprep.subr.bf16.mxu0 0
      %1184 = vmatpush1.bf16.msra.mxu0 %v1164
      %1185 = vmatprep.subr.bf16.mxu0 0
      %1186 = vmatpush1.bf16.msra.mxu0 %v1165
      %1187 = vmatprep.subr.bf16.mxu0 0
      %1188 = vmatpush1.bf16.msra.mxu0 %v1166
      %1189 = vmatprep.subr.bf16.mxu0 0
      %1190 = vmatpush1.bf16.msra.mxu0 %v1167
      %1191 = vmatprep.subr.bf16.mxu0 0
      %1192 = vmatpush1.bf16.msra.mxu0 %v1168
      %1193 = vmatprep.subr.bf16.mxu0 0
      %1194 = vmatpush1.bf16.msra.mxu0 0
      %1195 = vmatprep.subr.bf16.mxu0 0
      %1196 = vmatpush1.bf16.msra.mxu0 0
      %1197 = vmatprep.subr.bf16.mxu0 0
      %1198 = vmatpush1.bf16.msra.mxu0 0
      %1199 = vmatprep.subr.bf16.mxu0 0
      %1200 = vmatpush1.bf16.msra.mxu0 0
      %1201 = vmatprep.subr.bf16.mxu0 0
      %1202 = vmatpush1.bf16.msra.mxu0 0
      %1203 = vmatprep.subr.bf16.mxu0 0
      %1204 = vmatpush1.bf16.msra.mxu0 0
      %1205 = vmatprep.subr.bf16.mxu0 0
      %1206 = vmatpush1.bf16.msra.mxu0 0
      %1207 = vmatprep.subr.bf16.mxu0 0
      %1208 = vmatpush1.bf16.msra.mxu0 0
      %1209 = vmatprep.mubr.bf16.mxu0 0
      %1210 = vmatmul.mubr.bf16.gmra.mrb[0].mxu0 %v669
      %v1211 = vpop.f32.mrb[0].mxu0
      %v1212 = vadd.f32 0.0, %v1211
      %v1213 = vpop.f32.mrb[0].mxu0
      %v1214 = vpop.f32.mrb[0].mxu0
      %v1215 = vadd.f32 0.0, %v1214
      %v1216 = vpop.f32.mrb[0].mxu0
      %1217 = vmatprep.mubr.bf16.mxu0 0
      %1218 = vmatmul.mubr.bf16.gmra.mrb[0].mxu0 %v670
      %v1219 = vpop.f32.mrb[0].mxu0
      %v1220 = vadd.f32 0.0, %v1219
      %v1221 = vpop.f32.mrb[0].mxu0
      %v1222 = vpop.f32.mrb[0].mxu0
      %v1223 = vadd.f32 0.0, %v1222
      %v1224 = vpop.f32.mrb[0].mxu0
      %1225 = vmatprep.mubr.bf16.mxu0 0
      %1226 = vmatmul.mubr.bf16.gmra.mrb[0].mxu0 %v671
      %v1227 = vpop.f32.mrb[0].mxu0
      %v1228 = vadd.f32 0.0, %v1227
      %v1229 = vpop.f32.mrb[0].mxu0
      %v1230 = vpop.f32.mrb[0].mxu0
      %v1231 = vadd.f32 0.0, %v1230
      %v1232 = vpop.f32.mrb[0].mxu0
      %1233 = vmatprep.mubr.bf16.mxu0 0
      %1234 = vmatmul.mubr.bf16.gmra.mrb[0].mxu0 %v672
      %v1235 = vpop.f32.mrb[0].mxu0
      %v1236 = vadd.f32 0.0, %v1235
      %v1237 = vpop.f32.mrb[0].mxu0
      %v1238 = vpop.f32.mrb[0].mxu0
      %v1239 = vadd.f32 0.0, %v1238
      %v1240 = vpop.f32.mrb[0].mxu0
      %1241 = vmatprep.mubr.bf16.mxu0 0
      %1242 = vmatmul.mubr.bf16.gmra.mrb[0].mxu0 %v673
      %v1243 = vpop.f32.mrb[0].mxu0
      %v1244 = vadd.f32 0.0, %v1243
      %v1245 = vpop.f32.mrb[0].mxu0
      %v1246 = vpop.f32.mrb[0].mxu0
      %v1247 = vadd.f32 0.0, %v1246
      %v1248 = vpop.f32.mrb[0].mxu0
      %1249 = vmatprep.mubr.bf16.mxu0 0
      %1250 = vmatmul.mubr.bf16.gmra.mrb[0].mxu0 %v674
      %v1251 = vpop.f32.mrb[0].mxu0
      %v1252 = vadd.f32 0.0, %v1251
      %v1253 = vpop.f32.mrb[0].mxu0
      %v1254 = vpop.f32.mrb[0].mxu0
      %v1255 = vadd.f32 0.0, %v1254
      %v1256 = vpop.f32.mrb[0].mxu0
      %1257 = vmatprep.mubr.bf16.mxu0 0
      %1258 = vmatmul.mubr.bf16.gmra.mrb[0].mxu0 %v675
      %v1259 = vpop.f32.mrb[0].mxu0
      %v1260 = vadd.f32 0.0, %v1259
      %v1261 = vpop.f32.mrb[0].mxu0
      %v1262 = vpop.f32.mrb[0].mxu0
      %v1263 = vadd.f32 0.0, %v1262
      %v1264 = vpop.f32.mrb[0].mxu0
      %1265 = vmatprep.mubr.bf16.mxu0 0
      %1266 = vmatmul.mubr.bf16.gmra.mrb[0].mxu0 %v1127
      %v1267 = vpop.f32.mrb[0].mxu0
      %v1268 = vadd.f32 0.0, %v1267
      %v1269 = vpop.f32.mrb[0].mxu0
      %v1270 = vpop.f32.mrb[0].mxu0
      %v1271 = vadd.f32 0.0, %v1270
      %v1272 = vpop.f32.mrb[0].mxu0
      %1273 = vdwg.mxu0
      %v1274 = vadd.f32 %v1090, %v1212
      %v1275 = vadd.f32 %v1091, %v1215
      %v1276 = vadd.f32 %v1092, %v1220
      %v1277 = vadd.f32 %v1093, %v1223
      %v1278 = vadd.f32 %v1094, %v1228
      %v1279 = vadd.f32 %v1095, %v1231
      %v1280 = vadd.f32 %v1096, %v1236
      %v1281 = vadd.f32 %v1097, %v1239
      %v1282 = vadd.f32 %v1098, %v1244
      %v1283 = vadd.f32 %v1099, %v1247
      %v1284 = vadd.f32 %v1100, %v1252
      %v1285 = vadd.f32 %v1101, %v1255
      %v1286 = vadd.f32 %v1102, %v1260
      %v1287 = vadd.f32 %v1103, %v1263
      %v1288 = vadd.f32 %v1104, %v1268
      %v1289 = vadd.f32 %v1105, %v1271
      %v1291 = vshrl.u32 %v225, 16
      %v1293 = vrot.slane %v1291, 4
      %v1294 = vshll.u32 %v225, 16
      %v1296 = vrot.slane %v1294, 5
      %v1297 = vor.u32 %v1293, %v1296
      %v1298 = vrot.slane %v1297, 4
      %v1300 = vshll.u32 %v226, 16
      %v1302 = vrot.slane %v1300, 5
      %v1303 = vsel %vm249, %v1298, %v1302
      %v1304 = vshrl.u32 %v226, 16
      %v1306 = vrot.slane %v1304, 4
      %v1307 = vor.u32 %v1306, %v1302
      %v1308 = vrot.slane %v1307, 4
      %v1310 = vshll.u32 %v227, 16
      %v1312 = vrot.slane %v1310, 5
      %v1313 = vsel %vm249, %v1308, %v1312
      %s1314 = scalar_lea.vmem %s1, 256
      %v1315 = vld [vmem:[%s1314] sm:$0xf]
      %v1316 = vld [vmem:[%s1314 + $0x4] sm:$0xf]
      %v1317 = vld [vmem:[%s1314 + $0x8] sm:$0xf]
      %v1318 = vld [vmem:[%s1314 + $0xc] sm:$0xf]
      %v1319 = vld [vmem:[%s1314 + $0x10] sm:$0xf]
      %v1320 = vld [vmem:[%s1314 + $0x14] sm:$0xf]
      %v1321 = vld [vmem:[%s1314 + $0x18] sm:$0xf]
      %v1322 = vld [vmem:[%s1314 + $0x1c] sm:$0xf]
      %v1323 = vld [vmem:[%s1314 + $0x20] sm:$0xf]
      %v1324 = vld [vmem:[%s1314 + $0x24] sm:$0xf]
      %v1325 = vld [vmem:[%s1314 + $0x28] sm:$0xf]
      %v1326 = vld [vmem:[%s1314 + $0x2c] sm:$0xf]
      %v1327 = vld [vmem:[%s1314 + $0x30] sm:$0xf]
      %v1328 = vld [vmem:[%s1314 + $0x34] sm:$0xf]
      %v1329 = vld [vmem:[%s1314 + $0x38] sm:$0xf]
      %v1330 = vld [vmem:[%s1314 + $0x3c] sm:$0xf]
      %v1331 = vunpack.c.l.b16 %v1303
      %v1332 = vunpack.c.l.b16 %v1313
      %v1333 = vpack.c.b16 %v1332, %v1331
      %v1351 = vunpack.c.l.b16 %v1315
      %v1352 = vunpack.c.l.b16 %v1316
      %v1353 = vunpack.c.l.b16 %v1317
      %v1354 = vunpack.c.l.b16 %v1318
      %v1355 = vunpack.c.l.b16 %v1319
      %v1356 = vunpack.c.l.b16 %v1320
      %v1357 = vunpack.c.l.b16 %v1321
      %v1358 = vunpack.c.l.b16 %v1322
      %v1359 = vunpack.c.l.b16 %v1323
      %v1360 = vunpack.c.l.b16 %v1324
      %v1361 = vunpack.c.l.b16 %v1325
      %v1362 = vunpack.c.l.b16 %v1326
      %v1363 = vunpack.c.l.b16 %v1327
      %v1364 = vunpack.c.l.b16 %v1328
      %v1365 = vunpack.c.l.b16 %v1329
      %v1366 = vunpack.c.l.b16 %v1330
      %v1367 = vpack.c.b16 %v1352, %v1351
      %v1368 = vpack.c.b16 %v1354, %v1353
      %v1369 = vpack.c.b16 %v1356, %v1355
      %v1370 = vpack.c.b16 %v1358, %v1357
      %v1371 = vpack.c.b16 %v1360, %v1359
      %v1372 = vpack.c.b16 %v1362, %v1361
      %v1373 = vpack.c.b16 %v1364, %v1363
      %v1374 = vpack.c.b16 %v1366, %v1365
      %1383 = vmatprep.subr.bf16.mxu0 0
      %1384 = vmatpush1.bf16.msra.mxu0 %v1367
      %1385 = vmatprep.subr.bf16.mxu0 0
      %1386 = vmatpush1.bf16.msra.mxu0 %v1368
      %1387 = vmatprep.subr.bf16.mxu0 0
      %1388 = vmatpush1.bf16.msra.mxu0 %v1369
      %1389 = vmatprep.subr.bf16.mxu0 0
      %1390 = vmatpush1.bf16.msra.mxu0 %v1370
      %1391 = vmatprep.subr.bf16.mxu0 0
      %1392 = vmatpush1.bf16.msra.mxu0 %v1371
      %1393 = vmatprep.subr.bf16.mxu0 0
      %1394 = vmatpush1.bf16.msra.mxu0 %v1372
      %1395 = vmatprep.subr.bf16.mxu0 0
      %1396 = vmatpush1.bf16.msra.mxu0 %v1373
      %1397 = vmatprep.subr.bf16.mxu0 0
      %1398 = vmatpush1.bf16.msra.mxu0 %v1374
      %1399 = vmatprep.subr.bf16.mxu0 0
      %1400 = vmatpush1.bf16.msra.mxu0 0
      %1401 = vmatprep.subr.bf16.mxu0 0
      %1402 = vmatpush1.bf16.msra.mxu0 0
      %1403 = vmatprep.subr.bf16.mxu0 0
      %1404 = vmatpush1.bf16.msra.mxu0 0
      %1405 = vmatprep.subr.bf16.mxu0 0
      %1406 = vmatpush1.bf16.msra.mxu0 0
      %1407 = vmatprep.subr.bf16.mxu0 0
      %1408 = vmatpush1.bf16.msra.mxu0 0
      %1409 = vmatprep.subr.bf16.mxu0 0
      %1410 = vmatpush1.bf16.msra.mxu0 0
      %1411 = vmatprep.subr.bf16.mxu0 0
      %1412 = vmatpush1.bf16.msra.mxu0 0
      %1413 = vmatprep.subr.bf16.mxu0 0
      %1414 = vmatpush1.bf16.msra.mxu0 0
      %1415 = vmatprep.mubr.bf16.mxu0 0
      %1416 = vmatmul.mubr.bf16.gmra.mrb[0].mxu0 %v476
      %v1417 = vpop.f32.mrb[0].mxu0
      %v1418 = vadd.f32 0.0, %v1417
      %v1419 = vpop.f32.mrb[0].mxu0
      %v1420 = vpop.f32.mrb[0].mxu0
      %v1421 = vadd.f32 0.0, %v1420
      %v1422 = vpop.f32.mrb[0].mxu0
      %1423 = vmatprep.mubr.bf16.mxu0 0
      %1424 = vmatmul.mubr.bf16.gmra.mrb[0].mxu0 %v477
      %v1425 = vpop.f32.mrb[0].mxu0
      %v1426 = vadd.f32 0.0, %v1425
      %v1427 = vpop.f32.mrb[0].mxu0
      %v1428 = vpop.f32.mrb[0].mxu0
      %v1429 = vadd.f32 0.0, %v1428
      %v1430 = vpop.f32.mrb[0].mxu0
      %1431 = vmatprep.mubr.bf16.mxu0 0
      %1432 = vmatmul.mubr.bf16.gmra.mrb[0].mxu0 %v478
      %v1433 = vpop.f32.mrb[0].mxu0
      %v1434 = vadd.f32 0.0, %v1433
      %v1435 = vpop.f32.mrb[0].mxu0
      %v1436 = vpop.f32.mrb[0].mxu0
      %v1437 = vadd.f32 0.0, %v1436
      %v1438 = vpop.f32.mrb[0].mxu0
      %1439 = vmatprep.mubr.bf16.mxu0 0
      %1440 = vmatmul.mubr.bf16.gmra.mrb[0].mxu0 %v479
      %v1441 = vpop.f32.mrb[0].mxu0
      %v1442 = vadd.f32 0.0, %v1441
      %v1443 = vpop.f32.mrb[0].mxu0
      %v1444 = vpop.f32.mrb[0].mxu0
      %v1445 = vadd.f32 0.0, %v1444
      %v1446 = vpop.f32.mrb[0].mxu0
      %1447 = vmatprep.mubr.bf16.mxu0 0
      %1448 = vmatmul.mubr.bf16.gmra.mrb[0].mxu0 %v480
      %v1449 = vpop.f32.mrb[0].mxu0
      %v1450 = vadd.f32 0.0, %v1449
      %v1451 = vpop.f32.mrb[0].mxu0
      %v1452 = vpop.f32.mrb[0].mxu0
      %v1453 = vadd.f32 0.0, %v1452
      %v1454 = vpop.f32.mrb[0].mxu0
      %1455 = vmatprep.mubr.bf16.mxu0 0
      %1456 = vmatmul.mubr.bf16.gmra.mrb[0].mxu0 %v481
      %v1457 = vpop.f32.mrb[0].mxu0
      %v1458 = vadd.f32 0.0, %v1457
      %v1459 = vpop.f32.mrb[0].mxu0
      %v1460 = vpop.f32.mrb[0].mxu0
      %v1461 = vadd.f32 0.0, %v1460
      %v1462 = vpop.f32.mrb[0].mxu0
      %1463 = vmatprep.mubr.bf16.mxu0 0
      %1464 = vmatmul.mubr.bf16.gmra.mrb[0].mxu0 %v482
      %v1465 = vpop.f32.mrb[0].mxu0
      %v1466 = vadd.f32 0.0, %v1465
      %v1467 = vpop.f32.mrb[0].mxu0
      %v1468 = vpop.f32.mrb[0].mxu0
      %v1469 = vadd.f32 0.0, %v1468
      %v1470 = vpop.f32.mrb[0].mxu0
      %1471 = vmatprep.mubr.bf16.mxu0 0
      %1472 = vmatmul.mubr.bf16.gmra.mrb[0].mxu0 %v1333
      %v1473 = vpop.f32.mrb[0].mxu0
      %v1474 = vadd.f32 0.0, %v1473
      %v1475 = vpop.f32.mrb[0].mxu0
      %v1476 = vpop.f32.mrb[0].mxu0
      %v1477 = vadd.f32 0.0, %v1476
      %v1478 = vpop.f32.mrb[0].mxu0
      %1479 = vdwg.mxu0
      %v1480 = vadd.f32 %v1274, %v1418
      %v1481 = vadd.f32 %v1275, %v1421
      %v1482 = vadd.f32 %v1276, %v1426
      %v1483 = vadd.f32 %v1277, %v1429
      %v1484 = vadd.f32 %v1278, %v1434
      %v1485 = vadd.f32 %v1279, %v1437
      %v1486 = vadd.f32 %v1280, %v1442
      %v1487 = vadd.f32 %v1281, %v1445
      %v1488 = vadd.f32 %v1282, %v1450
      %v1489 = vadd.f32 %v1283, %v1453
      %v1490 = vadd.f32 %v1284, %v1458
      %v1491 = vadd.f32 %v1285, %v1461
      %v1492 = vadd.f32 %v1286, %v1466
      %v1493 = vadd.f32 %v1287, %v1469
      %v1494 = vadd.f32 %v1288, %v1474
      %v1495 = vadd.f32 %v1289, %v1477
      %v1497 = vrot.slane %v225, 5
      %v1498 = vrot.slane %v1497, 4
      %v1499 = vrot.slane %v226, 5
      %v1500 = vsel %vm839, %v1498, %v1499
      %v1501 = vrot.slane %v1499, 4
      %v1502 = vrot.slane %v227, 5
      %v1503 = vsel %vm839, %v1501, %v1502
      %s1504 = scalar_lea.vmem %s1, 320
      %v1505 = vld [vmem:[%s1504] sm:$0xf]
      %v1506 = vld [vmem:[%s1504 + $0x4] sm:$0xf]
      %v1507 = vld [vmem:[%s1504 + $0x8] sm:$0xf]
      %v1508 = vld [vmem:[%s1504 + $0xc] sm:$0xf]
      %v1509 = vld [vmem:[%s1504 + $0x10] sm:$0xf]
      %v1510 = vld [vmem:[%s1504 + $0x14] sm:$0xf]
      %v1511 = vld [vmem:[%s1504 + $0x18] sm:$0xf]
      %v1512 = vld [vmem:[%s1504 + $0x1c] sm:$0xf]
      %v1513 = vld [vmem:[%s1504 + $0x20] sm:$0xf]
      %v1514 = vld [vmem:[%s1504 + $0x24] sm:$0xf]
      %v1515 = vld [vmem:[%s1504 + $0x28] sm:$0xf]
      %v1516 = vld [vmem:[%s1504 + $0x2c] sm:$0xf]
      %v1517 = vld [vmem:[%s1504 + $0x30] sm:$0xf]
      %v1518 = vld [vmem:[%s1504 + $0x34] sm:$0xf]
      %v1519 = vld [vmem:[%s1504 + $0x38] sm:$0xf]
      %v1520 = vld [vmem:[%s1504 + $0x3c] sm:$0xf]
      %v1521 = vunpack.c.l.b16 %v1500
      %v1522 = vunpack.c.l.b16 %v1503
      %v1523 = vpack.c.b16 %v1522, %v1521
      %v1541 = vunpack.c.l.b16 %v1505
      %v1542 = vunpack.c.l.b16 %v1506
      %v1543 = vunpack.c.l.b16 %v1507
      %v1544 = vunpack.c.l.b16 %v1508
      %v1545 = vunpack.c.l.b16 %v1509
      %v1546 = vunpack.c.l.b16 %v1510
      %v1547 = vunpack.c.l.b16 %v1511
      %v1548 = vunpack.c.l.b16 %v1512
      %v1549 = vunpack.c.l.b16 %v1513
      %v1550 = vunpack.c.l.b16 %v1514
      %v1551 = vunpack.c.l.b16 %v1515
      %v1552 = vunpack.c.l.b16 %v1516
      %v1553 = vunpack.c.l.b16 %v1517
      %v1554 = vunpack.c.l.b16 %v1518
      %v1555 = vunpack.c.l.b16 %v1519
      %v1556 = vunpack.c.l.b16 %v1520
      %v1557 = vpack.c.b16 %v1542, %v1541
      %v1558 = vpack.c.b16 %v1544, %v1543
      %v1559 = vpack.c.b16 %v1546, %v1545
      %v1560 = vpack.c.b16 %v1548, %v1547
      %v1561 = vpack.c.b16 %v1550, %v1549
      %v1562 = vpack.c.b16 %v1552, %v1551
      %v1563 = vpack.c.b16 %v1554, %v1553
      %v1564 = vpack.c.b16 %v1556, %v1555
      %1573 = vmatprep.subr.bf16.mxu0 0
      %1574 = vmatpush1.bf16.msra.mxu0 %v1557
      %1575 = vmatprep.subr.bf16.mxu0 0
      %1576 = vmatpush1.bf16.msra.mxu0 %v1558
      %1577 = vmatprep.subr.bf16.mxu0 0
      %1578 = vmatpush1.bf16.msra.mxu0 %v1559
      %1579 = vmatprep.subr.bf16.mxu0 0
      %1580 = vmatpush1.bf16.msra.mxu0 %v1560
      %1581 = vmatprep.subr.bf16.mxu0 0
      %1582 = vmatpush1.bf16.msra.mxu0 %v1561
      %1583 = vmatprep.subr.bf16.mxu0 0
      %1584 = vmatpush1.bf16.msra.mxu0 %v1562
      %1585 = vmatprep.subr.bf16.mxu0 0
      %1586 = vmatpush1.bf16.msra.mxu0 %v1563
      %1587 = vmatprep.subr.bf16.mxu0 0
      %1588 = vmatpush1.bf16.msra.mxu0 %v1564
      %1589 = vmatprep.subr.bf16.mxu0 0
      %1590 = vmatpush1.bf16.msra.mxu0 0
      %1591 = vmatprep.subr.bf16.mxu0 0
      %1592 = vmatpush1.bf16.msra.mxu0 0
      %1593 = vmatprep.subr.bf16.mxu0 0
      %1594 = vmatpush1.bf16.msra.mxu0 0
      %1595 = vmatprep.subr.bf16.mxu0 0
      %1596 = vmatpush1.bf16.msra.mxu0 0
      %1597 = vmatprep.subr.bf16.mxu0 0
      %1598 = vmatpush1.bf16.msra.mxu0 0
      %1599 = vmatprep.subr.bf16.mxu0 0
      %1600 = vmatpush1.bf16.msra.mxu0 0
      %1601 = vmatprep.subr.bf16.mxu0 0
      %1602 = vmatpush1.bf16.msra.mxu0 0
      %1603 = vmatprep.subr.bf16.mxu0 0
      %1604 = vmatpush1.bf16.msra.mxu0 0
      %1605 = vmatprep.mubr.bf16.mxu0 0
      %1606 = vmatmul.mubr.bf16.gmra.mrb[0].mxu0 %v930
      %v1607 = vpop.f32.mrb[0].mxu0
      %v1608 = vadd.f32 0.0, %v1607
      %v1609 = vpop.f32.mrb[0].mxu0
      %v1610 = vpop.f32.mrb[0].mxu0
      %v1611 = vadd.f32 0.0, %v1610
      %v1612 = vpop.f32.mrb[0].mxu0
      %1613 = vmatprep.mubr.bf16.mxu0 0
      %1614 = vmatmul.mubr.bf16.gmra.mrb[0].mxu0 %v931
      %v1615 = vpop.f32.mrb[0].mxu0
      %v1616 = vadd.f32 0.0, %v1615
      %v1617 = vpop.f32.mrb[0].mxu0
      %v1618 = vpop.f32.mrb[0].mxu0
      %v1619 = vadd.f32 0.0, %v1618
      %v1620 = vpop.f32.mrb[0].mxu0
      %1621 = vmatprep.mubr.bf16.mxu0 0
      %1622 = vmatmul.mubr.bf16.gmra.mrb[0].mxu0 %v932
      %v1623 = vpop.f32.mrb[0].mxu0
      %v1624 = vadd.f32 0.0, %v1623
      %v1625 = vpop.f32.mrb[0].mxu0
      %v1626 = vpop.f32.mrb[0].mxu0
      %v1627 = vadd.f32 0.0, %v1626
      %v1628 = vpop.f32.mrb[0].mxu0
      %1629 = vmatprep.mubr.bf16.mxu0 0
      %1630 = vmatmul.mubr.bf16.gmra.mrb[0].mxu0 %v933
      %v1631 = vpop.f32.mrb[0].mxu0
      %v1632 = vadd.f32 0.0, %v1631
      %v1633 = vpop.f32.mrb[0].mxu0
      %v1634 = vpop.f32.mrb[0].mxu0
      %v1635 = vadd.f32 0.0, %v1634
      %v1636 = vpop.f32.mrb[0].mxu0
      %1637 = vmatprep.mubr.bf16.mxu0 0
      %1638 = vmatmul.mubr.bf16.gmra.mrb[0].mxu0 %v934
      %v1639 = vpop.f32.mrb[0].mxu0
      %v1640 = vadd.f32 0.0, %v1639
      %v1641 = vpop.f32.mrb[0].mxu0
      %v1642 = vpop.f32.mrb[0].mxu0
      %v1643 = vadd.f32 0.0, %v1642
      %v1644 = vpop.f32.mrb[0].mxu0
      %1645 = vmatprep.mubr.bf16.mxu0 0
      %1646 = vmatmul.mubr.bf16.gmra.mrb[0].mxu0 %v935
      %v1647 = vpop.f32.mrb[0].mxu0
      %v1648 = vadd.f32 0.0, %v1647
      %v1649 = vpop.f32.mrb[0].mxu0
      %v1650 = vpop.f32.mrb[0].mxu0
      %v1651 = vadd.f32 0.0, %v1650
      %v1652 = vpop.f32.mrb[0].mxu0
      %1653 = vmatprep.mubr.bf16.mxu0 0
      %1654 = vmatmul.mubr.bf16.gmra.mrb[0].mxu0 %v936
      %v1655 = vpop.f32.mrb[0].mxu0
      %v1656 = vadd.f32 0.0, %v1655
      %v1657 = vpop.f32.mrb[0].mxu0
      %v1658 = vpop.f32.mrb[0].mxu0
      %v1659 = vadd.f32 0.0, %v1658
      %v1660 = vpop.f32.mrb[0].mxu0
      %1661 = vmatprep.mubr.bf16.mxu0 0
      %1662 = vmatmul.mubr.bf16.gmra.mrb[0].mxu0 %v1523
      %v1663 = vpop.f32.mrb[0].mxu0
      %v1664 = vadd.f32 0.0, %v1663
      %v1665 = vpop.f32.mrb[0].mxu0
      %v1666 = vpop.f32.mrb[0].mxu0
      %v1667 = vadd.f32 0.0, %v1666
      %v1668 = vpop.f32.mrb[0].mxu0
      %1669 = vdwg.mxu0
      %v1670 = vadd.f32 %v1480, %v1608
      %v1671 = vadd.f32 %v1481, %v1611
      %v1672 = vadd.f32 %v1482, %v1616
      %v1673 = vadd.f32 %v1483, %v1619
      %v1674 = vadd.f32 %v1484, %v1624
      %v1675 = vadd.f32 %v1485, %v1627
      %v1676 = vadd.f32 %v1486, %v1632
      %v1677 = vadd.f32 %v1487, %v1635
      %v1678 = vadd.f32 %v1488, %v1640
      %v1679 = vadd.f32 %v1489, %v1643
      %v1680 = vadd.f32 %v1490, %v1648
      %v1681 = vadd.f32 %v1491, %v1651
      %v1682 = vadd.f32 %v1492, %v1656
      %v1683 = vadd.f32 %v1493, %v1659
      %v1684 = vadd.f32 %v1494, %v1664
      %v1685 = vadd.f32 %v1495, %v1667
      %s1686 = scalar_lea.vmem %s1, 384
      %v1687 = vld [vmem:[%s1686] sm:$0xf]
      %v1688 = vld [vmem:[%s1686 + $0x4] sm:$0xf]
      %v1689 = vld [vmem:[%s1686 + $0x8] sm:$0xf]
      %v1690 = vld [vmem:[%s1686 + $0xc] sm:$0xf]
      %v1691 = vld [vmem:[%s1686 + $0x10] sm:$0xf]
      %v1692 = vld [vmem:[%s1686 + $0x14] sm:$0xf]
      %v1693 = vld [vmem:[%s1686 + $0x18] sm:$0xf]
      %v1694 = vld [vmem:[%s1686 + $0x1c] sm:$0xf]
      %v1695 = vld [vmem:[%s1686 + $0x20] sm:$0xf]
      %v1696 = vld [vmem:[%s1686 + $0x24] sm:$0xf]
      %v1697 = vld [vmem:[%s1686 + $0x28] sm:$0xf]
      %v1698 = vld [vmem:[%s1686 + $0x2c] sm:$0xf]
      %v1699 = vld [vmem:[%s1686 + $0x30] sm:$0xf]
      %v1700 = vld [vmem:[%s1686 + $0x34] sm:$0xf]
      %v1701 = vld [vmem:[%s1686 + $0x38] sm:$0xf]
      %v1702 = vld [vmem:[%s1686 + $0x3c] sm:$0xf]
      %v1705 = vunpack.c.l.b16 %v228
      %v1706 = vunpack.c.l.b16 %v229
      %v1707 = vpack.c.b16 %v1706, %v1705
      %v1725 = vunpack.c.l.b16 %v1687
      %v1726 = vunpack.c.l.b16 %v1688
      %v1727 = vunpack.c.l.b16 %v1689
      %v1728 = vunpack.c.l.b16 %v1690
      %v1729 = vunpack.c.l.b16 %v1691
      %v1730 = vunpack.c.l.b16 %v1692
      %v1731 = vunpack.c.l.b16 %v1693
      %v1732 = vunpack.c.l.b16 %v1694
      %v1733 = vunpack.c.l.b16 %v1695
      %v1734 = vunpack.c.l.b16 %v1696
      %v1735 = vunpack.c.l.b16 %v1697
      %v1736 = vunpack.c.l.b16 %v1698
      %v1737 = vunpack.c.l.b16 %v1699
      %v1738 = vunpack.c.l.b16 %v1700
      %v1739 = vunpack.c.l.b16 %v1701
      %v1740 = vunpack.c.l.b16 %v1702
      %v1741 = vpack.c.b16 %v1726, %v1725
      %v1742 = vpack.c.b16 %v1728, %v1727
      %v1743 = vpack.c.b16 %v1730, %v1729
      %v1744 = vpack.c.b16 %v1732, %v1731
      %v1745 = vpack.c.b16 %v1734, %v1733
      %v1746 = vpack.c.b16 %v1736, %v1735
      %v1747 = vpack.c.b16 %v1738, %v1737
      %v1748 = vpack.c.b16 %v1740, %v1739
      %1757 = vmatprep.subr.bf16.mxu0 0
      %1758 = vmatpush1.bf16.msra.mxu0 %v1741
      %1759 = vmatprep.subr.bf16.mxu0 0
      %1760 = vmatpush1.bf16.msra.mxu0 %v1742
      %1761 = vmatprep.subr.bf16.mxu0 0
      %1762 = vmatpush1.bf16.msra.mxu0 %v1743
      %1763 = vmatprep.subr.bf16.mxu0 0
      %1764 = vmatpush1.bf16.msra.mxu0 %v1744
      %1765 = vmatprep.subr.bf16.mxu0 0
      %1766 = vmatpush1.bf16.msra.mxu0 %v1745
      %1767 = vmatprep.subr.bf16.mxu0 0
      %1768 = vmatpush1.bf16.msra.mxu0 %v1746
      %1769 = vmatprep.subr.bf16.mxu0 0
      %1770 = vmatpush1.bf16.msra.mxu0 %v1747
      %1771 = vmatprep.subr.bf16.mxu0 0
      %1772 = vmatpush1.bf16.msra.mxu0 %v1748
      %1773 = vmatprep.subr.bf16.mxu0 0
      %1774 = vmatpush1.bf16.msra.mxu0 0
      %1775 = vmatprep.subr.bf16.mxu0 0
      %1776 = vmatpush1.bf16.msra.mxu0 0
      %1777 = vmatprep.subr.bf16.mxu0 0
      %1778 = vmatpush1.bf16.msra.mxu0 0
      %1779 = vmatprep.subr.bf16.mxu0 0
      %1780 = vmatpush1.bf16.msra.mxu0 0
      %1781 = vmatprep.subr.bf16.mxu0 0
      %1782 = vmatpush1.bf16.msra.mxu0 0
      %1783 = vmatprep.subr.bf16.mxu0 0
      %1784 = vmatpush1.bf16.msra.mxu0 0
      %1785 = vmatprep.subr.bf16.mxu0 0
      %1786 = vmatpush1.bf16.msra.mxu0 0
      %1787 = vmatprep.subr.bf16.mxu0 0
      %1788 = vmatpush1.bf16.msra.mxu0 0
      %1789 = vmatprep.mubr.bf16.mxu0 0
      %1790 = vmatmul.mubr.bf16.gmra.mrb[0].mxu0 %v670
      %v1791 = vpop.f32.mrb[0].mxu0
      %v1792 = vadd.f32 0.0, %v1791
      %v1793 = vpop.f32.mrb[0].mxu0
      %v1794 = vpop.f32.mrb[0].mxu0
      %v1795 = vadd.f32 0.0, %v1794
      %v1796 = vpop.f32.mrb[0].mxu0
      %1797 = vmatprep.mubr.bf16.mxu0 0
      %1798 = vmatmul.mubr.bf16.gmra.mrb[0].mxu0 %v671
      %v1799 = vpop.f32.mrb[0].mxu0
      %v1800 = vadd.f32 0.0, %v1799
      %v1801 = vpop.f32.mrb[0].mxu0
      %v1802 = vpop.f32.mrb[0].mxu0
      %v1803 = vadd.f32 0.0, %v1802
      %v1804 = vpop.f32.mrb[0].mxu0
      %1805 = vmatprep.mubr.bf16.mxu0 0
      %1806 = vmatmul.mubr.bf16.gmra.mrb[0].mxu0 %v672
      %v1807 = vpop.f32.mrb[0].mxu0
      %v1808 = vadd.f32 0.0, %v1807
      %v1809 = vpop.f32.mrb[0].mxu0
      %v1810 = vpop.f32.mrb[0].mxu0
      %v1811 = vadd.f32 0.0, %v1810
      %v1812 = vpop.f32.mrb[0].mxu0
      %1813 = vmatprep.mubr.bf16.mxu0 0
      %1814 = vmatmul.mubr.bf16.gmra.mrb[0].mxu0 %v673
      %v1815 = vpop.f32.mrb[0].mxu0
      %v1816 = vadd.f32 0.0, %v1815
      %v1817 = vpop.f32.mrb[0].mxu0
      %v1818 = vpop.f32.mrb[0].mxu0
      %v1819 = vadd.f32 0.0, %v1818
      %v1820 = vpop.f32.mrb[0].mxu0
      %1821 = vmatprep.mubr.bf16.mxu0 0
      %1822 = vmatmul.mubr.bf16.gmra.mrb[0].mxu0 %v674
      %v1823 = vpop.f32.mrb[0].mxu0
      %v1824 = vadd.f32 0.0, %v1823
      %v1825 = vpop.f32.mrb[0].mxu0
      %v1826 = vpop.f32.mrb[0].mxu0
      %v1827 = vadd.f32 0.0, %v1826
      %v1828 = vpop.f32.mrb[0].mxu0
      %1829 = vmatprep.mubr.bf16.mxu0 0
      %1830 = vmatmul.mubr.bf16.gmra.mrb[0].mxu0 %v675
      %v1831 = vpop.f32.mrb[0].mxu0
      %v1832 = vadd.f32 0.0, %v1831
      %v1833 = vpop.f32.mrb[0].mxu0
      %v1834 = vpop.f32.mrb[0].mxu0
      %v1835 = vadd.f32 0.0, %v1834
      %v1836 = vpop.f32.mrb[0].mxu0
      %1837 = vmatprep.mubr.bf16.mxu0 0
      %1838 = vmatmul.mubr.bf16.gmra.mrb[0].mxu0 %v1127
      %v1839 = vpop.f32.mrb[0].mxu0
      %v1840 = vadd.f32 0.0, %v1839
      %v1841 = vpop.f32.mrb[0].mxu0
      %v1842 = vpop.f32.mrb[0].mxu0
      %v1843 = vadd.f32 0.0, %v1842
      %v1844 = vpop.f32.mrb[0].mxu0
      %1845 = vmatprep.mubr.bf16.mxu0 0
      %1846 = vmatmul.mubr.bf16.gmra.mrb[0].mxu0 %v1707
      %v1847 = vpop.f32.mrb[0].mxu0
      %v1848 = vadd.f32 0.0, %v1847
      %v1849 = vpop.f32.mrb[0].mxu0
      %v1850 = vpop.f32.mrb[0].mxu0
      %v1851 = vadd.f32 0.0, %v1850
      %v1852 = vpop.f32.mrb[0].mxu0
      %1853 = vdwg.mxu0
      %v1854 = vadd.f32 %v1670, %v1792
      %v1855 = vadd.f32 %v1671, %v1795
      %v1856 = vadd.f32 %v1672, %v1800
      %v1857 = vadd.f32 %v1673, %v1803
      %v1858 = vadd.f32 %v1674, %v1808
      %v1859 = vadd.f32 %v1675, %v1811
      %v1860 = vadd.f32 %v1676, %v1816
      %v1861 = vadd.f32 %v1677, %v1819
      %v1862 = vadd.f32 %v1678, %v1824
      %v1863 = vadd.f32 %v1679, %v1827
      %v1864 = vadd.f32 %v1680, %v1832
      %v1865 = vadd.f32 %v1681, %v1835
      %v1866 = vadd.f32 %v1682, %v1840
      %v1867 = vadd.f32 %v1683, %v1843
      %v1868 = vadd.f32 %v1684, %v1848
      %v1869 = vadd.f32 %v1685, %v1851
      %v1871 = vshrl.u32 %v228, 16
      %v1873 = vrot.slane %v1871, 4
      %v1874 = vshll.u32 %v228, 16
      %v1876 = vrot.slane %v1874, 5
      %v1877 = vor.u32 %v1873, %v1876
      %v1878 = vrot.slane %v1877, 4
      %v1880 = vshll.u32 %v229, 16
      %v1882 = vrot.slane %v1880, 5
      %v1883 = vsel %vm249, %v1878, %v1882
      %v1884 = vshrl.u32 %v229, 16
      %v1886 = vrot.slane %v1884, 4
      %v1887 = vor.u32 %v1886, %v1882
      %v1888 = vrot.slane %v1887, 4
      %v1890 = vshll.u32 %v230, 16
      %v1892 = vrot.slane %v1890, 5
      %v1893 = vsel %vm249, %v1888, %v1892
      %s1894 = scalar_lea.vmem %s1, 448
      %v1895 = vld [vmem:[%s1894] sm:$0xf]
      %v1896 = vld [vmem:[%s1894 + $0x4] sm:$0xf]
      %v1897 = vld [vmem:[%s1894 + $0x8] sm:$0xf]
      %v1898 = vld [vmem:[%s1894 + $0xc] sm:$0xf]
      %v1899 = vld [vmem:[%s1894 + $0x10] sm:$0xf]
      %v1900 = vld [vmem:[%s1894 + $0x14] sm:$0xf]
      %v1901 = vld [vmem:[%s1894 + $0x18] sm:$0xf]
      %v1902 = vld [vmem:[%s1894 + $0x1c] sm:$0xf]
      %v1903 = vld [vmem:[%s1894 + $0x20] sm:$0xf]
      %v1904 = vld [vmem:[%s1894 + $0x24] sm:$0xf]
      %v1905 = vld [vmem:[%s1894 + $0x28] sm:$0xf]
      %v1906 = vld [vmem:[%s1894 + $0x2c] sm:$0xf]
      %v1907 = vld [vmem:[%s1894 + $0x30] sm:$0xf]
      %v1908 = vld [vmem:[%s1894 + $0x34] sm:$0xf]
      %v1909 = vld [vmem:[%s1894 + $0x38] sm:$0xf]
      %v1910 = vld [vmem:[%s1894 + $0x3c] sm:$0xf]
      %v1911 = vunpack.c.l.b16 %v1883
      %v1912 = vunpack.c.l.b16 %v1893
      %v1913 = vpack.c.b16 %v1912, %v1911
      %v1931 = vunpack.c.l.b16 %v1895
      %v1932 = vunpack.c.l.b16 %v1896
      %v1933 = vunpack.c.l.b16 %v1897
      %v1934 = vunpack.c.l.b16 %v1898
      %v1935 = vunpack.c.l.b16 %v1899
      %v1936 = vunpack.c.l.b16 %v1900
      %v1937 = vunpack.c.l.b16 %v1901
      %v1938 = vunpack.c.l.b16 %v1902
      %v1939 = vunpack.c.l.b16 %v1903
      %v1940 = vunpack.c.l.b16 %v1904
      %v1941 = vunpack.c.l.b16 %v1905
      %v1942 = vunpack.c.l.b16 %v1906
      %v1943 = vunpack.c.l.b16 %v1907
      %v1944 = vunpack.c.l.b16 %v1908
      %v1945 = vunpack.c.l.b16 %v1909
      %v1946 = vunpack.c.l.b16 %v1910
      %v1947 = vpack.c.b16 %v1932, %v1931
      %v1948 = vpack.c.b16 %v1934, %v1933
      %v1949 = vpack.c.b16 %v1936, %v1935
      %v1950 = vpack.c.b16 %v1938, %v1937
      %v1951 = vpack.c.b16 %v1940, %v1939
      %v1952 = vpack.c.b16 %v1942, %v1941
      %v1953 = vpack.c.b16 %v1944, %v1943
      %v1954 = vpack.c.b16 %v1946, %v1945
      %1963 = vmatprep.subr.bf16.mxu0 0
      %1964 = vmatpush1.bf16.msra.mxu0 %v1947
      %1965 = vmatprep.subr.bf16.mxu0 0
      %1966 = vmatpush1.bf16.msra.mxu0 %v1948
      %1967 = vmatprep.subr.bf16.mxu0 0
      %1968 = vmatpush1.bf16.msra.mxu0 %v1949
      %1969 = vmatprep.subr.bf16.mxu0 0
      %1970 = vmatpush1.bf16.msra.mxu0 %v1950
      %1971 = vmatprep.subr.bf16.mxu0 0
      %1972 = vmatpush1.bf16.msra.mxu0 %v1951
      %1973 = vmatprep.subr.bf16.mxu0 0
      %1974 = vmatpush1.bf16.msra.mxu0 %v1952
      %1975 = vmatprep.subr.bf16.mxu0 0
      %1976 = vmatpush1.bf16.msra.mxu0 %v1953
      %1977 = vmatprep.subr.bf16.mxu0 0
      %1978 = vmatpush1.bf16.msra.mxu0 %v1954
      %1979 = vmatprep.subr.bf16.mxu0 0
      %1980 = vmatpush1.bf16.msra.mxu0 0
      %1981 = vmatprep.subr.bf16.mxu0 0
      %1982 = vmatpush1.bf16.msra.mxu0 0
      %1983 = vmatprep.subr.bf16.mxu0 0
      %1984 = vmatpush1.bf16.msra.mxu0 0
      %1985 = vmatprep.subr.bf16.mxu0 0
      %1986 = vmatpush1.bf16.msra.mxu0 0
      %1987 = vmatprep.subr.bf16.mxu0 0
      %1988 = vmatpush1.bf16.msra.mxu0 0
      %1989 = vmatprep.subr.bf16.mxu0 0
      %1990 = vmatpush1.bf16.msra.mxu0 0
      %1991 = vmatprep.subr.bf16.mxu0 0
      %1992 = vmatpush1.bf16.msra.mxu0 0
      %1993 = vmatprep.subr.bf16.mxu0 0
      %1994 = vmatpush1.bf16.msra.mxu0 0
      %1995 = vmatprep.mubr.bf16.mxu0 0
      %1996 = vmatmul.mubr.bf16.gmra.mrb[0].mxu0 %v477
      %v1997 = vpop.f32.mrb[0].mxu0
      %v1998 = vadd.f32 0.0, %v1997
      %v1999 = vpop.f32.mrb[0].mxu0
      %v2000 = vpop.f32.mrb[0].mxu0
      %v2001 = vadd.f32 0.0, %v2000
      %v2002 = vpop.f32.mrb[0].mxu0
      %2003 = vmatprep.mubr.bf16.mxu0 0
      %2004 = vmatmul.mubr.bf16.gmra.mrb[0].mxu0 %v478
      %v2005 = vpop.f32.mrb[0].mxu0
      %v2006 = vadd.f32 0.0, %v2005
      %v2007 = vpop.f32.mrb[0].mxu0
      %v2008 = vpop.f32.mrb[0].mxu0
      %v2009 = vadd.f32 0.0, %v2008
      %v2010 = vpop.f32.mrb[0].mxu0
      %2011 = vmatprep.mubr.bf16.mxu0 0
      %2012 = vmatmul.mubr.bf16.gmra.mrb[0].mxu0 %v479
      %v2013 = vpop.f32.mrb[0].mxu0
      %v2014 = vadd.f32 0.0, %v2013
      %v2015 = vpop.f32.mrb[0].mxu0
      %v2016 = vpop.f32.mrb[0].mxu0
      %v2017 = vadd.f32 0.0, %v2016
      %v2018 = vpop.f32.mrb[0].mxu0
      %2019 = vmatprep.mubr.bf16.mxu0 0
      %2020 = vmatmul.mubr.bf16.gmra.mrb[0].mxu0 %v480
      %v2021 = vpop.f32.mrb[0].mxu0
      %v2022 = vadd.f32 0.0, %v2021
      %v2023 = vpop.f32.mrb[0].mxu0
      %v2024 = vpop.f32.mrb[0].mxu0
      %v2025 = vadd.f32 0.0, %v2024
      %v2026 = vpop.f32.mrb[0].mxu0
      %2027 = vmatprep.mubr.bf16.mxu0 0
      %2028 = vmatmul.mubr.bf16.gmra.mrb[0].mxu0 %v481
      %v2029 = vpop.f32.mrb[0].mxu0
      %v2030 = vadd.f32 0.0, %v2029
      %v2031 = vpop.f32.mrb[0].mxu0
      %v2032 = vpop.f32.mrb[0].mxu0
      %v2033 = vadd.f32 0.0, %v2032
      %v2034 = vpop.f32.mrb[0].mxu0
      %2035 = vmatprep.mubr.bf16.mxu0 0
      %2036 = vmatmul.mubr.bf16.gmra.mrb[0].mxu0 %v482
      %v2037 = vpop.f32.mrb[0].mxu0
      %v2038 = vadd.f32 0.0, %v2037
      %v2039 = vpop.f32.mrb[0].mxu0
      %v2040 = vpop.f32.mrb[0].mxu0
      %v2041 = vadd.f32 0.0, %v2040
      %v2042 = vpop.f32.mrb[0].mxu0
      %2043 = vmatprep.mubr.bf16.mxu0 0
      %2044 = vmatmul.mubr.bf16.gmra.mrb[0].mxu0 %v1333
      %v2045 = vpop.f32.mrb[0].mxu0
      %v2046 = vadd.f32 0.0, %v2045
      %v2047 = vpop.f32.mrb[0].mxu0
      %v2048 = vpop.f32.mrb[0].mxu0
      %v2049 = vadd.f32 0.0, %v2048
      %v2050 = vpop.f32.mrb[0].mxu0
      %2051 = vmatprep.mubr.bf16.mxu0 0
      %2052 = vmatmul.mubr.bf16.gmra.mrb[0].mxu0 %v1913
      %v2053 = vpop.f32.mrb[0].mxu0
      %v2054 = vadd.f32 0.0, %v2053
      %v2055 = vpop.f32.mrb[0].mxu0
      %v2056 = vpop.f32.mrb[0].mxu0
      %v2057 = vadd.f32 0.0, %v2056
      %v2058 = vpop.f32.mrb[0].mxu0
      %2059 = vdwg.mxu0
      %v2060 = vadd.f32 %v1854, %v1998
      %v2061 = vadd.f32 %v1855, %v2001
      %v2062 = vadd.f32 %v1856, %v2006
      %v2063 = vadd.f32 %v1857, %v2009
      %v2064 = vadd.f32 %v1858, %v2014
      %v2065 = vadd.f32 %v1859, %v2017
      %v2066 = vadd.f32 %v1860, %v2022
      %v2067 = vadd.f32 %v1861, %v2025
      %v2068 = vadd.f32 %v1862, %v2030
      %v2069 = vadd.f32 %v1863, %v2033
      %v2070 = vadd.f32 %v1864, %v2038
      %v2071 = vadd.f32 %v1865, %v2041
      %v2072 = vadd.f32 %v1866, %v2046
      %v2073 = vadd.f32 %v1867, %v2049
      %v2074 = vadd.f32 %v1868, %v2054
      %v2075 = vadd.f32 %v1869, %v2057
      %v2077 = vrot.slane %v228, 5
      %v2078 = vrot.slane %v2077, 4
      %v2079 = vrot.slane %v229, 5
      %v2080 = vsel %vm839, %v2078, %v2079
      %v2081 = vrot.slane %v2079, 4
      %v2082 = vrot.slane %v230, 5
      %v2083 = vsel %vm839, %v2081, %v2082
      %s2084 = scalar_lea.vmem %s1, 512
      %v2085 = vld [vmem:[%s2084] sm:$0xf]
      %v2086 = vld [vmem:[%s2084 + $0x4] sm:$0xf]
      %v2087 = vld [vmem:[%s2084 + $0x8] sm:$0xf]
      %v2088 = vld [vmem:[%s2084 + $0xc] sm:$0xf]
      %v2089 = vld [vmem:[%s2084 + $0x10] sm:$0xf]
      %v2090 = vld [vmem:[%s2084 + $0x14] sm:$0xf]
      %v2091 = vld [vmem:[%s2084 + $0x18] sm:$0xf]
      %v2092 = vld [vmem:[%s2084 + $0x1c] sm:$0xf]
      %v2093 = vld [vmem:[%s2084 + $0x20] sm:$0xf]
      %v2094 = vld [vmem:[%s2084 + $0x24] sm:$0xf]
      %v2095 = vld [vmem:[%s2084 + $0x28] sm:$0xf]
      %v2096 = vld [vmem:[%s2084 + $0x2c] sm:$0xf]
      %v2097 = vld [vmem:[%s2084 + $0x30] sm:$0xf]
      %v2098 = vld [vmem:[%s2084 + $0x34] sm:$0xf]
      %v2099 = vld [vmem:[%s2084 + $0x38] sm:$0xf]
      %v2100 = vld [vmem:[%s2084 + $0x3c] sm:$0xf]
      %v2101 = vunpack.c.l.b16 %v2080
      %v2102 = vunpack.c.l.b16 %v2083
      %v2103 = vpack.c.b16 %v2102, %v2101
      %v2121 = vunpack.c.l.b16 %v2085
      %v2122 = vunpack.c.l.b16 %v2086
      %v2123 = vunpack.c.l.b16 %v2087
      %v2124 = vunpack.c.l.b16 %v2088
      %v2125 = vunpack.c.l.b16 %v2089
      %v2126 = vunpack.c.l.b16 %v2090
      %v2127 = vunpack.c.l.b16 %v2091
      %v2128 = vunpack.c.l.b16 %v2092
      %v2129 = vunpack.c.l.b16 %v2093
      %v2130 = vunpack.c.l.b16 %v2094
      %v2131 = vunpack.c.l.b16 %v2095
      %v2132 = vunpack.c.l.b16 %v2096
      %v2133 = vunpack.c.l.b16 %v2097
      %v2134 = vunpack.c.l.b16 %v2098
      %v2135 = vunpack.c.l.b16 %v2099
      %v2136 = vunpack.c.l.b16 %v2100
      %v2137 = vpack.c.b16 %v2122, %v2121
      %v2138 = vpack.c.b16 %v2124, %v2123
      %v2139 = vpack.c.b16 %v2126, %v2125
      %v2140 = vpack.c.b16 %v2128, %v2127
      %v2141 = vpack.c.b16 %v2130, %v2129
      %v2142 = vpack.c.b16 %v2132, %v2131
      %v2143 = vpack.c.b16 %v2134, %v2133
      %v2144 = vpack.c.b16 %v2136, %v2135
      %2153 = vmatprep.subr.bf16.mxu0 0
      %2154 = vmatpush1.bf16.msra.mxu0 %v2137
      %2155 = vmatprep.subr.bf16.mxu0 0
      %2156 = vmatpush1.bf16.msra.mxu0 %v2138
      %2157 = vmatprep.subr.bf16.mxu0 0
      %2158 = vmatpush1.bf16.msra.mxu0 %v2139
      %2159 = vmatprep.subr.bf16.mxu0 0
      %2160 = vmatpush1.bf16.msra.mxu0 %v2140
      %2161 = vmatprep.subr.bf16.mxu0 0
      %2162 = vmatpush1.bf16.msra.mxu0 %v2141
      %2163 = vmatprep.subr.bf16.mxu0 0
      %2164 = vmatpush1.bf16.msra.mxu0 %v2142
      %2165 = vmatprep.subr.bf16.mxu0 0
      %2166 = vmatpush1.bf16.msra.mxu0 %v2143
      %2167 = vmatprep.subr.bf16.mxu0 0
      %2168 = vmatpush1.bf16.msra.mxu0 %v2144
      %2169 = vmatprep.subr.bf16.mxu0 0
      %2170 = vmatpush1.bf16.msra.mxu0 0
      %2171 = vmatprep.subr.bf16.mxu0 0
      %2172 = vmatpush1.bf16.msra.mxu0 0
      %2173 = vmatprep.subr.bf16.mxu0 0
      %2174 = vmatpush1.bf16.msra.mxu0 0
      %2175 = vmatprep.subr.bf16.mxu0 0
      %2176 = vmatpush1.bf16.msra.mxu0 0
      %2177 = vmatprep.subr.bf16.mxu0 0
      %2178 = vmatpush1.bf16.msra.mxu0 0
      %2179 = vmatprep.subr.bf16.mxu0 0
      %2180 = vmatpush1.bf16.msra.mxu0 0
      %2181 = vmatprep.subr.bf16.mxu0 0
      %2182 = vmatpush1.bf16.msra.mxu0 0
      %2183 = vmatprep.subr.bf16.mxu0 0
      %2184 = vmatpush1.bf16.msra.mxu0 0
      %2185 = vmatprep.mubr.bf16.mxu0 0
      %2186 = vmatmul.mubr.bf16.gmra.mrb[0].mxu0 %v931
      %v2187 = vpop.f32.mrb[0].mxu0
      %v2188 = vadd.f32 0.0, %v2187
      %v2189 = vpop.f32.mrb[0].mxu0
      %v2190 = vpop.f32.mrb[0].mxu0
      %v2191 = vadd.f32 0.0, %v2190
      %v2192 = vpop.f32.mrb[0].mxu0
      %2193 = vmatprep.mubr.bf16.mxu0 0
      %2194 = vmatmul.mubr.bf16.gmra.mrb[0].mxu0 %v932
      %v2195 = vpop.f32.mrb[0].mxu0
      %v2196 = vadd.f32 0.0, %v2195
      %v2197 = vpop.f32.mrb[0].mxu0
      %v2198 = vpop.f32.mrb[0].mxu0
      %v2199 = vadd.f32 0.0, %v2198
      %v2200 = vpop.f32.mrb[0].mxu0
      %2201 = vmatprep.mubr.bf16.mxu0 0
      %2202 = vmatmul.mubr.bf16.gmra.mrb[0].mxu0 %v933
      %v2203 = vpop.f32.mrb[0].mxu0
      %v2204 = vadd.f32 0.0, %v2203
      %v2205 = vpop.f32.mrb[0].mxu0
      %v2206 = vpop.f32.mrb[0].mxu0
      %v2207 = vadd.f32 0.0, %v2206
      %v2208 = vpop.f32.mrb[0].mxu0
      %2209 = vmatprep.mubr.bf16.mxu0 0
      %2210 = vmatmul.mubr.bf16.gmra.mrb[0].mxu0 %v934
      %v2211 = vpop.f32.mrb[0].mxu0
      %v2212 = vadd.f32 0.0, %v2211
      %v2213 = vpop.f32.mrb[0].mxu0
      %v2214 = vpop.f32.mrb[0].mxu0
      %v2215 = vadd.f32 0.0, %v2214
      %v2216 = vpop.f32.mrb[0].mxu0
      %2217 = vmatprep.mubr.bf16.mxu0 0
      %2218 = vmatmul.mubr.bf16.gmra.mrb[0].mxu0 %v935
      %v2219 = vpop.f32.mrb[0].mxu0
      %v2220 = vadd.f32 0.0, %v2219
      %v2221 = vpop.f32.mrb[0].mxu0
      %v2222 = vpop.f32.mrb[0].mxu0
      %v2223 = vadd.f32 0.0, %v2222
      %v2224 = vpop.f32.mrb[0].mxu0
      %2225 = vmatprep.mubr.bf16.mxu0 0
      %2226 = vmatmul.mubr.bf16.gmra.mrb[0].mxu0 %v936
      %v2227 = vpop.f32.mrb[0].mxu0
      %v2228 = vadd.f32 0.0, %v2227
      %v2229 = vpop.f32.mrb[0].mxu0
      %v2230 = vpop.f32.mrb[0].mxu0
      %v2231 = vadd.f32 0.0, %v2230
      %v2232 = vpop.f32.mrb[0].mxu0
      %2233 = vmatprep.mubr.bf16.mxu0 0
      %2234 = vmatmul.mubr.bf16.gmra.mrb[0].mxu0 %v1523
      %v2235 = vpop.f32.mrb[0].mxu0
      %v2236 = vadd.f32 0.0, %v2235
      %v2237 = vpop.f32.mrb[0].mxu0
      %v2238 = vpop.f32.mrb[0].mxu0
      %v2239 = vadd.f32 0.0, %v2238
      %v2240 = vpop.f32.mrb[0].mxu0
      %2241 = vmatprep.mubr.bf16.mxu0 0
      %2242 = vmatmul.mubr.bf16.gmra.mrb[0].mxu0 %v2103
      %v2243 = vpop.f32.mrb[0].mxu0
      %v2244 = vadd.f32 0.0, %v2243
      %v2245 = vpop.f32.mrb[0].mxu0
      %v2246 = vpop.f32.mrb[0].mxu0
      %v2247 = vadd.f32 0.0, %v2246
      %v2248 = vpop.f32.mrb[0].mxu0
      %2249 = vdwg.mxu0
      %v2250 = vadd.f32 %v2060, %v2188
      %v2251 = vadd.f32 %v2061, %v2191
      %v2252 = vadd.f32 %v2062, %v2196
      %v2253 = vadd.f32 %v2063, %v2199
      %v2254 = vadd.f32 %v2064, %v2204
      %v2255 = vadd.f32 %v2065, %v2207
      %v2256 = vadd.f32 %v2066, %v2212
      %v2257 = vadd.f32 %v2067, %v2215
      %v2258 = vadd.f32 %v2068, %v2220
      %v2259 = vadd.f32 %v2069, %v2223
      %v2260 = vadd.f32 %v2070, %v2228
      %v2261 = vadd.f32 %v2071, %v2231
      %v2262 = vadd.f32 %v2072, %v2236
      %v2263 = vadd.f32 %v2073, %v2239
      %v2264 = vadd.f32 %v2074, %v2244
      %v2265 = vadd.f32 %v2075, %v2247
      %v2266 = vld [vmem:[%s2] sm:$0x1]
      %v2268 = vlaneseq
      %v2269 = vshrl.u32 %v2268, 7
      %v2270 = vsub.s32 0, %v2269
      %v2271 = vrot.slane %v2266, %v2270
      %v2273 = vadd.f32 %v2250, %v2271
      %v2274 = vadd.f32 %v2251, %v2271
      %v2275 = vadd.f32 %v2252, %v2271
      %v2276 = vadd.f32 %v2253, %v2271
      %v2277 = vadd.f32 %v2254, %v2271
      %v2278 = vadd.f32 %v2255, %v2271
      %v2279 = vadd.f32 %v2256, %v2271
      %v2280 = vadd.f32 %v2257, %v2271
      %v2281 = vadd.f32 %v2258, %v2271
      %v2282 = vadd.f32 %v2259, %v2271
      %v2283 = vadd.f32 %v2260, %v2271
      %v2284 = vadd.f32 %v2261, %v2271
      %v2285 = vadd.f32 %v2262, %v2271
      %v2286 = vadd.f32 %v2263, %v2271
      %v2287 = vadd.f32 %v2264, %v2271
      %v2288 = vadd.f32 %v2265, %v2271
      %v2289 = vxor.u32 %v2273, 2147483648
      %v2290 = vxor.u32 %v2274, 2147483648
      %v2291 = vxor.u32 %v2275, 2147483648
      %v2292 = vxor.u32 %v2276, 2147483648
      %v2293 = vxor.u32 %v2277, 2147483648
      %v2294 = vxor.u32 %v2278, 2147483648
      %v2295 = vxor.u32 %v2279, 2147483648
      %v2296 = vxor.u32 %v2280, 2147483648
      %v2297 = vxor.u32 %v2281, 2147483648
      %v2298 = vxor.u32 %v2282, 2147483648
      %v2299 = vxor.u32 %v2283, 2147483648
      %v2300 = vxor.u32 %v2284, 2147483648
      %v2301 = vxor.u32 %v2285, 2147483648
      %v2302 = vxor.u32 %v2286, 2147483648
      %v2303 = vxor.u32 %v2287, 2147483648
      %v2304 = vxor.u32 %v2288, 2147483648
      %v2305 = vmul.f32 %v2289, 1.442695
      %v2306 = vpow.pop %v2305
      %v2307 = vmul.f32 %v2290, 1.442695
      %v2308 = vpow.pop %v2307
      %v2309 = vmul.f32 %v2291, 1.442695
      %v2310 = vpow.pop %v2309
      %v2311 = vmul.f32 %v2292, 1.442695
      %v2312 = vpow.pop %v2311
      %v2313 = vmul.f32 %v2293, 1.442695
      %v2314 = vpow.pop %v2313
      %v2315 = vmul.f32 %v2294, 1.442695
      %v2316 = vpow.pop %v2315
      %v2317 = vmul.f32 %v2295, 1.442695
      %v2318 = vpow.pop %v2317
      %v2319 = vmul.f32 %v2296, 1.442695
      %v2320 = vpow.pop %v2319
      %v2321 = vmul.f32 %v2297, 1.442695
      %v2322 = vpow.pop %v2321
      %v2323 = vmul.f32 %v2298, 1.442695
      %v2324 = vpow.pop %v2323
      %v2325 = vmul.f32 %v2299, 1.442695
      %v2326 = vpow.pop %v2325
      %v2327 = vmul.f32 %v2300, 1.442695
      %v2328 = vpow.pop %v2327
      %v2329 = vmul.f32 %v2301, 1.442695
      %v2330 = vpow.pop %v2329
      %v2331 = vmul.f32 %v2302, 1.442695
      %v2332 = vpow.pop %v2331
      %v2333 = vmul.f32 %v2303, 1.442695
      %v2334 = vpow.pop %v2333
      %v2335 = vmul.f32 %v2304, 1.442695
      %v2336 = vpow.pop %v2335
      %v2337 = vadd.f32 %v2306, 1.0
      %v2338 = vadd.f32 %v2308, 1.0
      %v2339 = vadd.f32 %v2310, 1.0
      %v2340 = vadd.f32 %v2312, 1.0
      %v2341 = vadd.f32 %v2314, 1.0
      %v2342 = vadd.f32 %v2316, 1.0
      %v2343 = vadd.f32 %v2318, 1.0
      %v2344 = vadd.f32 %v2320, 1.0
      %v2345 = vadd.f32 %v2322, 1.0
      %v2346 = vadd.f32 %v2324, 1.0
      %v2347 = vadd.f32 %v2326, 1.0
      %v2348 = vadd.f32 %v2328, 1.0
      %v2349 = vadd.f32 %v2330, 1.0
      %v2350 = vadd.f32 %v2332, 1.0
      %v2351 = vadd.f32 %v2334, 1.0
      %v2352 = vadd.f32 %v2336, 1.0
      %v2353 = vrcp.pop %v2337
      %v2354 = vmul.f32 1.0, %v2353
      %v2355 = vrcp.pop %v2338
      %v2356 = vmul.f32 1.0, %v2355
      %v2357 = vrcp.pop %v2339
      %v2358 = vmul.f32 1.0, %v2357
      %v2359 = vrcp.pop %v2340
      %v2360 = vmul.f32 1.0, %v2359
      %v2361 = vrcp.pop %v2341
      %v2362 = vmul.f32 1.0, %v2361
      %v2363 = vrcp.pop %v2342
      %v2364 = vmul.f32 1.0, %v2363
      %v2365 = vrcp.pop %v2343
      %v2366 = vmul.f32 1.0, %v2365
      %v2367 = vrcp.pop %v2344
      %v2368 = vmul.f32 1.0, %v2367
      %v2369 = vrcp.pop %v2345
      %v2370 = vmul.f32 1.0, %v2369
      %v2371 = vrcp.pop %v2346
      %v2372 = vmul.f32 1.0, %v2371
      %v2373 = vrcp.pop %v2347
      %v2374 = vmul.f32 1.0, %v2373
      %v2375 = vrcp.pop %v2348
      %v2376 = vmul.f32 1.0, %v2375
      %v2377 = vrcp.pop %v2349
      %v2378 = vmul.f32 1.0, %v2377
      %v2379 = vrcp.pop %v2350
      %v2380 = vmul.f32 1.0, %v2379
      %v2381 = vrcp.pop %v2351
      %v2382 = vmul.f32 1.0, %v2381
      %v2383 = vrcp.pop %v2352
      %v2384 = vmul.f32 1.0, %v2383
      %v2385 = vmul.f32 %v2273, %v2354
      %v2386 = vmul.f32 %v2274, %v2356
      %v2387 = vmul.f32 %v2275, %v2358
      %v2388 = vmul.f32 %v2276, %v2360
      %v2389 = vmul.f32 %v2277, %v2362
      %v2390 = vmul.f32 %v2278, %v2364
      %v2391 = vmul.f32 %v2279, %v2366
      %v2392 = vmul.f32 %v2280, %v2368
      %v2393 = vmul.f32 %v2281, %v2370
      %v2394 = vmul.f32 %v2282, %v2372
      %v2395 = vmul.f32 %v2283, %v2374
      %v2396 = vmul.f32 %v2284, %v2376
      %v2397 = vmul.f32 %v2285, %v2378
      %v2398 = vmul.f32 %v2286, %v2380
      %v2399 = vmul.f32 %v2287, %v2382
      %v2400 = vmul.f32 %v2288, %v2384
      %v2401 = vpack.c.bf16 %v2386, %v2385
      %v2402 = vpack.c.bf16 %v2388, %v2387
      %v2403 = vpack.c.bf16 %v2390, %v2389
      %v2404 = vpack.c.bf16 %v2392, %v2391
      %v2405 = vpack.c.bf16 %v2394, %v2393
      %v2406 = vpack.c.bf16 %v2396, %v2395
      %v2407 = vpack.c.bf16 %v2398, %v2397
      %v2408 = vpack.c.bf16 %v2400, %v2399
      %v2417 = vunpack.c.l.b16 %v2401
      %v2418 = vunpack.c.h.b16 %v2401
      %v2419 = vunpack.c.l.b16 %v2402
      %v2420 = vunpack.c.h.b16 %v2402
      %v2421 = vunpack.c.l.b16 %v2403
      %v2422 = vunpack.c.h.b16 %v2403
      %v2423 = vunpack.c.l.b16 %v2404
      %v2424 = vunpack.c.h.b16 %v2404
      %v2425 = vunpack.c.l.b16 %v2405
      %v2426 = vunpack.c.h.b16 %v2405
      %v2427 = vunpack.c.l.b16 %v2406
      %v2428 = vunpack.c.h.b16 %v2406
      %v2429 = vunpack.c.l.b16 %v2407
      %v2430 = vunpack.c.h.b16 %v2407
      %v2431 = vunpack.c.l.b16 %v2408
      %v2432 = vunpack.c.h.b16 %v2408
      %v2433 = vpack.c.b16 %v2417, %v2417
      %v2434 = vpack.c.b16 %v2418, %v2418
      %v2435 = vpack.c.b16 %v2419, %v2419
      %v2436 = vpack.c.b16 %v2420, %v2420
      %v2437 = vpack.c.b16 %v2421, %v2421
      %v2438 = vpack.c.b16 %v2422, %v2422
      %v2439 = vpack.c.b16 %v2423, %v2423
      %v2440 = vpack.c.b16 %v2424, %v2424
      %v2441 = vpack.c.b16 %v2425, %v2425
      %v2442 = vpack.c.b16 %v2426, %v2426
      %v2443 = vpack.c.b16 %v2427, %v2427
      %v2444 = vpack.c.b16 %v2428, %v2428
      %v2445 = vpack.c.b16 %v2429, %v2429
      %v2446 = vpack.c.b16 %v2430, %v2430
      %v2447 = vpack.c.b16 %v2431, %v2431
      %v2448 = vpack.c.b16 %v2432, %v2432
      %2465 = vst [vmem:[%s194] sm:$0xf] %v2433
      %2466 = vst [vmem:[%s194 + $0x4] sm:$0xf] %v2434
      %2467 = vst [vmem:[%s194 + $0x8] sm:$0xf] %v2435
      %2468 = vst [vmem:[%s194 + $0xc] sm:$0xf] %v2436
      %2469 = vst [vmem:[%s194 + $0x10] sm:$0xf] %v2437
      %2470 = vst [vmem:[%s194 + $0x14] sm:$0xf] %v2438
      %2471 = vst [vmem:[%s194 + $0x18] sm:$0xf] %v2439
      %2472 = vst [vmem:[%s194 + $0x1c] sm:$0xf] %v2440
      %2473 = vst [vmem:[%s194 + $0x20] sm:$0xf] %v2441
      %2474 = vst [vmem:[%s194 + $0x24] sm:$0xf] %v2442
      %2475 = vst [vmem:[%s194 + $0x28] sm:$0xf] %v2443
      %2476 = vst [vmem:[%s194 + $0x2c] sm:$0xf] %v2444
      %2477 = vst [vmem:[%s194 + $0x30] sm:$0xf] %v2445
      %2478 = vst [vmem:[%s194 + $0x34] sm:$0xf] %v2446
      %2479 = vst [vmem:[%s194 + $0x38] sm:$0xf] %v2447
      %2480 = vst [vmem:[%s194 + $0x3c] sm:$0xf] %v2448
      %s2481 = smul.u32 8, %s19
      %p2482 = scmp.lt.s32.totalorder %s18, 1
      %s2483 = scalar_select %p2482, %s18, 1
      %p2484 = scmp.lt.s32.totalorder %s2481, 15
      %s2485 = scalar_select %p2484, %s2481, 15
      %s2486 = smul.addr %s2485, 2
      %s2487 = smul.addr %s2483, 32
      %s2488 = sadd.s32 %s2486, %s2487
      %s2489 = smul.addr %s2488, 4
      %s2490 = scalar_lea.vmem %s3, %s2489
      // Predicated region
      $region33: #{sbottleneck_forward.2} parent=31 // pred_check
        %p2491 = pneg %p114
      $region34: #{sbottleneck_forward.2} parent=31 // pred_check_branch
        %2493 = sbr.rel (%p2491) target = $region36
      $region35: #{sbottleneck_forward.2} parent=31 // pred_region
        %s2494 = smul.u32 8, %s19
      $region36: #{sbottleneck_forward.2} parent=31 // pred_fallthru
        _
    $region32: #{sbottleneck_forward.2} parent=5 // pred_fallthru
      _
    %p2495 = scmp.le.s32.totalorder 2, %s9
    // Predicated region
    $region37: #{sbottleneck_forward.2} parent=5 // pred_check
      %p2496 = pneg %p2495
    $region38: #{sbottleneck_forward.2} parent=5 // pred_check_branch
      %2498 = sbr.rel (%p2496) target = $region40
    $region39: #{sbottleneck_forward.2} parent=5 // pred_region
      %s2499 = ssub.s32 %s9, 2
      // Predicated region
      $region41: #{sbottleneck_forward.2} parent=39 // pred_check
        %p2500 = pneg %p120
      $region42: #{sbottleneck_forward.2} parent=39 // pred_check_branch
        %2502 = sbr.rel (%p2500) target = $region44
      $region43: #{sbottleneck_forward.2} parent=39 // pred_region
        %s2503 = smul.u32 8, %s21
        %p2504 = scmp.lt.s32.totalorder %s20, 1
        %s2505 = scalar_select %p2504, %s20, 1
        %p2506 = scmp.lt.s32.totalorder %s2503, 15
        %s2507 = scalar_select %p2506, %s2503, 15
        %s2508 = smul.addr %s2507, 2
        %s2509 = smul.addr %s2505, 32
        %s2510 = sadd.s32 %s2508, %s2509
        %s2511 = smul.addr %s2510, 4
        %s2512 = scalar_lea.vmem %s3, %s2511
      $region44: #{sbottleneck_forward.2} parent=39 // pred_fallthru
        _
    $region40: #{sbottleneck_forward.2} parent=5 // pred_fallthru
      _
  $region6: #{sbottleneck_forward.2} parent=0 // loop_footer
    %s13 = sadd.s32 1, %s9
  $region7: #{sbottleneck_forward.2} parent=0 // loop_footer_branch
    %8 = sbr.rel target = $region3
  $region8: #{sbottleneck_forward.2} parent=0 // loop_exit
    _

</llo_original>
